<compile_context>
chip_gen: v7x
topology: tpu7x:2x2x1
jax: 0.10.0
libtpu: 0.0.40
codegen_flags: <defaults>
</compile_context>

<pallas_src>
import functools

import jax
import jax.numpy as jnp
import numpy as np
from jax.experimental import pallas as pl
from jax.experimental.pallas import tpu as pltpu


def _round_up(x, m):
    return (x + m - 1) // m * m


def _vmem_capacity_bytes():
    try:
        cap = int(pltpu.get_tpu_info().vmem_capacity_bytes)
        if cap > 0:
            return cap
    except Exception:
        pass
    return 128 << 20   # conservative default (v5e/v6e)


# ----------------------------------------------------------------------------
# Kernel 1: block-sparse SpMM for one GCN hop.
#   out_f32[N_pad, D_pad]  = adj[N_pad, N_pad] (bf16 blocks) @ emb[N_pad, D_pad]
#   out_bf16               = out_f32.astype(bf16)  (next hop's input, fused)
# The grid visits only nonzero adjacency blocks (plus a few shared zero-block
# placeholders); scalar-prefetched tables drive data-dependent index maps.
# ----------------------------------------------------------------------------
def _spmm_kernel(blkid_ref, row_ref, col_ref, first_ref, last_ref,
                 a_ref, b_ref, of_ref, ob_ref, *, tk, npc, emb_resident):
    c = pl.program_id(0)
    g = pl.program_id(1)
    idx = c * npc + g

    # first block of this output row-tile -> zero the resident f32 accumulator
    @pl.when(first_ref[idx] == 1)
    def _zero():
        of_ref[...] = jnp.zeros_like(of_ref)

    a = a_ref[0]                                     # (tm, tk) bf16
    if emb_resident:
        k0 = pl.multiple_of(col_ref[idx] * tk, tk)
        b = b_ref[pl.ds(k0, tk), :]                  # (tk, D_pad) bf16 slice
    else:
        b = b_ref[...]                               # streamed (tk, D_pad)
    of_ref[...] += jnp.dot(a, b, preferred_element_type=jnp.float32)

    # last block of this row-tile -> emit the bf16 copy for the next hop
    @pl.when(last_ref[idx] == 1)
    def _emit_bf16():
        ob_ref[...] = of_ref[...].astype(jnp.bfloat16)


def gcn_hop(adj_blocks, emb_bf16, blkid, row, col, first, last,
            *, tm, tk, ncore, npc):
    N_pad, D_pad = emb_bf16.shape
    n_entries = ncore * npc

    cap = _vmem_capacity_bytes()
    budget = int(cap * 0.72)                 # ~92 MiB on 128 MiB parts, ~46 on v7x

    adj_vmem = 2 * tm * tk * 2                       # double-buffered bf16 block
    out_vmem = 2 * tm * D_pad * 4 + 2 * tm * D_pad * 2
    resident_emb_vmem = 2 * N_pad * D_pad * 2        # conservative (2 buffers)
    headroom = 4 << 20

    emb_resident = (adj_vmem + out_vmem + resident_emb_vmem + headroom) <= budget
    if emb_resident:
        emb_spec = pl.BlockSpec((N_pad, D_pad),
                                lambda c, g, bi, r, co, f, l: (0, 0))
        emb_vmem = resident_emb_vmem
    else:
        emb_spec = pl.BlockSpec((tk, D_pad),
                                lambda c, g, bi, r, co, f, l: (co[c * npc + g], 0))
        emb_vmem = 2 * tk * D_pad * 2

    vmem_est = adj_vmem + out_vmem + emb_vmem + headroom
    vmem_cap = min(cap - (cap // 8), 100 << 20)      # <=56 MiB on v7x, <=100 on v5e/v6e
    vmem_limit = int(min(max(vmem_est, 32 << 20), vmem_cap))

    cost = pl.CostEstimate(
        flops=int(2 * n_entries * tm * tk * D_pad),
        transcendentals=0,
        bytes_accessed=int(n_entries * tm * tk * 2        # adj blocks
                           + N_pad * D_pad * 2            # emb read
                           + N_pad * D_pad * (4 + 2)),    # f32 + bf16 outputs
    )

    kernel = functools.partial(_spmm_kernel, tk=tk, npc=npc,
                               emb_resident=emb_resident)
    out_f32, out_bf16 = pl.pallas_call(
        kernel,
        out_shape=(jax.ShapeDtypeStruct((N_pad, D_pad), jnp.float32),
                   jax.ShapeDtypeStruct((N_pad, D_pad), jnp.bfloat16)),
        grid_spec=pltpu.PrefetchScalarGridSpec(
            num_scalar_prefetch=5,
            grid=(ncore, npc),
            in_specs=[
                pl.BlockSpec((1, tm, tk),
                             lambda c, g, bi, r, co, f, l: (bi[c * npc + g], 0, 0)),
                emb_spec,
            ],
            out_specs=(
                pl.BlockSpec((tm, D_pad),
                             lambda c, g, bi, r, co, f, l: (r[c * npc + g], 0)),
                pl.BlockSpec((tm, D_pad),
                             lambda c, g, bi, r, co, f, l: (r[c * npc + g], 0)),
            ),
        ),
        compiler_params=pltpu.CompilerParams(
            dimension_semantics=("parallel", "arbitrary"),
            vmem_limit_bytes=vmem_limit),
        cost_estimate=cost,
    )(blkid, row, col, first, last, adj_blocks, emb_bf16)
    return out_f32, out_bf16


# ----------------------------------------------------------------------------
# Host-side preprocessing (adjacency is fixed per model => one-time cost):
# enumerate nonzero (tm, tk) blocks, store them compacted [nB, tm, tk] bf16,
# and build per-core (row, col, first, last) schedules, balanced by block count.
# ----------------------------------------------------------------------------
def prepare_adjacency(adj, tm=256, tk=128, n_core_splits=2):
    adj_np = np.asarray(adj, np.float32)
    N = adj_np.shape[0]

    tk = max(int(min(tk, _round_up(N, 128))), 128)
    tm = int(min(max(tm, tk), _round_up(N, tk)))
    tm = _round_up(tm, tk)                    # tm must be a multiple of tk
    N_pad = _round_up(N, tm)

    A = np.zeros((N_pad, N_pad), np.float32)
    A[:N, :N] = adj_np
    n_rt, n_ct = N_pad // tm, N_pad // tk
    Ab = A.reshape(n_rt, tm, n_ct, tk).transpose(0, 2, 1, 3)   # (n_rt, n_ct, tm, tk)
    nz = Ab.astype(bool).any(axis=(2, 3))

    # TODO(synk): node reordering (RCM / community) would raise block sparsity;
    # with unclustered graphs most blocks are nonzero (dense-equivalent work).
    blocks, row_entries = [], []
    for i in range(n_rt):
        ents = []
        for col in np.nonzero(nz[i])[0]:
            ents.append((len(blocks), int(col)))
            blocks.append(Ab[i, col])
        row_entries.append(ents)
    zero_id = len(blocks)
    blocks.append(np.zeros((tm, tk), np.float32))   # shared zero block
    blocks = np.stack(blocks, 0)

    # balanced row-tile partition across cores (disjoint output rows per core)
    ncore = int(min(max(n_core_splits, 1), n_rt))
    order = sorted(range(n_rt), key=lambda i: -max(len(row_entries[i]), 1))
    core_rows, core_load = [[] for _ in range(ncore)], [0] * ncore
    for i in order:
        c = int(np.argmin(core_load))
        core_rows[c].append(i)
        core_load[c] += max(len(row_entries[i]), 1)

    core_lists = []
    for c in range(ncore):
        lst = []
        for i in core_rows[c]:
            ents = row_entries[i]
            if not ents:   # empty row-tile: zero-init only via the zero block
                lst.append((zero_id, i, 0, 1, 1))
            else:
                for j, (bid, col) in enumerate(ents):
                    lst.append((bid, i, col,
                                1 if j == 0 else 0,
                                1 if j == len(ents) - 1 else 0))
        core_lists.append(lst)

    npc = max(len(l) for l in core_lists)
    tbl = {k: np.zeros((ncore, npc), np.int32)
           for k in ("blkid", "row", "col", "first", "last")}
    for c, lst in enumerate(core_lists):
        pad_row = lst[-1][1]
        while len(lst) < npc:                  # length padding: adds zeros only
            lst.append((zero_id, pad_row, 0, 0, 0))
        for g, (bid, r, co, f, l) in enumerate(lst):
            tbl["blkid"][c, g], tbl["row"][c, g], tbl["col"][c, g] = bid, r, co
            tbl["first"][c, g], tbl["last"][c, g] = f, l

    meta = dict(tm=tm, tk=tk, N_pad=N_pad, ncore=ncore, npc=npc)
    return (jnp.asarray(blocks, jnp.bfloat16),
            jnp.asarray(tbl["blkid"].reshape(-1)),
            jnp.asarray(tbl["row"].reshape(-1)),
            jnp.asarray(tbl["col"].reshape(-1)),
            jnp.asarray(tbl["first"].reshape(-1)),
            jnp.asarray(tbl["last"].reshape(-1)),
            meta)


# ----------------------------------------------------------------------------
# Kernel 2: Uniform_Sample_loss scores on pooled embeddings (batch-tiled).
#   u_e, pos_e : (B_pad, D_pad)   neg_e : (K, B_pad, D_pad)
#   y[K+1, B_pad] : row 0 = <pos_n, u_n>, rows 1.. = <neg_n, u_n>
# ----------------------------------------------------------------------------
def _score_kernel(u_ref, p_ref, n_ref, y_ref):
    eps2 = 1e-24                                    # matches F.normalize eps=1e-12
    u = u_ref[...]                                  # (bt, D)
    item = jnp.concatenate([p_ref[...][None, :, :], n_ref[...]], axis=0)  # (K+1,bt,D)

    u_n = u * jax.lax.rsqrt(
        jnp.maximum(jnp.sum(u * u, axis=-1, keepdims=True), eps2))
    item_n = item * jax.lax.rsqrt(
        jnp.maximum(jnp.sum(item * item, axis=-1, keepdims=True), eps2))

    y_ref[...] = jnp.sum(item_n * u_n[None, :, :], axis=-1)   # (K+1, bt), one store


def uniform_sample_scores(u_e, pos_e, neg_e, *, bt_pref=512):
    B, D_pad = u_e.shape
    K = neg_e.shape[1]
    bt = min(bt_pref, _round_up(B, 128))            # lane-dense batch tile
    B_pad = _round_up(B, bt)

    u2 = jnp.pad(u_e, ((0, B_pad - B), (0, 0)))
    p2 = jnp.pad(pos_e, ((0, B_pad - B), (0, 0)))
    n3 = jnp.transpose(jnp.pad(neg_e, ((0, B_pad - B), (0, 0), (0, 0))), (1, 0, 2))

    y_pad = pl.pallas_call(
        _score_kernel,
        out_shape=jax.ShapeDtypeStruct((K + 1, B_pad), jnp.float32),
        grid=(B_pad // bt,),
        in_specs=[
            pl.BlockSpec((bt, D_pad), lambda i: (i, 0)),
            pl.BlockSpec((bt, D_pad), lambda i: (i, 0)),
            pl.BlockSpec((K, bt, D_pad), lambda i: (0, i, 0)),
        ],
        out_specs=pl.BlockSpec((K + 1, bt), lambda i: (0, i)),
        compiler_params=pltpu.CompilerParams(
            dimension_semantics=("parallel",)),
    )(u2, p2, n3)

    return jnp.transpose(y_pad[:, :B])              # (B, K+1), column 0 = positive


# ----------------------------------------------------------------------------
# Glue: GraphConv forward (dropouts disabled) + lgn_frame forward.
# ----------------------------------------------------------------------------
def gcn_forward(adj_blocks, blkid, row, col, first, last,
                user_embed, item_embed, *, n_hops, n_users, n_items, meta):
    N = n_users + n_items
    N_pad = meta["N_pad"]
    D = user_embed.shape[1]
    D_pad = _round_up(D, 128)

    all_embed = jnp.concatenate([user_embed, item_embed], axis=0)
    all_embed = jnp.pad(all_embed, ((0, N_pad - N), (0, D_pad - D)))

    embs = [all_embed]                               # f32 per-hop node embeddings
    agg_bf = all_embed.astype(jnp.bfloat16)
    for _ in range(n_hops):
        agg_f32, agg_bf = gcn_hop(adj_blocks, agg_bf, blkid, row, col, first, last,
                                  tm=meta["tm"], tk=meta["tk"],
                                  ncore=meta["ncore"], npc=meta["npc"])
        embs.append(agg_f32)
    return embs


def lgn_forward(adj_blocks, blkid, row, col, first, last,
                user_embed, item_embed, users, pos_items, neg_items,
                *, n_hops, n_users, n_items, decay, meta):
    embs = gcn_forward(adj_blocks, blkid, row, col, first, last,
                       user_embed, item_embed,
                       n_hops=n_hops, n_users=n_users, n_items=n_items, meta=meta)

    B = users.shape[0]
    K = neg_items.shape[1]
    pos_rows = pos_items + n_users
    neg_rows = (neg_items + n_users).reshape(-1)

    # gather only the small batch rows per hop (no full-graph stack); accumulate
    # the hop-mean pooled embeddings and the L2-reg term on the fly.
    u_sum = p_sum = n_sum = 0.0
    reg = 0.0
    for e in embs:
        u_h, p_h, n_h = e[users], e[pos_rows], e[neg_rows]
        u_sum = u_sum + u_h
        p_sum = p_sum + p_h
        n_sum = n_sum + n_h
        reg = reg + jnp.sum(u_h * u_h) + jnp.sum(p_h * p_h) + jnp.sum(n_h * n_h)

    inv = 1.0 / len(embs)
    u_e = u_sum * inv
    pos_e = p_sum * inv
    neg_e = (n_sum * inv).reshape(B, K, -1)

    y_pred = uniform_sample_scores(u_e, pos_e, neg_e)
    emb_loss = decay * (0.5 * reg) / B
    # TODO(synk): final BSL loss (losses.BSL) is an external dependency with no
    # source provided; returning its input scores y_pred and emb_loss instead.
    return y_pred, emb_loss


# ----------------------------------------------------------------------------
# Pure-JAX reference (mirrors the kernel's bf16-input / f32-accumulate hops).
# ----------------------------------------------------------------------------
def ref_forward(adj, user_embed, item_embed, users, pos_items, neg_items,
                *, n_hops, n_users, decay):
    all_embed = jnp.concatenate([user_embed, item_embed], axis=0)
    adj_bf = adj.astype(jnp.bfloat16)
    agg = all_embed
    embs = [all_embed]
    for _ in range(n_hops):
        agg = jnp.dot(adj_bf, agg.astype(jnp.bfloat16),
                      preferred_element_type=jnp.float32)
        embs.append(agg)
    embs = jnp.stack(embs, axis=1)
    ue, ie = embs[:n_users], embs[n_users:]
    ug, pg, ng = ue[users], ie[pos_items], ie[neg_items]
    u_e, pos_e, neg_e = ug.mean(1), pg.mean(1), ng.mean(2)
    item_e = jnp.concatenate([pos_e[:, None, :], neg_e], axis=1)
    u_e = u_e / jnp.maximum(jnp.linalg.norm(u_e, axis=-1, keepdims=True), 1e-12)
    item_e = item_e / jnp.maximum(
        jnp.linalg.norm(item_e, axis=-1, keepdims=True), 1e-12)
    y = jnp.einsum("bkd,bd->bk", item_e, u_e)
    reg = 0.5 * (jnp.sum(ug ** 2) + jnp.sum(pg ** 2) + jnp.sum(ng ** 2))
    emb_loss = decay * reg / ug.shape[0]
    return y, emb_loss


# ----------------------------------------------------------------------------
if __name__ == "__main__":
    # small, deterministic problem sizes
    n_users, n_items = 192, 192
    N = n_users + n_items
    emb_size = 64
    context_hops = 2
    batch_size = 8
    n_negs = 4
    decay = 1e-4
    tm, tk = 256, 128     # demo tiles (exercise multi-block rows, zero-block
                          # skipping, the 2-core split and dummy padding);
                          # use tm=1024-2048, tk=256-512 for production graphs.

    key = jax.random.PRNGKey(0)
    k_r, k_u, k_i, k_us, k_pi, k_ni = jax.random.split(key, 6)

    # deterministic "interaction" matrix -> symmetric-normalized LightGCN adjacency
    R = (jax.random.uniform(k_r, (n_users, n_items)) < 0.08).astype(jnp.float32)
    A = jnp.zeros((N, N), jnp.float32)
    A = A.at[:n_users, n_users:].set(R)
    A = A.at[n_users:, :n_users].set(R.T)
    deg = A.sum(axis=1)
    d_inv_sqrt = jnp.where(deg > 0, 1.0 / jnp.sqrt(jnp.maximum(deg, 1e-12)), 0.0)
    adj = d_inv_sqrt[:, None] * A * d_inv_sqrt[None, :]

    # xavier_uniform embeddings (deterministic)
    bound = float(np.sqrt(6.0 / (n_users + emb_size)))
    user_embed = jax.random.uniform(k_u, (n_users, emb_size), jnp.float32,
                                    -bound, bound)
    bound = float(np.sqrt(6.0 / (n_items + emb_size)))
    item_embed = jax.random.uniform(k_i, (n_items, emb_size), jnp.float32,
                                    -bound, bound)

    users = jax.random.randint(k_us, (batch_size,), 0, n_users)
    pos_items = jax.random.randint(k_pi, (batch_size,), 0, n_items)
    neg_items = jax.random.randint(k_ni, (batch_size, n_negs), 0, n_items)

    (adj_blocks, blkid, row, col, first, last, meta) = prepare_adjacency(
        adj, tm=tm, tk=tk, n_core_splits=2)

    fwd = jax.jit(functools.partial(
        lgn_forward, n_hops=context_hops, n_users=n_users, n_items=n_items,
        decay=decay, meta=meta))
    y_pred, emb_loss = fwd(adj_blocks, blkid, row, col, first, last,
                           user_embed, item_embed, users, pos_items, neg_items)
    y_pred = jax.block_until_ready(y_pred)
    emb_loss = jax.block_until_ready(emb_loss)

    y_ref, emb_loss_ref = ref_forward(adj, user_embed, item_embed,
                                      users, pos_items, neg_items,
                                      n_hops=context_hops, n_users=n_users,
                                      decay=decay)

    np.testing.assert_allclose(np.asarray(y_pred), np.asarray(y_ref),
                               rtol=2e-3, atol=2e-3)
    np.testing.assert_allclose(float(emb_loss), float(emb_loss_ref),
                               rtol=2e-3, atol=2e-5)

    print("KERNEL_OK")
</pallas_src>

<mosaic_0001>
module attributes {stable_mosaic.version = 11 : i64} {
  func.func @_spmm_kernel(%arg0: i32, %arg1: i32, %arg2: memref<6xi32, #tpu.memory_space<smem>>, %arg3: memref<6xi32, #tpu.memory_space<smem>>, %arg4: memref<6xi32, #tpu.memory_space<smem>>, %arg5: memref<6xi32, #tpu.memory_space<smem>>, %arg6: memref<6xi32, #tpu.memory_space<smem>>, %arg7: memref<1x256x128xbf16, #tpu.memory_space<vmem>>, %arg8: memref<512x128xbf16, #tpu.memory_space<vmem>>, %arg9: memref<256x128xf32, #tpu.memory_space<vmem>>, %arg10: memref<256x128xbf16, #tpu.memory_space<vmem>>) attributes {dimension_semantics = [#tpu.dimension_semantics<parallel>, #tpu.dimension_semantics<arbitrary>], iteration_bounds = array<i64: 2, 3>, scalar_prefetch = 5 : i64, scratch_operands = 0 : i64, tpu.core_type = #tpu.core_type<tc>, window_params = [{transform_indices = @transform_0, window_bounds = array<i64: 1, 256, 128>}, {pipeline_mode = #tpu.pipeline_mode<synchronous>, transform_indices = @transform_1, window_bounds = array<i64: 512, 128>}, {transform_indices = @transform_2, window_bounds = array<i64: 256, 128>}, {transform_indices = @transform_3, window_bounds = array<i64: 256, 128>}]} {
    %c3_i32 = arith.constant 3 : i32
    %0 = arith.muli %arg0, %c3_i32 : i32
    %1 = arith.addi %0, %arg1 : i32
    %2 = arith.index_cast %1 : i32 to index
    %3 = memref.load %arg5[%2] : memref<6xi32, #tpu.memory_space<smem>>
    %c1_i32 = arith.constant 1 : i32
    %4 = arith.cmpi eq, %3, %c1_i32 : i32
    %5 = arith.extui %4 : i1 to i32
    %c0_i32 = arith.constant 0 : i32
    %6 = arith.cmpi ne, %5, %c0_i32 : i32
    scf.if %6 {
      %cst_9 = arith.constant 0.000000e+00 : f32
      %24 = vector.broadcast %cst_9 : f32 to vector<256x128xf32>
      %c0_10 = arith.constant 0 : index
      %c0_11 = arith.constant 0 : index
      %25 = vector.load %arg9[%c0_10, %c0_11] : memref<256x128xf32, #tpu.memory_space<vmem>>, vector<256x128xf32>
      tpu.vector_store %arg9[%c0_10, %c0_11], %24 {strides = array<i32>} : memref<256x128xf32, #tpu.memory_space<vmem>>, vector<256x128xf32>,
    } else {
    }
    %c0 = arith.constant 0 : index
    %c0_0 = arith.constant 0 : index
    %c0_1 = arith.constant 0 : index
    %7 = vector.load %arg7[%c0, %c0_0, %c0_1] : memref<1x256x128xbf16, #tpu.memory_space<vmem>>, vector<1x256x128xbf16>
    %8 = vector.shape_cast %7 : vector<1x256x128xbf16> to vector<256x128xbf16>
    %9 = arith.index_cast %1 : i32 to index
    %10 = memref.load %arg4[%9] : memref<6xi32, #tpu.memory_space<smem>>
    %c128_i32 = arith.constant 128 : i32
    %11 = arith.muli %10, %c128_i32 : i32
    %12 = tpu.assume_multiple %11, 128 : i32
    %13 = arith.index_cast %12 : i32 to index
    %c0_2 = arith.constant 0 : index
    %14 = vector.load %arg8[%13, %c0_2] : memref<512x128xbf16, #tpu.memory_space<vmem>>, vector<128x128xbf16>
    %c0_3 = arith.constant 0 : index
    %c0_4 = arith.constant 0 : index
    %15 = vector.load %arg9[%c0_3, %c0_4] : memref<256x128xf32, #tpu.memory_space<vmem>>, vector<256x128xf32>
    %cst = arith.constant dense<0.000000e+00> : vector<256x128xf32>
    %16 = tpu.matmul %8, %14, %cst {dimension_numbers = #tpu.dot_dimension_numbers<[1], [0], [0], [1], [0, 0, 1, 1], [], []>} : vector<256x128xbf16>, vector<128x128xbf16>, vector<256x128xf32> -> vector<256x128xf32>
    %17 = arith.addf %15, %16 : vector<256x128xf32>
    %c0_5 = arith.constant 0 : index
    %c0_6 = arith.constant 0 : index
    %18 = vector.load %arg9[%c0_5, %c0_6] : memref<256x128xf32, #tpu.memory_space<vmem>>, vector<256x128xf32>
    tpu.vector_store %arg9[%c0_5, %c0_6], %17 {strides = array<i32>} : memref<256x128xf32, #tpu.memory_space<vmem>>, vector<256x128xf32>,
    %19 = arith.index_cast %1 : i32 to index
    %20 = memref.load %arg6[%19] : memref<6xi32, #tpu.memory_space<smem>>
    %c1_i32_7 = arith.constant 1 : i32
    %21 = arith.cmpi eq, %20, %c1_i32_7 : i32
    %22 = arith.extui %21 : i1 to i32
    %c0_i32_8 = arith.constant 0 : i32
    %23 = arith.cmpi ne, %22, %c0_i32_8 : i32
    scf.if %23 {
      %c0_9 = arith.constant 0 : index
      %c0_10 = arith.constant 0 : index
      %24 = vector.load %arg9[%c0_9, %c0_10] : memref<256x128xf32, #tpu.memory_space<vmem>>, vector<256x128xf32>
      %25 = arith.truncf %24 : vector<256x128xf32> to vector<256x128xbf16>
      %c0_11 = arith.constant 0 : index
      %c0_12 = arith.constant 0 : index
      %26 = vector.load %arg10[%c0_11, %c0_12] : memref<256x128xbf16, #tpu.memory_space<vmem>>, vector<256x128xbf16>
      tpu.vector_store %arg10[%c0_11, %c0_12], %25 {strides = array<i32>} : memref<256x128xbf16, #tpu.memory_space<vmem>>, vector<256x128xbf16>,
    } else {
    }
    return
  }
  func.func @transform_0(%arg0: i32, %arg1: i32, %arg2: memref<6xi32, #tpu.memory_space<smem>>, %arg3: memref<6xi32, #tpu.memory_space<smem>>, %arg4: memref<6xi32, #tpu.memory_space<smem>>, %arg5: memref<6xi32, #tpu.memory_space<smem>>, %arg6: memref<6xi32, #tpu.memory_space<smem>>) -> (i32, i32, i32) {
    %c3_i32 = arith.constant 3 : i32
    %0 = arith.muli %arg0, %c3_i32 : i32
    %1 = arith.addi %0, %arg1 : i32
    %2 = arith.index_cast %1 : i32 to index
    %3 = memref.load %arg2[%2] : memref<6xi32, #tpu.memory_space<smem>>
    %c0_i32 = arith.constant 0 : i32
    %c0_i32_0 = arith.constant 0 : i32
    %c0_i32_1 = arith.constant 0 : i32
    return %3, %c0_i32, %c0_i32_0 : i32, i32, i32
  }
  func.func @transform_1(%arg0: i32, %arg1: i32, %arg2: memref<6xi32, #tpu.memory_space<smem>>, %arg3: memref<6xi32, #tpu.memory_space<smem>>, %arg4: memref<6xi32, #tpu.memory_space<smem>>, %arg5: memref<6xi32, #tpu.memory_space<smem>>, %arg6: memref<6xi32, #tpu.memory_space<smem>>) -> (i32, i32) {
    %c0_i32 = arith.constant 0 : i32
    %c0_i32_0 = arith.constant 0 : i32
    %c0_i32_1 = arith.constant 0 : i32
    return %c0_i32, %c0_i32_0 : i32, i32
  }
  func.func @transform_2(%arg0: i32, %arg1: i32, %arg2: memref<6xi32, #tpu.memory_space<smem>>, %arg3: memref<6xi32, #tpu.memory_space<smem>>, %arg4: memref<6xi32, #tpu.memory_space<smem>>, %arg5: memref<6xi32, #tpu.memory_space<smem>>, %arg6: memref<6xi32, #tpu.memory_space<smem>>) -> (i32, i32) {
    %c3_i32 = arith.constant 3 : i32
    %0 = arith.muli %arg0, %c3_i32 : i32
    %1 = arith.addi %0, %arg1 : i32
    %2 = arith.index_cast %1 : i32 to index
    %3 = memref.load %arg3[%2] : memref<6xi32, #tpu.memory_space<smem>>
    %c0_i32 = arith.constant 0 : i32
    %c0_i32_0 = arith.constant 0 : i32
    return %3, %c0_i32 : i32, i32
  }
  func.func @transform_3(%arg0: i32, %arg1: i32, %arg2: memref<6xi32, #tpu.memory_space<smem>>, %arg3: memref<6xi32, #tpu.memory_space<smem>>, %arg4: memref<6xi32, #tpu.memory_space<smem>>, %arg5: memref<6xi32, #tpu.memory_space<smem>>, %arg6: memref<6xi32, #tpu.memory_space<smem>>) -> (i32, i32) {
    %c3_i32 = arith.constant 3 : i32
    %0 = arith.muli %arg0, %c3_i32 : i32
    %1 = arith.addi %0, %arg1 : i32
    %2 = arith.index_cast %1 : i32 to index
    %3 = memref.load %arg3[%2] : memref<6xi32, #tpu.memory_space<smem>>
    %c0_i32 = arith.constant 0 : i32
    %c0_i32_0 = arith.constant 0 : i32
    return %3, %c0_i32 : i32, i32
  }
}

module attributes {stable_mosaic.version = 11 : i64} {
  func.func @_spmm_kernel(%arg0: i32, %arg1: i32, %arg2: memref<6xi32, #tpu.memory_space<smem>>, %arg3: memref<6xi32, #tpu.memory_space<smem>>, %arg4: memref<6xi32, #tpu.memory_space<smem>>, %arg5: memref<6xi32, #tpu.memory_space<smem>>, %arg6: memref<6xi32, #tpu.memory_space<smem>>, %arg7: memref<1x256x128xbf16, #tpu.memory_space<vmem>>, %arg8: memref<512x128xbf16, #tpu.memory_space<vmem>>, %arg9: memref<256x128xf32, #tpu.memory_space<vmem>>, %arg10: memref<256x128xbf16, #tpu.memory_space<vmem>>) attributes {dimension_semantics = [#tpu.dimension_semantics<parallel>, #tpu.dimension_semantics<arbitrary>], iteration_bounds = array<i64: 2, 3>, scalar_prefetch = 5 : i64, scratch_operands = 0 : i64, tpu.core_type = #tpu.core_type<tc>, window_params = [{transform_indices = @transform_0, window_bounds = array<i64: 1, 256, 128>}, {pipeline_mode = #tpu.pipeline_mode<synchronous>, transform_indices = @transform_1, window_bounds = array<i64: 512, 128>}, {transform_indices = @transform_2, window_bounds = array<i64: 256, 128>}, {transform_indices = @transform_3, window_bounds = array<i64: 256, 128>}]} {
    %c3_i32 = arith.constant 3 : i32
    %0 = arith.muli %arg0, %c3_i32 : i32
    %1 = arith.addi %0, %arg1 : i32
    %2 = arith.index_cast %1 : i32 to index
    %3 = memref.load %arg5[%2] : memref<6xi32, #tpu.memory_space<smem>>
    %c1_i32 = arith.constant 1 : i32
    %4 = arith.cmpi eq, %3, %c1_i32 : i32
    %5 = arith.extui %4 : i1 to i32
    %c0_i32 = arith.constant 0 : i32
    %6 = arith.cmpi ne, %5, %c0_i32 : i32
    scf.if %6 {
      %cst_9 = arith.constant 0.000000e+00 : f32
      %24 = vector.broadcast %cst_9 : f32 to vector<256x128xf32>
      %c0_10 = arith.constant 0 : index
      %c0_11 = arith.constant 0 : index
      %25 = vector.load %arg9[%c0_10, %c0_11] : memref<256x128xf32, #tpu.memory_space<vmem>>, vector<256x128xf32>
      tpu.vector_store %arg9[%c0_10, %c0_11], %24 {strides = array<i32>} : memref<256x128xf32, #tpu.memory_space<vmem>>, vector<256x128xf32>,
    } else {
    }
    %c0 = arith.constant 0 : index
    %c0_0 = arith.constant 0 : index
    %c0_1 = arith.constant 0 : index
    %7 = vector.load %arg7[%c0, %c0_0, %c0_1] : memref<1x256x128xbf16, #tpu.memory_space<vmem>>, vector<1x256x128xbf16>
    %8 = vector.shape_cast %7 : vector<1x256x128xbf16> to vector<256x128xbf16>
    %9 = arith.index_cast %1 : i32 to index
    %10 = memref.load %arg4[%9] : memref<6xi32, #tpu.memory_space<smem>>
    %c128_i32 = arith.constant 128 : i32
    %11 = arith.muli %10, %c128_i32 : i32
    %12 = tpu.assume_multiple %11, 128 : i32
    %13 = arith.index_cast %12 : i32 to index
    %c0_2 = arith.constant 0 : index
    %14 = vector.load %arg8[%13, %c0_2] : memref<512x128xbf16, #tpu.memory_space<vmem>>, vector<128x128xbf16>
    %c0_3 = arith.constant 0 : index
    %c0_4 = arith.constant 0 : index
    %15 = vector.load %arg9[%c0_3, %c0_4] : memref<256x128xf32, #tpu.memory_space<vmem>>, vector<256x128xf32>
    %cst = arith.constant dense<0.000000e+00> : vector<256x128xf32>
    %16 = tpu.matmul %8, %14, %cst {dimension_numbers = #tpu.dot_dimension_numbers<[1], [0], [0], [1], [0, 0, 1, 1], [], []>} : vector<256x128xbf16>, vector<128x128xbf16>, vector<256x128xf32> -> vector<256x128xf32>
    %17 = arith.addf %15, %16 : vector<256x128xf32>
    %c0_5 = arith.constant 0 : index
    %c0_6 = arith.constant 0 : index
    %18 = vector.load %arg9[%c0_5, %c0_6] : memref<256x128xf32, #tpu.memory_space<vmem>>, vector<256x128xf32>
    tpu.vector_store %arg9[%c0_5, %c0_6], %17 {strides = array<i32>} : memref<256x128xf32, #tpu.memory_space<vmem>>, vector<256x128xf32>,
    %19 = arith.index_cast %1 : i32 to index
    %20 = memref.load %arg6[%19] : memref<6xi32, #tpu.memory_space<smem>>
    %c1_i32_7 = arith.constant 1 : i32
    %21 = arith.cmpi eq, %20, %c1_i32_7 : i32
    %22 = arith.extui %21 : i1 to i32
    %c0_i32_8 = arith.constant 0 : i32
    %23 = arith.cmpi ne, %22, %c0_i32_8 : i32
    scf.if %23 {
      %c0_9 = arith.constant 0 : index
      %c0_10 = arith.constant 0 : index
      %24 = vector.load %arg9[%c0_9, %c0_10] : memref<256x128xf32, #tpu.memory_space<vmem>>, vector<256x128xf32>
      %25 = arith.truncf %24 : vector<256x128xf32> to vector<256x128xbf16>
      %c0_11 = arith.constant 0 : index
      %c0_12 = arith.constant 0 : index
      %26 = vector.load %arg10[%c0_11, %c0_12] : memref<256x128xbf16, #tpu.memory_space<vmem>>, vector<256x128xbf16>
      tpu.vector_store %arg10[%c0_11, %c0_12], %25 {strides = array<i32>} : memref<256x128xbf16, #tpu.memory_space<vmem>>, vector<256x128xbf16>,
    } else {
    }
    return
  }
  func.func @transform_0(%arg0: i32, %arg1: i32, %arg2: memref<6xi32, #tpu.memory_space<smem>>, %arg3: memref<6xi32, #tpu.memory_space<smem>>, %arg4: memref<6xi32, #tpu.memory_space<smem>>, %arg5: memref<6xi32, #tpu.memory_space<smem>>, %arg6: memref<6xi32, #tpu.memory_space<smem>>) -> (i32, i32, i32) {
    %c3_i32 = arith.constant 3 : i32
    %0 = arith.muli %arg0, %c3_i32 : i32
    %1 = arith.addi %0, %arg1 : i32
    %2 = arith.index_cast %1 : i32 to index
    %3 = memref.load %arg2[%2] : memref<6xi32, #tpu.memory_space<smem>>
    %c0_i32 = arith.constant 0 : i32
    %c0_i32_0 = arith.constant 0 : i32
    %c0_i32_1 = arith.constant 0 : i32
    return %3, %c0_i32, %c0_i32_0 : i32, i32, i32
  }
  func.func @transform_1(%arg0: i32, %arg1: i32, %arg2: memref<6xi32, #tpu.memory_space<smem>>, %arg3: memref<6xi32, #tpu.memory_space<smem>>, %arg4: memref<6xi32, #tpu.memory_space<smem>>, %arg5: memref<6xi32, #tpu.memory_space<smem>>, %arg6: memref<6xi32, #tpu.memory_space<smem>>) -> (i32, i32) {
    %c0_i32 = arith.constant 0 : i32
    %c0_i32_0 = arith.constant 0 : i32
    %c0_i32_1 = arith.constant 0 : i32
    return %c0_i32, %c0_i32_0 : i32, i32
  }
  func.func @transform_2(%arg0: i32, %arg1: i32, %arg2: memref<6xi32, #tpu.memory_space<smem>>, %arg3: memref<6xi32, #tpu.memory_space<smem>>, %arg4: memref<6xi32, #tpu.memory_space<smem>>, %arg5: memref<6xi32, #tpu.memory_space<smem>>, %arg6: memref<6xi32, #tpu.memory_space<smem>>) -> (i32, i32) {
    %c3_i32 = arith.constant 3 : i32
    %0 = arith.muli %arg0, %c3_i32 : i32
    %1 = arith.addi %0, %arg1 : i32
    %2 = arith.index_cast %1 : i32 to index
    %3 = memref.load %arg3[%2] : memref<6xi32, #tpu.memory_space<smem>>
    %c0_i32 = arith.constant 0 : i32
    %c0_i32_0 = arith.constant 0 : i32
    return %3, %c0_i32 : i32, i32
  }
  func.func @transform_3(%arg0: i32, %arg1: i32, %arg2: memref<6xi32, #tpu.memory_space<smem>>, %arg3: memref<6xi32, #tpu.memory_space<smem>>, %arg4: memref<6xi32, #tpu.memory_space<smem>>, %arg5: memref<6xi32, #tpu.memory_space<smem>>, %arg6: memref<6xi32, #tpu.memory_space<smem>>) -> (i32, i32) {
    %c3_i32 = arith.constant 3 : i32
    %0 = arith.muli %arg0, %c3_i32 : i32
    %1 = arith.addi %0, %arg1 : i32
    %2 = arith.index_cast %1 : i32 to index
    %3 = memref.load %arg3[%2] : memref<6xi32, #tpu.memory_space<smem>>
    %c0_i32 = arith.constant 0 : i32
    %c0_i32_0 = arith.constant 0 : i32
    return %3, %c0_i32 : i32, i32
  }
}

module attributes {stable_mosaic.version = 11 : i64} {
  func.func @_score_kernel(%arg0: i32, %arg1: memref<128x128xf32, #tpu.memory_space<vmem>>, %arg2: memref<128x128xf32, #tpu.memory_space<vmem>>, %arg3: memref<4x128x128xf32, #tpu.memory_space<vmem>>, %arg4: memref<5x128xf32, #tpu.memory_space<vmem>>) attributes {dimension_semantics = [#tpu.dimension_semantics<parallel>], iteration_bounds = array<i64: 1>, scalar_prefetch = 0 : i64, scratch_operands = 0 : i64, tpu.core_type = #tpu.core_type<tc>, window_params = [{transform_indices = @transform_0, window_bounds = array<i64: 128, 128>}, {transform_indices = @transform_1, window_bounds = array<i64: 128, 128>}, {transform_indices = @transform_2, window_bounds = array<i64: 4, 128, 128>}, {transform_indices = @transform_3, window_bounds = array<i64: 5, 128>}]} {
    %c0 = arith.constant 0 : index
    %c0_0 = arith.constant 0 : index
    %0 = vector.load %arg1[%c0, %c0_0] : memref<128x128xf32, #tpu.memory_space<vmem>>, vector<128x128xf32>
    %c0_1 = arith.constant 0 : index
    %c0_2 = arith.constant 0 : index
    %1 = vector.load %arg2[%c0_1, %c0_2] : memref<128x128xf32, #tpu.memory_space<vmem>>, vector<128x128xf32>
    %2 = vector.shape_cast %1 : vector<128x128xf32> to vector<1x128x128xf32>
    %c0_3 = arith.constant 0 : index
    %c0_4 = arith.constant 0 : index
    %c0_5 = arith.constant 0 : index
    %3 = vector.load %arg3[%c0_3, %c0_4, %c0_5] : memref<4x128x128xf32, #tpu.memory_space<vmem>>, vector<4x128x128xf32>
    %4 = tpu.concatenate %2, %3 in 0 : vector<1x128x128xf32>, vector<4x128x128xf32> -> vector<5x128x128xf32>
    %5 = arith.mulf %0, %0 : vector<128x128xf32>
    %cst = arith.constant dense<0.000000e+00> : vector<128xf32>
    %6 = vector.multi_reduction <add>, %5, %cst [1] : vector<128x128xf32> to vector<128xf32>
    %7 = vector.shape_cast %6 : vector<128xf32> to vector<128x1xf32>
    %cst_6 = arith.constant 1.000000e-24 : f32
    %8 = vector.broadcast %cst_6 : f32 to vector<128x1xf32>
    %9 = arith.maximumf %7, %8 : vector<128x1xf32>
    %10 = math.rsqrt %9 : vector<128x1xf32>
    %11 = vector.broadcast %10 : vector<128x1xf32> to vector<128x128xf32>
    %12 = arith.mulf %0, %11 : vector<128x128xf32>
    %13 = arith.mulf %4, %4 : vector<5x128x128xf32>
    %cst_7 = arith.constant dense<0.000000e+00> : vector<5x128xf32>
    %14 = vector.multi_reduction <add>, %13, %cst_7 [2] : vector<5x128x128xf32> to vector<5x128xf32>
    %15 = vector.shape_cast %14 : vector<5x128xf32> to vector<5x128x1xf32>
    %cst_8 = arith.constant 1.000000e-24 : f32
    %16 = vector.broadcast %cst_8 : f32 to vector<5x128x1xf32>
    %17 = arith.maximumf %15, %16 : vector<5x128x1xf32>
    %18 = math.rsqrt %17 : vector<5x128x1xf32>
    %19 = vector.broadcast %18 : vector<5x128x1xf32> to vector<5x128x128xf32>
    %20 = arith.mulf %4, %19 : vector<5x128x128xf32>
    %21 = vector.shape_cast %12 : vector<128x128xf32> to vector<1x128x128xf32>
    %22 = vector.broadcast %21 : vector<1x128x128xf32> to vector<5x128x128xf32>
    %23 = arith.mulf %20, %22 : vector<5x128x128xf32>
    %cst_9 = arith.constant dense<0.000000e+00> : vector<5x128xf32>
    %24 = vector.multi_reduction <add>, %23, %cst_9 [2] : vector<5x128x128xf32> to vector<5x128xf32>
    %c0_10 = arith.constant 0 : index
    %c0_11 = arith.constant 0 : index
    %25 = vector.load %arg4[%c0_10, %c0_11] : memref<5x128xf32, #tpu.memory_space<vmem>>, vector<5x128xf32>
    tpu.vector_store %arg4[%c0_10, %c0_11], %24 {strides = array<i32>} : memref<5x128xf32, #tpu.memory_space<vmem>>, vector<5x128xf32>,
    return
  }
  func.func @transform_0(%arg0: i32) -> (i32, i32) {
    %c0_i32 = arith.constant 0 : i32
    %c0_i32_0 = arith.constant 0 : i32
    return %arg0, %c0_i32 : i32, i32
  }
  func.func @transform_1(%arg0: i32) -> (i32, i32) {
    %c0_i32 = arith.constant 0 : i32
    %c0_i32_0 = arith.constant 0 : i32
    return %arg0, %c0_i32 : i32, i32
  }
  func.func @transform_2(%arg0: i32) -> (i32, i32, i32) {
    %c0_i32 = arith.constant 0 : i32
    %c0_i32_0 = arith.constant 0 : i32
    %c0_i32_1 = arith.constant 0 : i32
    return %c0_i32, %arg0, %c0_i32_0 : i32, i32, i32
  }
  func.func @transform_3(%arg0: i32) -> (i32, i32) {
    %c0_i32 = arith.constant 0 : i32
    %c0_i32_0 = arith.constant 0 : i32
    return %c0_i32, %arg0 : i32, i32
  }
}

</mosaic_0001>

<llo_original>
// kernel: lgn_forward.4
$region0: #{lgn_forward.4}
  #allocation0 [shape = 'u32[]', space=smem, size = 0x4, offset = 0x4, fixed_abs, tag = 'smem constant byte address 0x4 - core index']
  #allocation1 [shape = 'u32[144,128]{1,0:T(1,128)}', space=vmem, size = 0x12000, scoped, tag = 'internal scratch']
  #allocation2 [shape = 's32[1]{0}', space=sflag, size = 0x4, scoped, tag = 'scoped memory for lgn_forward.4']
  #allocation3 [shape = 'u8[512]{0}', space=smem, size = 0x200, scoped, tag = 'prefetched SMEM operand 0']
  #allocation4 [shape = 'u8[512]{0}', space=smem, size = 0x200, scoped, tag = 'prefetched SMEM operand 1']
  #allocation5 [shape = 'u8[512]{0}', space=smem, size = 0x200, scoped, tag = 'prefetched SMEM operand 2']
  #allocation6 [shape = 'u8[512]{0}', space=smem, size = 0x200, scoped, tag = 'prefetched SMEM operand 3']
  #allocation7 [shape = 'u8[512]{0}', space=smem, size = 0x200, scoped, tag = 'prefetched SMEM operand 4']
  %s0 = inlined_call_operand.vmem [shape: s32[6], index: 0, kind: input, shape index: {}]
  %s1 = inlined_call_operand.vmem [shape: s32[6], index: 1, kind: input, shape index: {}]
  %s2 = inlined_call_operand.vmem [shape: s32[6], index: 2, kind: input, shape index: {}]
  %s3 = inlined_call_operand.vmem [shape: s32[6], index: 3, kind: input, shape index: {}]
  %s4 = inlined_call_operand.vmem [shape: s32[6], index: 4, kind: input, shape index: {}]
  %s5 = inlined_call_operand.vmem [shape: bf16[6,256,128], index: 5, kind: input, shape index: {}]
  %s6 = inlined_call_operand.vmem [shape: bf16[512,128], index: 6, kind: input, shape index: {}]
  %s7 = inlined_call_operand.vmem [shape: f32[512,128], index: 7, kind: output, shape index: {0}]
  %s8 = inlined_call_operand.hbm [shape: bf16[512,128], index: 8, kind: output, shape index: {1}]
  %9 = xla_tuple %s7, %s8
  %s10 = sld [smem:[#allocation0]]
  $region57: #{lgn_forward.4} parent=0
    _
  %s12 = ssub.s32 1, %s10
  %s13 = scalar_select 0, %s12, %s10
  %s14 = sshll.u32 %s0, 4
  %s15 = int_to_ptr.vmem [resolvable:$true] %s14
  %17 = dma.vmem_to_smem %s15, 16, [#allocation3], [#allocation2]
  %s18 = sshll.u32 %s1, 4
  %s19 = int_to_ptr.vmem [resolvable:$true] %s18
  %21 = dma.vmem_to_smem %s19, 16, [#allocation4], [#allocation2]
  %s22 = sshll.u32 %s2, 4
  %s23 = int_to_ptr.vmem [resolvable:$true] %s22
  %25 = dma.vmem_to_smem %s23, 16, [#allocation5], [#allocation2]
  %s26 = sshll.u32 %s3, 4
  %s27 = int_to_ptr.vmem [resolvable:$true] %s26
  %29 = dma.vmem_to_smem %s27, 16, [#allocation6], [#allocation2]
  %s30 = sshll.u32 %s4, 4
  %s31 = int_to_ptr.vmem [resolvable:$true] %s30
  %33 = dma.vmem_to_smem %s31, 16, [#allocation7], [#allocation2]
  %34 = dma.done [#allocation2], 80
  %35 = sfence
  $region1: #{lgn_forward.4} parent=0
    #allocation8 [shape = 'u8[131072]{0}', space=vmem, size = 0x20000, scoped, tag = 'output window, operand 1']
    #allocation9 [shape = 's32[2]{0}', space=sflag, size = 0x8, scoped, tag = 'scoped memory for lgn_forward.4']
    %36 = vsyncpa [#allocation9], 0
    %s37 = scalar_lea.sflag [#allocation9], 1
    %38 = vsyncpa %s37, 0
    loop: start=0, step=1, limit=8
    $region2: #{lgn_forward.4} parent=1 // loop_pre_header
      _
    $region3: #{lgn_forward.4} parent=1 // loop_header
      %s40 = sphi 0, %s44
      %p41 = scmp.ge.s32.totalorder %s40, 8
      %s47 = sphi 0, %s59
      %s48 = sphi 0, %s55
      %s49 = sphi 0, %s47
      %s50 = sphi 0, %s48
      %s51 = sphi 0, %s49
      %s52 = sphi 0, %s50
      %s68 = sphi 0, %s70
      %s71 = sphi 0, %s68
      %s72 = sphi 0, %s71
      %s88 = sphi 0, %s72
      %s92 = sphi 0, %s92
      %s94 = sphi 0, %s92
      %s95 = sphi 0, %s94
      %s109 = sphi 0, %s95
      %s121 = sphi 0, %s123
      %s124 = sphi 0, %s121
      %s125 = sphi 0, %s124
      %s141 = sphi 0, %s125
      %s153 = sphi 0, %s155
      %s156 = sphi 0, %s153
      %s157 = sphi 0, %s156
      %s173 = sphi 0, %s157
    $region4: #{lgn_forward.4} parent=1 // loop_header_branch
      %43 = sbr.rel (%p41) target = $region8
    $region5: #{lgn_forward.4} parent=1 // loop_body
      %s45 = ssub.s32 %s40, 1
      %s46 = ssub.s32 %s40, 2
      %s53 = sadd.s32 1, %s48
      %p54 = scmp.ge.s32.totalorder %s53, 3
      %s55 = scalar_select %p54, 0, %s53
      %s56 = sadd.s32 1, %s47
      %s57 = scalar_select %p54, %s56, %s47
      %p58 = scmp.ge.s32.totalorder %s57, 2
      %s59 = scalar_select %p58, 0, %s57
      %s60 = smul.u32 %s47, 3
      %s61 = sadd.s32 %s60, %s48
      %s62 = sld [smem:[#allocation3 + %s61]]
      %s63 = smul.u32 %s59, 3
      %s64 = sadd.s32 %s63, %s55
      %s65 = sld [smem:[#allocation3 + %s64]]
      %s66 = ssub.s32 %s62, %s65
      %p67 = scmp.eq.s32.totalorder %s66, 0
      %s69 = sadd.s32 %s68, 1
      %s70 = scalar_select %p67, %s68, %s69
      %p73 = pneg %p67
      %p74 = scmp.eq.s32.totalorder %s40, 5
      %p75 = por %p73, %p74
      %p76 = scmp.ne.s32.totalorder %s68, %s71
      %p77 = scmp.eq.s32.totalorder %s40, 0
      %p78 = por %p76, %p77
      %p79 = scmp.ne.s32.totalorder %s68, %s71
      %p80 = scmp.eq.s32.totalorder %s45, 5
      %p81 = por %p79, %p80
      %p82 = scmp.ne.s32.totalorder %s71, %s72
      %p83 = scmp.eq.s32.totalorder %s45, 0
      %p84 = por %p82, %p83
      %p85 = scmp.ne.s32.totalorder %s71, %s72
      %p86 = scmp.eq.s32.totalorder %s46, 5
      %p87 = por %p85, %p86
      %p89 = scmp.ne.s32.totalorder %s72, %s88
      %p90 = scmp.eq.s32.totalorder %s46, 0
      %p91 = por %p89, %p90
      %s93 = sadd.s32 %s92, 1
      %p96 = scmp.eq.s32.totalorder %s40, 5
      %p97 = scmp.ne.s32.totalorder %s92, %s94
      %p98 = scmp.eq.s32.totalorder %s40, 0
      %p99 = por %p97, %p98
      %p100 = scmp.ne.s32.totalorder %s92, %s94
      %p101 = scmp.eq.s32.totalorder %s45, 5
      %p102 = por %p100, %p101
      %p103 = scmp.ne.s32.totalorder %s94, %s95
      %p104 = scmp.eq.s32.totalorder %s45, 0
      %p105 = por %p103, %p104
      %p106 = scmp.ne.s32.totalorder %s94, %s95
      %p107 = scmp.eq.s32.totalorder %s46, 5
      %p108 = por %p106, %p107
      %p110 = scmp.ne.s32.totalorder %s95, %s109
      %p111 = scmp.eq.s32.totalorder %s46, 0
      %p112 = por %p110, %p111
      %s113 = smul.u32 %s47, 3
      %s114 = sadd.s32 %s113, %s48
      %s115 = sld [smem:[#allocation4 + %s114]]
      %s116 = smul.u32 %s59, 3
      %s117 = sadd.s32 %s116, %s55
      %s118 = sld [smem:[#allocation4 + %s117]]
      %s119 = ssub.s32 %s115, %s118
      %p120 = scmp.eq.s32.totalorder %s119, 0
      %s122 = sadd.s32 %s121, 1
      %s123 = scalar_select %p120, %s121, %s122
      %p126 = pneg %p120
      %p127 = scmp.eq.s32.totalorder %s40, 5
      %p128 = por %p126, %p127
      %p129 = scmp.ne.s32.totalorder %s121, %s124
      %p130 = scmp.eq.s32.totalorder %s40, 0
      %p131 = por %p129, %p130
      %p132 = scmp.ne.s32.totalorder %s121, %s124
      %p133 = scmp.eq.s32.totalorder %s45, 5
      %p134 = por %p132, %p133
      %p135 = scmp.ne.s32.totalorder %s124, %s125
      %p136 = scmp.eq.s32.totalorder %s45, 0
      %p137 = por %p135, %p136
      %p138 = scmp.ne.s32.totalorder %s124, %s125
      %p139 = scmp.eq.s32.totalorder %s46, 5
      %p140 = por %p138, %p139
      %p142 = scmp.ne.s32.totalorder %s125, %s141
      %p143 = scmp.eq.s32.totalorder %s46, 0
      %p144 = por %p142, %p143
      %s145 = smul.u32 %s47, 3
      %s146 = sadd.s32 %s145, %s48
      %s147 = sld [smem:[#allocation4 + %s146]]
      %s148 = smul.u32 %s59, 3
      %s149 = sadd.s32 %s148, %s55
      %s150 = sld [smem:[#allocation4 + %s149]]
      %s151 = ssub.s32 %s147, %s150
      %p152 = scmp.eq.s32.totalorder %s151, 0
      %s154 = sadd.s32 %s153, 1
      %s155 = scalar_select %p152, %s153, %s154
      %p158 = pneg %p152
      %p159 = scmp.eq.s32.totalorder %s40, 5
      %p160 = por %p158, %p159
      %p161 = scmp.ne.s32.totalorder %s153, %s156
      %p162 = scmp.eq.s32.totalorder %s40, 0
      %p163 = por %p161, %p162
      %p164 = scmp.ne.s32.totalorder %s153, %s156
      %p165 = scmp.eq.s32.totalorder %s45, 5
      %p166 = por %p164, %p165
      %p167 = scmp.ne.s32.totalorder %s156, %s157
      %p168 = scmp.eq.s32.totalorder %s45, 0
      %p169 = por %p167, %p168
      %p170 = scmp.ne.s32.totalorder %s156, %s157
      %p171 = scmp.eq.s32.totalorder %s46, 5
      %p172 = por %p170, %p171
      %p174 = scmp.ne.s32.totalorder %s157, %s173
      %p175 = scmp.eq.s32.totalorder %s46, 0
      %p176 = por %p174, %p175
      %p177 = scmp.le.s32.totalorder 1, %s40
      %p178 = scmp.lt.s32.totalorder %s40, 7
      %p179 = pnand %p177, %p178
      %p180 = pneg %p179
      // Predicated region
      $region9: #{lgn_forward.4} parent=5 // pred_check
        _
      $region10: #{lgn_forward.4} parent=5 // pred_check_branch
        %182 = sbr.rel (%p179) target = $region12
      $region11: #{lgn_forward.4} parent=5 // pred_region
        %s183 = ssub.s32 %s40, 1
        // Predicated region
        $region13: #{lgn_forward.4} parent=11 // pred_check
          %p184 = pneg %p105
        $region14: #{lgn_forward.4} parent=11 // pred_check_branch
          %186 = sbr.rel (%p184) target = $region16
        $region15: #{lgn_forward.4} parent=11 // pred_region
          _
        $region16: #{lgn_forward.4} parent=11 // pred_fallthru
          _
      $region12: #{lgn_forward.4} parent=5 // pred_fallthru
        _
      %p187 = scmp.lt.s32.totalorder %s40, 6
      // Predicated region
      $region17: #{lgn_forward.4} parent=5 // pred_check
        %p188 = pneg %p187
      $region18: #{lgn_forward.4} parent=5 // pred_check_branch
        %190 = sbr.rel (%p188) target = $region20
      $region19: #{lgn_forward.4} parent=5 // pred_region
        // Predicated region
        $region21: #{lgn_forward.4} parent=19 // pred_check
          %p191 = pneg %p78
        $region22: #{lgn_forward.4} parent=19 // pred_check_branch
          %193 = sbr.rel (%p191) target = $region24
        $region23: #{lgn_forward.4} parent=19 // pred_region
          %s194 = smul.u32 %s47, 3
          %s195 = sadd.s32 %s194, %s48
          %s196 = sld [smem:[#allocation3 + %s195]]
          %p197 = scmp.lt.s32.totalorder %s196, 5
          %s198 = scalar_select %p197, %s196, 5
          %s199 = smul.addr %s198, 32
          %s200 = smul.addr %s199, 4
          %s201 = scalar_lea.vmem %s5, %s200
          %s202 = smul.u32 %s47, 3
          %s203 = sadd.s32 %s202, %s48
          %s204 = sld [smem:[#allocation3 + %s203]]
        $region24: #{lgn_forward.4} parent=19 // pred_fallthru
          _
      $region20: #{lgn_forward.4} parent=5 // pred_fallthru
        _
      %p205 = scmp.le.s32.totalorder 1, %s40
      %p206 = scmp.lt.s32.totalorder %s40, 7
      %p207 = pnand %p205, %p206
      %p208 = pneg %p207
      // Predicated region
      $region25: #{lgn_forward.4} parent=5 // pred_check
        _
      $region26: #{lgn_forward.4} parent=5 // pred_check_branch
        %210 = sbr.rel (%p207) target = $region28
      $region27: #{lgn_forward.4} parent=5 // pred_region
        %s211 = ssub.s32 %s40, 1
        %s212 = smul.u32 %s49, 3
        %s213 = sadd.s32 %s212, %s50
        %s214 = sld [smem:[#allocation3 + %s213]]
        %p215 = scmp.lt.s32.totalorder %s214, 5
        %s216 = scalar_select %p215, %s214, 5
        %s217 = smul.addr %s216, 32
        %s218 = smul.addr %s217, 4
        %s219 = scalar_lea.vmem %s5, %s218
        %p220 = pneg %p84
        %p221 = pneg %p81
        %p222 = pneg %p105
        %p223 = pneg %p102
        %p224 = pneg %p137
        %p225 = pneg %p134
        %s226 = smul.u32 %s49, 3
        %s227 = sadd.s32 %s226, %s50
        %s228 = sld [smem:[#allocation4 + %s227]]
        %s229 = smul.u32 32, %s228
        %p230 = scmp.lt.s32.totalorder %s229, 63
        %s231 = scalar_select %p230, %s229, 63
        %s232 = smul.addr %s231, 8
        %s233 = scalar_lea.vmem %s7, %s232
        %p234 = pneg %p169
        %p235 = pneg %p166
        %s236 = sand.u32 %s156, 1
        %s237 = scalar_lea.sflag [#allocation9], %s236
        %s238 = sand.u32 %s156, 1
        %s239 = smul.addr %s238, 128
        %s240 = scalar_lea.vmem [#allocation8], %s239
        %s241 = smul.u32 %s49, 3
        %s242 = sadd.s32 %s241, %s50
        %s243 = sld [smem:[#allocation3 + %s242]]
        %p244 = scmp.lt.s32.totalorder %s243, 5
        %s245 = scalar_select %p244, %s243, 5
        %s246 = smul.addr %s245, 32
        %s247 = smul.addr %s246, 4
        %s248 = scalar_lea.vmem %s5, %s247
        %s249 = smul.u32 %s49, 3
        %s250 = sadd.s32 %s249, %s50
        %s251 = sld [smem:[#allocation3 + %s250]]
        %s252 = smul.u32 %s49, 3
        %s253 = sadd.s32 %s252, %s50
        %s254 = sld [smem:[#allocation4 + %s253]]
        %s255 = smul.u32 32, %s254
        %p256 = scmp.lt.s32.totalorder %s255, 63
        %s257 = scalar_select %p256, %s255, 63
        %s258 = smul.addr %s257, 8
        %s259 = scalar_lea.vmem %s7, %s258
        %s260 = smul.u32 %s49, 3
        %s261 = sadd.s32 %s260, %s50
        %s262 = sld [smem:[#allocation4 + %s261]]
        %s263 = smul.u32 32, %s262
        %s264 = smul.u32 %s49, 3
        %s265 = sadd.s32 %s264, %s50
        %s266 = sld [smem:[#allocation4 + %s265]]
        %s267 = smul.u32 32, %s266
        %s269 = smul.u32 %s49, 3
        %s270 = sadd.s32 %s269, %s50
        %s271 = sld [smem:[#allocation6 + %s270]]
        %p272 = scmp.eq.s32.totalorder %s271, 1
        // Predicated region
        $region29: #{lgn_forward.4} parent=27 // pred_check
          %p273 = pneg %p272
        $region30: #{lgn_forward.4} parent=27 // pred_check_branch
          %275 = sbr.rel (%p273) target = $region32
        $region31: #{lgn_forward.4} parent=27 // pred_region
          %276 = vst [vmem:[%s259] sm:$0xff] 0.0
          %277 = vst [vmem:[%s259 + $0x8] sm:$0xff] 0.0
          %278 = vst [vmem:[%s259 + $0x10] sm:$0xff] 0.0
          %279 = vst [vmem:[%s259 + $0x18] sm:$0xff] 0.0
          %280 = vst [vmem:[%s259 + $0x20] sm:$0xff] 0.0
          %281 = vst [vmem:[%s259 + $0x28] sm:$0xff] 0.0
          %282 = vst [vmem:[%s259 + $0x30] sm:$0xff] 0.0
          %283 = vst [vmem:[%s259 + $0x38] sm:$0xff] 0.0
          %284 = vst [vmem:[%s259 + $0x40] sm:$0xff] 0.0
          %285 = vst [vmem:[%s259 + $0x48] sm:$0xff] 0.0
          %286 = vst [vmem:[%s259 + $0x50] sm:$0xff] 0.0
          %287 = vst [vmem:[%s259 + $0x58] sm:$0xff] 0.0
          %288 = vst [vmem:[%s259 + $0x60] sm:$0xff] 0.0
          %289 = vst [vmem:[%s259 + $0x68] sm:$0xff] 0.0
          %290 = vst [vmem:[%s259 + $0x70] sm:$0xff] 0.0
          %291 = vst [vmem:[%s259 + $0x78] sm:$0xff] 0.0
          %292 = vst [vmem:[%s259 + $0x80] sm:$0xff] 0.0
          %293 = vst [vmem:[%s259 + $0x88] sm:$0xff] 0.0
          %294 = vst [vmem:[%s259 + $0x90] sm:$0xff] 0.0
          %295 = vst [vmem:[%s259 + $0x98] sm:$0xff] 0.0
          %296 = vst [vmem:[%s259 + $0xa0] sm:$0xff] 0.0
          %297 = vst [vmem:[%s259 + $0xa8] sm:$0xff] 0.0
          %298 = vst [vmem:[%s259 + $0xb0] sm:$0xff] 0.0
          %299 = vst [vmem:[%s259 + $0xb8] sm:$0xff] 0.0
          %300 = vst [vmem:[%s259 + $0xc0] sm:$0xff] 0.0
          %301 = vst [vmem:[%s259 + $0xc8] sm:$0xff] 0.0
          %302 = vst [vmem:[%s259 + $0xd0] sm:$0xff] 0.0
          %303 = vst [vmem:[%s259 + $0xd8] sm:$0xff] 0.0
          %304 = vst [vmem:[%s259 + $0xe0] sm:$0xff] 0.0
          %305 = vst [vmem:[%s259 + $0xe8] sm:$0xff] 0.0
          %306 = vst [vmem:[%s259 + $0xf0] sm:$0xff] 0.0
          %307 = vst [vmem:[%s259 + $0xf8] sm:$0xff] 0.0
        $region32: #{lgn_forward.4} parent=27 // pred_fallthru
          _
        %v308 = vld [vmem:[%s248] sm:$0xf]
        %v309 = vld [vmem:[%s248 + $0x4] sm:$0xf]
        %v310 = vld [vmem:[%s248 + $0x8] sm:$0xf]
        %v311 = vld [vmem:[%s248 + $0xc] sm:$0xf]
        %v312 = vld [vmem:[%s248 + $0x10] sm:$0xf]
        %v313 = vld [vmem:[%s248 + $0x14] sm:$0xf]
        %v314 = vld [vmem:[%s248 + $0x18] sm:$0xf]
        %v315 = vld [vmem:[%s248 + $0x1c] sm:$0xf]
        %v316 = vld [vmem:[%s248 + $0x20] sm:$0xf]
        %v317 = vld [vmem:[%s248 + $0x24] sm:$0xf]
        %v318 = vld [vmem:[%s248 + $0x28] sm:$0xf]
        %v319 = vld [vmem:[%s248 + $0x2c] sm:$0xf]
        %v320 = vld [vmem:[%s248 + $0x30] sm:$0xf]
        %v321 = vld [vmem:[%s248 + $0x34] sm:$0xf]
        %v322 = vld [vmem:[%s248 + $0x38] sm:$0xf]
        %v323 = vld [vmem:[%s248 + $0x3c] sm:$0xf]
        %v324 = vld [vmem:[%s248 + $0x40] sm:$0xf]
        %v325 = vld [vmem:[%s248 + $0x44] sm:$0xf]
        %v326 = vld [vmem:[%s248 + $0x48] sm:$0xf]
        %v327 = vld [vmem:[%s248 + $0x4c] sm:$0xf]
        %v328 = vld [vmem:[%s248 + $0x50] sm:$0xf]
        %v329 = vld [vmem:[%s248 + $0x54] sm:$0xf]
        %v330 = vld [vmem:[%s248 + $0x58] sm:$0xf]
        %v331 = vld [vmem:[%s248 + $0x5c] sm:$0xf]
        %v332 = vld [vmem:[%s248 + $0x60] sm:$0xf]
        %v333 = vld [vmem:[%s248 + $0x64] sm:$0xf]
        %v334 = vld [vmem:[%s248 + $0x68] sm:$0xf]
        %v335 = vld [vmem:[%s248 + $0x6c] sm:$0xf]
        %v336 = vld [vmem:[%s248 + $0x70] sm:$0xf]
        %v337 = vld [vmem:[%s248 + $0x74] sm:$0xf]
        %v338 = vld [vmem:[%s248 + $0x78] sm:$0xf]
        %v339 = vld [vmem:[%s248 + $0x7c] sm:$0xf]
        %s340 = sld [smem:[#allocation5 + %s270]]
        %s341 = smul.u32 %s340, 128
        %s342 = sshra.s32 %s341, 3
        %s343 = sand.u32 %s341, 7
        %s344 = smul.addr %s342, 4
        %s345 = scalar_lea.vmem %s6, %s344
        %v346 = vld [vmem:[%s345] sm:$0xf]
        %v347 = vld [vmem:[%s345 + $0x4] sm:$0xf]
        %v348 = vld [vmem:[%s345 + $0x8] sm:$0xf]
        %v349 = vld [vmem:[%s345 + $0xc] sm:$0xf]
        %v350 = vld [vmem:[%s345 + $0x10] sm:$0xf]
        %v351 = vld [vmem:[%s345 + $0x14] sm:$0xf]
        %v352 = vld [vmem:[%s345 + $0x18] sm:$0xf]
        %v353 = vld [vmem:[%s345 + $0x1c] sm:$0xf]
        %v354 = vld [vmem:[%s345 + $0x20] sm:$0xf]
        %v355 = vld [vmem:[%s345 + $0x24] sm:$0xf]
        %v356 = vld [vmem:[%s345 + $0x28] sm:$0xf]
        %v357 = vld [vmem:[%s345 + $0x2c] sm:$0xf]
        %v358 = vld [vmem:[%s345 + $0x30] sm:$0xf]
        %v359 = vld [vmem:[%s345 + $0x34] sm:$0xf]
        %v360 = vld [vmem:[%s345 + $0x38] sm:$0xf]
        %v361 = vld [vmem:[%s345 + $0x3c] sm:$0xf]
        %v362 = vld [vmem:[%s259] sm:$0xff]
        %v363 = vld [vmem:[%s259 + $0x8] sm:$0xff]
        %v364 = vld [vmem:[%s259 + $0x10] sm:$0xff]
        %v365 = vld [vmem:[%s259 + $0x18] sm:$0xff]
        %v366 = vld [vmem:[%s259 + $0x20] sm:$0xff]
        %v367 = vld [vmem:[%s259 + $0x28] sm:$0xff]
        %v368 = vld [vmem:[%s259 + $0x30] sm:$0xff]
        %v369 = vld [vmem:[%s259 + $0x38] sm:$0xff]
        %v370 = vld [vmem:[%s259 + $0x40] sm:$0xff]
        %v371 = vld [vmem:[%s259 + $0x48] sm:$0xff]
        %v372 = vld [vmem:[%s259 + $0x50] sm:$0xff]
        %v373 = vld [vmem:[%s259 + $0x58] sm:$0xff]
        %v374 = vld [vmem:[%s259 + $0x60] sm:$0xff]
        %v375 = vld [vmem:[%s259 + $0x68] sm:$0xff]
        %v376 = vld [vmem:[%s259 + $0x70] sm:$0xff]
        %v377 = vld [vmem:[%s259 + $0x78] sm:$0xff]
        %v378 = vld [vmem:[%s259 + $0x80] sm:$0xff]
        %v379 = vld [vmem:[%s259 + $0x88] sm:$0xff]
        %v380 = vld [vmem:[%s259 + $0x90] sm:$0xff]
        %v381 = vld [vmem:[%s259 + $0x98] sm:$0xff]
        %v382 = vld [vmem:[%s259 + $0xa0] sm:$0xff]
        %v383 = vld [vmem:[%s259 + $0xa8] sm:$0xff]
        %v384 = vld [vmem:[%s259 + $0xb0] sm:$0xff]
        %v385 = vld [vmem:[%s259 + $0xb8] sm:$0xff]
        %v386 = vld [vmem:[%s259 + $0xc0] sm:$0xff]
        %v387 = vld [vmem:[%s259 + $0xc8] sm:$0xff]
        %v388 = vld [vmem:[%s259 + $0xd0] sm:$0xff]
        %v389 = vld [vmem:[%s259 + $0xd8] sm:$0xff]
        %v390 = vld [vmem:[%s259 + $0xe0] sm:$0xff]
        %v391 = vld [vmem:[%s259 + $0xe8] sm:$0xff]
        %v392 = vld [vmem:[%s259 + $0xf0] sm:$0xff]
        %v393 = vld [vmem:[%s259 + $0xf8] sm:$0xff]
        %v426 = vunpack.c.l.b16 %v308
        %v427 = vunpack.c.l.b16 %v309
        %v428 = vunpack.c.l.b16 %v310
        %v429 = vunpack.c.l.b16 %v311
        %v430 = vunpack.c.l.b16 %v312
        %v431 = vunpack.c.l.b16 %v313
        %v432 = vunpack.c.l.b16 %v314
        %v433 = vunpack.c.l.b16 %v315
        %v434 = vunpack.c.l.b16 %v316
        %v435 = vunpack.c.l.b16 %v317
        %v436 = vunpack.c.l.b16 %v318
        %v437 = vunpack.c.l.b16 %v319
        %v438 = vunpack.c.l.b16 %v320
        %v439 = vunpack.c.l.b16 %v321
        %v440 = vunpack.c.l.b16 %v322
        %v441 = vunpack.c.l.b16 %v323
        %v442 = vunpack.c.l.b16 %v324
        %v443 = vunpack.c.l.b16 %v325
        %v444 = vunpack.c.l.b16 %v326
        %v445 = vunpack.c.l.b16 %v327
        %v446 = vunpack.c.l.b16 %v328
        %v447 = vunpack.c.l.b16 %v329
        %v448 = vunpack.c.l.b16 %v330
        %v449 = vunpack.c.l.b16 %v331
        %v450 = vunpack.c.l.b16 %v332
        %v451 = vunpack.c.l.b16 %v333
        %v452 = vunpack.c.l.b16 %v334
        %v453 = vunpack.c.l.b16 %v335
        %v454 = vunpack.c.l.b16 %v336
        %v455 = vunpack.c.l.b16 %v337
        %v456 = vunpack.c.l.b16 %v338
        %v457 = vunpack.c.l.b16 %v339
        %v458 = vpack.c.b16 %v427, %v426
        %v459 = vpack.c.b16 %v429, %v428
        %v460 = vpack.c.b16 %v431, %v430
        %v461 = vpack.c.b16 %v433, %v432
        %v462 = vpack.c.b16 %v435, %v434
        %v463 = vpack.c.b16 %v437, %v436
        %v464 = vpack.c.b16 %v439, %v438
        %v465 = vpack.c.b16 %v441, %v440
        %v466 = vpack.c.b16 %v443, %v442
        %v467 = vpack.c.b16 %v445, %v444
        %v468 = vpack.c.b16 %v447, %v446
        %v469 = vpack.c.b16 %v449, %v448
        %v470 = vpack.c.b16 %v451, %v450
        %v471 = vpack.c.b16 %v453, %v452
        %v472 = vpack.c.b16 %v455, %v454
        %v473 = vpack.c.b16 %v457, %v456
        %v506 = vunpack.c.l.b16 %v346
        %v507 = vunpack.c.l.b16 %v347
        %v508 = vunpack.c.l.b16 %v348
        %v509 = vunpack.c.l.b16 %v349
        %v510 = vunpack.c.l.b16 %v350
        %v511 = vunpack.c.l.b16 %v351
        %v512 = vunpack.c.l.b16 %v352
        %v513 = vunpack.c.l.b16 %v353
        %v514 = vunpack.c.l.b16 %v354
        %v515 = vunpack.c.l.b16 %v355
        %v516 = vunpack.c.l.b16 %v356
        %v517 = vunpack.c.l.b16 %v357
        %v518 = vunpack.c.l.b16 %v358
        %v519 = vunpack.c.l.b16 %v359
        %v520 = vunpack.c.l.b16 %v360
        %v521 = vunpack.c.l.b16 %v361
        %v522 = vpack.c.b16 %v507, %v506
        %v523 = vpack.c.b16 %v509, %v508
        %v524 = vpack.c.b16 %v511, %v510
        %v525 = vpack.c.b16 %v513, %v512
        %v526 = vpack.c.b16 %v515, %v514
        %v527 = vpack.c.b16 %v517, %v516
        %v528 = vpack.c.b16 %v519, %v518
        %v529 = vpack.c.b16 %v521, %v520
        %538 = vmatprep.subr.bf16.mxu0 0
        %539 = vmatpush1.bf16.msra.mxu0 %v522
        %540 = vmatprep.subr.bf16.mxu0 0
        %541 = vmatpush1.bf16.msra.mxu0 %v523
        %542 = vmatprep.subr.bf16.mxu0 0
        %543 = vmatpush1.bf16.msra.mxu0 %v524
        %544 = vmatprep.subr.bf16.mxu0 0
        %545 = vmatpush1.bf16.msra.mxu0 %v525
        %546 = vmatprep.subr.bf16.mxu0 0
        %547 = vmatpush1.bf16.msra.mxu0 %v526
        %548 = vmatprep.subr.bf16.mxu0 0
        %549 = vmatpush1.bf16.msra.mxu0 %v527
        %550 = vmatprep.subr.bf16.mxu0 0
        %551 = vmatpush1.bf16.msra.mxu0 %v528
        %552 = vmatprep.subr.bf16.mxu0 0
        %553 = vmatpush1.bf16.msra.mxu0 %v529
        %554 = vmatprep.subr.bf16.mxu0 0
        %555 = vmatpush1.bf16.msra.mxu0 0
        %556 = vmatprep.subr.bf16.mxu0 0
        %557 = vmatpush1.bf16.msra.mxu0 0
        %558 = vmatprep.subr.bf16.mxu0 0
        %559 = vmatpush1.bf16.msra.mxu0 0
        %560 = vmatprep.subr.bf16.mxu0 0
        %561 = vmatpush1.bf16.msra.mxu0 0
        %562 = vmatprep.subr.bf16.mxu0 0
        %563 = vmatpush1.bf16.msra.mxu0 0
        %564 = vmatprep.subr.bf16.mxu0 0
        %565 = vmatpush1.bf16.msra.mxu0 0
        %566 = vmatprep.subr.bf16.mxu0 0
        %567 = vmatpush1.bf16.msra.mxu0 0
        %568 = vmatprep.subr.bf16.mxu0 0
        %569 = vmatpush1.bf16.msra.mxu0 0
        %570 = vmatprep.mubr.bf16.mxu0 0
        %571 = vmatmul.mubr.bf16.gmra.mrb[0].mxu0 %v458
        %v572 = vpop.f32.mrb[0].mxu0
        %v573 = vadd.f32 0.0, %v572
        %v574 = vpop.f32.mrb[0].mxu0
        %v575 = vpop.f32.mrb[0].mxu0
        %v576 = vadd.f32 0.0, %v575
        %v577 = vpop.f32.mrb[0].mxu0
        %578 = vmatprep.mubr.bf16.mxu0 0
        %579 = vmatmul.mubr.bf16.gmra.mrb[0].mxu0 %v459
        %v580 = vpop.f32.mrb[0].mxu0
        %v581 = vadd.f32 0.0, %v580
        %v582 = vpop.f32.mrb[0].mxu0
        %v583 = vpop.f32.mrb[0].mxu0
        %v584 = vadd.f32 0.0, %v583
        %v585 = vpop.f32.mrb[0].mxu0
        %586 = vmatprep.mubr.bf16.mxu0 0
        %587 = vmatmul.mubr.bf16.gmra.mrb[0].mxu0 %v460
        %v588 = vpop.f32.mrb[0].mxu0
        %v589 = vadd.f32 0.0, %v588
        %v590 = vpop.f32.mrb[0].mxu0
        %v591 = vpop.f32.mrb[0].mxu0
        %v592 = vadd.f32 0.0, %v591
        %v593 = vpop.f32.mrb[0].mxu0
        %594 = vmatprep.mubr.bf16.mxu0 0
        %595 = vmatmul.mubr.bf16.gmra.mrb[0].mxu0 %v461
        %v596 = vpop.f32.mrb[0].mxu0
        %v597 = vadd.f32 0.0, %v596
        %v598 = vpop.f32.mrb[0].mxu0
        %v599 = vpop.f32.mrb[0].mxu0
        %v600 = vadd.f32 0.0, %v599
        %v601 = vpop.f32.mrb[0].mxu0
        %602 = vmatprep.mubr.bf16.mxu0 0
        %603 = vmatmul.mubr.bf16.gmra.mrb[0].mxu0 %v462
        %v604 = vpop.f32.mrb[0].mxu0
        %v605 = vadd.f32 0.0, %v604
        %v606 = vpop.f32.mrb[0].mxu0
        %v607 = vpop.f32.mrb[0].mxu0
        %v608 = vadd.f32 0.0, %v607
        %v609 = vpop.f32.mrb[0].mxu0
        %610 = vmatprep.mubr.bf16.mxu0 0
        %611 = vmatmul.mubr.bf16.gmra.mrb[0].mxu0 %v463
        %v612 = vpop.f32.mrb[0].mxu0
        %v613 = vadd.f32 0.0, %v612
        %v614 = vpop.f32.mrb[0].mxu0
        %v615 = vpop.f32.mrb[0].mxu0
        %v616 = vadd.f32 0.0, %v615
        %v617 = vpop.f32.mrb[0].mxu0
        %618 = vmatprep.mubr.bf16.mxu0 0
        %619 = vmatmul.mubr.bf16.gmra.mrb[0].mxu0 %v464
        %v620 = vpop.f32.mrb[0].mxu0
        %v621 = vadd.f32 0.0, %v620
        %v622 = vpop.f32.mrb[0].mxu0
        %v623 = vpop.f32.mrb[0].mxu0
        %v624 = vadd.f32 0.0, %v623
        %v625 = vpop.f32.mrb[0].mxu0
        %626 = vmatprep.mubr.bf16.mxu0 0
        %627 = vmatmul.mubr.bf16.gmra.mrb[0].mxu0 %v465
        %v628 = vpop.f32.mrb[0].mxu0
        %v629 = vadd.f32 0.0, %v628
        %v630 = vpop.f32.mrb[0].mxu0
        %v631 = vpop.f32.mrb[0].mxu0
        %v632 = vadd.f32 0.0, %v631
        %v633 = vpop.f32.mrb[0].mxu0
        %634 = vmatprep.mubr.bf16.mxu0 0
        %635 = vmatmul.mubr.bf16.gmra.mrb[0].mxu0 %v466
        %v636 = vpop.f32.mrb[0].mxu0
        %v637 = vadd.f32 0.0, %v636
        %v638 = vpop.f32.mrb[0].mxu0
        %v639 = vpop.f32.mrb[0].mxu0
        %v640 = vadd.f32 0.0, %v639
        %v641 = vpop.f32.mrb[0].mxu0
        %642 = vmatprep.mubr.bf16.mxu0 0
        %643 = vmatmul.mubr.bf16.gmra.mrb[0].mxu0 %v467
        %v644 = vpop.f32.mrb[0].mxu0
        %v645 = vadd.f32 0.0, %v644
        %v646 = vpop.f32.mrb[0].mxu0
        %v647 = vpop.f32.mrb[0].mxu0
        %v648 = vadd.f32 0.0, %v647
        %v649 = vpop.f32.mrb[0].mxu0
        %650 = vmatprep.mubr.bf16.mxu0 0
        %651 = vmatmul.mubr.bf16.gmra.mrb[0].mxu0 %v468
        %v652 = vpop.f32.mrb[0].mxu0
        %v653 = vadd.f32 0.0, %v652
        %v654 = vpop.f32.mrb[0].mxu0
        %v655 = vpop.f32.mrb[0].mxu0
        %v656 = vadd.f32 0.0, %v655
        %v657 = vpop.f32.mrb[0].mxu0
        %658 = vmatprep.mubr.bf16.mxu0 0
        %659 = vmatmul.mubr.bf16.gmra.mrb[0].mxu0 %v469
        %v660 = vpop.f32.mrb[0].mxu0
        %v661 = vadd.f32 0.0, %v660
        %v662 = vpop.f32.mrb[0].mxu0
        %v663 = vpop.f32.mrb[0].mxu0
        %v664 = vadd.f32 0.0, %v663
        %v665 = vpop.f32.mrb[0].mxu0
        %666 = vmatprep.mubr.bf16.mxu0 0
        %667 = vmatmul.mubr.bf16.gmra.mrb[0].mxu0 %v470
        %v668 = vpop.f32.mrb[0].mxu0
        %v669 = vadd.f32 0.0, %v668
        %v670 = vpop.f32.mrb[0].mxu0
        %v671 = vpop.f32.mrb[0].mxu0
        %v672 = vadd.f32 0.0, %v671
        %v673 = vpop.f32.mrb[0].mxu0
        %674 = vmatprep.mubr.bf16.mxu0 0
        %675 = vmatmul.mubr.bf16.gmra.mrb[0].mxu0 %v471
        %v676 = vpop.f32.mrb[0].mxu0
        %v677 = vadd.f32 0.0, %v676
        %v678 = vpop.f32.mrb[0].mxu0
        %v679 = vpop.f32.mrb[0].mxu0
        %v680 = vadd.f32 0.0, %v679
        %v681 = vpop.f32.mrb[0].mxu0
        %682 = vmatprep.mubr.bf16.mxu0 0
        %683 = vmatmul.mubr.bf16.gmra.mrb[0].mxu0 %v472
        %v684 = vpop.f32.mrb[0].mxu0
        %v685 = vadd.f32 0.0, %v684
        %v686 = vpop.f32.mrb[0].mxu0
        %v687 = vpop.f32.mrb[0].mxu0
        %v688 = vadd.f32 0.0, %v687
        %v689 = vpop.f32.mrb[0].mxu0
        %690 = vmatprep.mubr.bf16.mxu0 0
        %691 = vmatmul.mubr.bf16.gmra.mrb[0].mxu0 %v473
        %v692 = vpop.f32.mrb[0].mxu0
        %v693 = vadd.f32 0.0, %v692
        %v694 = vpop.f32.mrb[0].mxu0
        %v695 = vpop.f32.mrb[0].mxu0
        %v696 = vadd.f32 0.0, %v695
        %v697 = vpop.f32.mrb[0].mxu0
        %698 = vdwg.mxu0
        %v699 = vadd.f32 %v362, %v573
        %v700 = vadd.f32 %v363, %v576
        %v701 = vadd.f32 %v364, %v581
        %v702 = vadd.f32 %v365, %v584
        %v703 = vadd.f32 %v366, %v589
        %v704 = vadd.f32 %v367, %v592
        %v705 = vadd.f32 %v368, %v597
        %v706 = vadd.f32 %v369, %v600
        %v707 = vadd.f32 %v370, %v605
        %v708 = vadd.f32 %v371, %v608
        %v709 = vadd.f32 %v372, %v613
        %v710 = vadd.f32 %v373, %v616
        %v711 = vadd.f32 %v374, %v621
        %v712 = vadd.f32 %v375, %v624
        %v713 = vadd.f32 %v376, %v629
        %v714 = vadd.f32 %v377, %v632
        %v715 = vadd.f32 %v378, %v637
        %v716 = vadd.f32 %v379, %v640
        %v717 = vadd.f32 %v380, %v645
        %v718 = vadd.f32 %v381, %v648
        %v719 = vadd.f32 %v382, %v653
        %v720 = vadd.f32 %v383, %v656
        %v721 = vadd.f32 %v384, %v661
        %v722 = vadd.f32 %v385, %v664
        %v723 = vadd.f32 %v386, %v669
        %v724 = vadd.f32 %v387, %v672
        %v725 = vadd.f32 %v388, %v677
        %v726 = vadd.f32 %v389, %v680
        %v727 = vadd.f32 %v390, %v685
        %v728 = vadd.f32 %v391, %v688
        %v729 = vadd.f32 %v392, %v693
        %v730 = vadd.f32 %v393, %v696
        %731 = vst [vmem:[%s259] sm:$0xff] %v699
        %732 = vst [vmem:[%s259 + $0x8] sm:$0xff] %v700
        %733 = vst [vmem:[%s259 + $0x10] sm:$0xff] %v701
        %734 = vst [vmem:[%s259 + $0x18] sm:$0xff] %v702
        %735 = vst [vmem:[%s259 + $0x20] sm:$0xff] %v703
        %736 = vst [vmem:[%s259 + $0x28] sm:$0xff] %v704
        %737 = vst [vmem:[%s259 + $0x30] sm:$0xff] %v705
        %738 = vst [vmem:[%s259 + $0x38] sm:$0xff] %v706
        %739 = vst [vmem:[%s259 + $0x40] sm:$0xff] %v707
        %740 = vst [vmem:[%s259 + $0x48] sm:$0xff] %v708
        %741 = vst [vmem:[%s259 + $0x50] sm:$0xff] %v709
        %742 = vst [vmem:[%s259 + $0x58] sm:$0xff] %v710
        %743 = vst [vmem:[%s259 + $0x60] sm:$0xff] %v711
        %744 = vst [vmem:[%s259 + $0x68] sm:$0xff] %v712
        %745 = vst [vmem:[%s259 + $0x70] sm:$0xff] %v713
        %746 = vst [vmem:[%s259 + $0x78] sm:$0xff] %v714
        %747 = vst [vmem:[%s259 + $0x80] sm:$0xff] %v715
        %748 = vst [vmem:[%s259 + $0x88] sm:$0xff] %v716
        %749 = vst [vmem:[%s259 + $0x90] sm:$0xff] %v717
        %750 = vst [vmem:[%s259 + $0x98] sm:$0xff] %v718
        %751 = vst [vmem:[%s259 + $0xa0] sm:$0xff] %v719
        %752 = vst [vmem:[%s259 + $0xa8] sm:$0xff] %v720
        %753 = vst [vmem:[%s259 + $0xb0] sm:$0xff] %v721
        %754 = vst [vmem:[%s259 + $0xb8] sm:$0xff] %v722
        %755 = vst [vmem:[%s259 + $0xc0] sm:$0xff] %v723
        %756 = vst [vmem:[%s259 + $0xc8] sm:$0xff] %v724
        %757 = vst [vmem:[%s259 + $0xd0] sm:$0xff] %v725
        %758 = vst [vmem:[%s259 + $0xd8] sm:$0xff] %v726
        %759 = vst [vmem:[%s259 + $0xe0] sm:$0xff] %v727
        %760 = vst [vmem:[%s259 + $0xe8] sm:$0xff] %v728
        %761 = vst [vmem:[%s259 + $0xf0] sm:$0xff] %v729
        %762 = vst [vmem:[%s259 + $0xf8] sm:$0xff] %v730
        %s763 = sld [smem:[#allocation7 + %s270]]
        %p764 = scmp.eq.s32.totalorder %s763, 1
        // Predicated region
        $region33: #{lgn_forward.4} parent=27 // pred_check
          %p765 = pneg %p764
        $region34: #{lgn_forward.4} parent=27 // pred_check_branch
          %767 = sbr.rel (%p765) target = $region36
        $region35: #{lgn_forward.4} parent=27 // pred_region
          %v768 = vld [vmem:[%s259] sm:$0xff]
          %v769 = vld [vmem:[%s259 + $0x8] sm:$0xff]
          %v770 = vld [vmem:[%s259 + $0x10] sm:$0xff]
          %v771 = vld [vmem:[%s259 + $0x18] sm:$0xff]
          %v772 = vld [vmem:[%s259 + $0x20] sm:$0xff]
          %v773 = vld [vmem:[%s259 + $0x28] sm:$0xff]
          %v774 = vld [vmem:[%s259 + $0x30] sm:$0xff]
          %v775 = vld [vmem:[%s259 + $0x38] sm:$0xff]
          %v776 = vld [vmem:[%s259 + $0x40] sm:$0xff]
          %v777 = vld [vmem:[%s259 + $0x48] sm:$0xff]
          %v778 = vld [vmem:[%s259 + $0x50] sm:$0xff]
          %v779 = vld [vmem:[%s259 + $0x58] sm:$0xff]
          %v780 = vld [vmem:[%s259 + $0x60] sm:$0xff]
          %v781 = vld [vmem:[%s259 + $0x68] sm:$0xff]
          %v782 = vld [vmem:[%s259 + $0x70] sm:$0xff]
          %v783 = vld [vmem:[%s259 + $0x78] sm:$0xff]
          %v784 = vld [vmem:[%s259 + $0x80] sm:$0xff]
          %v785 = vld [vmem:[%s259 + $0x88] sm:$0xff]
          %v786 = vld [vmem:[%s259 + $0x90] sm:$0xff]
          %v787 = vld [vmem:[%s259 + $0x98] sm:$0xff]
          %v788 = vld [vmem:[%s259 + $0xa0] sm:$0xff]
          %v789 = vld [vmem:[%s259 + $0xa8] sm:$0xff]
          %v790 = vld [vmem:[%s259 + $0xb0] sm:$0xff]
          %v791 = vld [vmem:[%s259 + $0xb8] sm:$0xff]
          %v792 = vld [vmem:[%s259 + $0xc0] sm:$0xff]
          %v793 = vld [vmem:[%s259 + $0xc8] sm:$0xff]
          %v794 = vld [vmem:[%s259 + $0xd0] sm:$0xff]
          %v795 = vld [vmem:[%s259 + $0xd8] sm:$0xff]
          %v796 = vld [vmem:[%s259 + $0xe0] sm:$0xff]
          %v797 = vld [vmem:[%s259 + $0xe8] sm:$0xff]
          %v798 = vld [vmem:[%s259 + $0xf0] sm:$0xff]
          %v799 = vld [vmem:[%s259 + $0xf8] sm:$0xff]
          %v800 = vpack.c.bf16 %v769, %v768
          %v801 = vpack.c.bf16 %v771, %v770
          %v802 = vpack.c.bf16 %v773, %v772
          %v803 = vpack.c.bf16 %v775, %v774
          %v804 = vpack.c.bf16 %v777, %v776
          %v805 = vpack.c.bf16 %v779, %v778
          %v806 = vpack.c.bf16 %v781, %v780
          %v807 = vpack.c.bf16 %v783, %v782
          %v808 = vpack.c.bf16 %v785, %v784
          %v809 = vpack.c.bf16 %v787, %v786
          %v810 = vpack.c.bf16 %v789, %v788
          %v811 = vpack.c.bf16 %v791, %v790
          %v812 = vpack.c.bf16 %v793, %v792
          %v813 = vpack.c.bf16 %v795, %v794
          %v814 = vpack.c.bf16 %v797, %v796
          %v815 = vpack.c.bf16 %v799, %v798
          %v832 = vunpack.c.l.b16 %v800
          %v833 = vunpack.c.h.b16 %v800
          %v834 = vunpack.c.l.b16 %v801
          %v835 = vunpack.c.h.b16 %v801
          %v836 = vunpack.c.l.b16 %v802
          %v837 = vunpack.c.h.b16 %v802
          %v838 = vunpack.c.l.b16 %v803
          %v839 = vunpack.c.h.b16 %v803
          %v840 = vunpack.c.l.b16 %v804
          %v841 = vunpack.c.h.b16 %v804
          %v842 = vunpack.c.l.b16 %v805
          %v843 = vunpack.c.h.b16 %v805
          %v844 = vunpack.c.l.b16 %v806
          %v845 = vunpack.c.h.b16 %v806
          %v846 = vunpack.c.l.b16 %v807
          %v847 = vunpack.c.h.b16 %v807
          %v848 = vunpack.c.l.b16 %v808
          %v849 = vunpack.c.h.b16 %v808
          %v850 = vunpack.c.l.b16 %v809
          %v851 = vunpack.c.h.b16 %v809
          %v852 = vunpack.c.l.b16 %v810
          %v853 = vunpack.c.h.b16 %v810
          %v854 = vunpack.c.l.b16 %v811
          %v855 = vunpack.c.h.b16 %v811
          %v856 = vunpack.c.l.b16 %v812
          %v857 = vunpack.c.h.b16 %v812
          %v858 = vunpack.c.l.b16 %v813
          %v859 = vunpack.c.h.b16 %v813
          %v860 = vunpack.c.l.b16 %v814
          %v861 = vunpack.c.h.b16 %v814
          %v862 = vunpack.c.l.b16 %v815
          %v863 = vunpack.c.h.b16 %v815
          %v864 = vpack.c.b16 %v832, %v832
          %v865 = vpack.c.b16 %v833, %v833
          %v866 = vpack.c.b16 %v834, %v834
          %v867 = vpack.c.b16 %v835, %v835
          %v868 = vpack.c.b16 %v836, %v836
          %v869 = vpack.c.b16 %v837, %v837
          %v870 = vpack.c.b16 %v838, %v838
          %v871 = vpack.c.b16 %v839, %v839
          %v872 = vpack.c.b16 %v840, %v840
          %v873 = vpack.c.b16 %v841, %v841
          %v874 = vpack.c.b16 %v842, %v842
          %v875 = vpack.c.b16 %v843, %v843
          %v876 = vpack.c.b16 %v844, %v844
          %v877 = vpack.c.b16 %v845, %v845
          %v878 = vpack.c.b16 %v846, %v846
          %v879 = vpack.c.b16 %v847, %v847
          %v880 = vpack.c.b16 %v848, %v848
          %v881 = vpack.c.b16 %v849, %v849
          %v882 = vpack.c.b16 %v850, %v850
          %v883 = vpack.c.b16 %v851, %v851
          %v884 = vpack.c.b16 %v852, %v852
          %v885 = vpack.c.b16 %v853, %v853
          %v886 = vpack.c.b16 %v854, %v854
          %v887 = vpack.c.b16 %v855, %v855
          %v888 = vpack.c.b16 %v856, %v856
          %v889 = vpack.c.b16 %v857, %v857
          %v890 = vpack.c.b16 %v858, %v858
          %v891 = vpack.c.b16 %v859, %v859
          %v892 = vpack.c.b16 %v860, %v860
          %v893 = vpack.c.b16 %v861, %v861
          %v894 = vpack.c.b16 %v862, %v862
          %v895 = vpack.c.b16 %v863, %v863
          %928 = vst [vmem:[%s240] sm:$0xf] %v864
          %929 = vst [vmem:[%s240 + $0x4] sm:$0xf] %v865
          %930 = vst [vmem:[%s240 + $0x8] sm:$0xf] %v866
          %931 = vst [vmem:[%s240 + $0xc] sm:$0xf] %v867
          %932 = vst [vmem:[%s240 + $0x10] sm:$0xf] %v868
          %933 = vst [vmem:[%s240 + $0x14] sm:$0xf] %v869
          %934 = vst [vmem:[%s240 + $0x18] sm:$0xf] %v870
          %935 = vst [vmem:[%s240 + $0x1c] sm:$0xf] %v871
          %936 = vst [vmem:[%s240 + $0x20] sm:$0xf] %v872
          %937 = vst [vmem:[%s240 + $0x24] sm:$0xf] %v873
          %938 = vst [vmem:[%s240 + $0x28] sm:$0xf] %v874
          %939 = vst [vmem:[%s240 + $0x2c] sm:$0xf] %v875
          %940 = vst [vmem:[%s240 + $0x30] sm:$0xf] %v876
          %941 = vst [vmem:[%s240 + $0x34] sm:$0xf] %v877
          %942 = vst [vmem:[%s240 + $0x38] sm:$0xf] %v878
          %943 = vst [vmem:[%s240 + $0x3c] sm:$0xf] %v879
          %944 = vst [vmem:[%s240 + $0x40] sm:$0xf] %v880
          %945 = vst [vmem:[%s240 + $0x44] sm:$0xf] %v881
          %946 = vst [vmem:[%s240 + $0x48] sm:$0xf] %v882
          %947 = vst [vmem:[%s240 + $0x4c] sm:$0xf] %v883
          %948 = vst [vmem:[%s240 + $0x50] sm:$0xf] %v884
          %949 = vst [vmem:[%s240 + $0x54] sm:$0xf] %v885
          %950 = vst [vmem:[%s240 + $0x58] sm:$0xf] %v886
          %951 = vst [vmem:[%s240 + $0x5c] sm:$0xf] %v887
          %952 = vst [vmem:[%s240 + $0x60] sm:$0xf] %v888
          %953 = vst [vmem:[%s240 + $0x64] sm:$0xf] %v889
          %954 = vst [vmem:[%s240 + $0x68] sm:$0xf] %v890
          %955 = vst [vmem:[%s240 + $0x6c] sm:$0xf] %v891
          %956 = vst [vmem:[%s240 + $0x70] sm:$0xf] %v892
          %957 = vst [vmem:[%s240 + $0x74] sm:$0xf] %v893
          %958 = vst [vmem:[%s240 + $0x78] sm:$0xf] %v894
          %959 = vst [vmem:[%s240 + $0x7c] sm:$0xf] %v895
        $region36: #{lgn_forward.4} parent=27 // pred_fallthru
          _
        %s960 = smul.u32 %s49, 3
        %s961 = sadd.s32 %s960, %s50
        %s962 = sld [smem:[#allocation4 + %s961]]
        %s963 = smul.u32 32, %s962
        %p964 = scmp.lt.s32.totalorder %s963, 63
        %s965 = scalar_select %p964, %s963, 63
        %s966 = smul.addr %s965, 8
        %s967 = scalar_lea.vmem %s7, %s966
        %s968 = sand.u32 %s156, 1
        %s969 = scalar_lea.sflag [#allocation9], %s968
        %s970 = sand.u32 %s156, 1
        %s971 = smul.addr %s970, 128
        %s972 = scalar_lea.vmem [#allocation8], %s971
        // Predicated region
        $region37: #{lgn_forward.4} parent=27 // pred_check
          %p973 = pneg %p134
        $region38: #{lgn_forward.4} parent=27 // pred_check_branch
          %975 = sbr.rel (%p973) target = $region40
        $region39: #{lgn_forward.4} parent=27 // pred_region
          %s976 = smul.u32 %s49, 3
          %s977 = sadd.s32 %s976, %s50
          %s978 = sld [smem:[#allocation4 + %s977]]
          %s979 = smul.u32 32, %s978
        $region40: #{lgn_forward.4} parent=27 // pred_fallthru
          _
        // Predicated region
        $region41: #{lgn_forward.4} parent=27 // pred_check
          %p980 = pneg %p166
        $region42: #{lgn_forward.4} parent=27 // pred_check_branch
          %982 = sbr.rel (%p980) target = $region44
        $region43: #{lgn_forward.4} parent=27 // pred_region
          %s983 = smul.u32 %s49, 3
          %s984 = sadd.s32 %s983, %s50
          %s985 = sld [smem:[#allocation4 + %s984]]
          %s986 = smul.u32 32, %s985
          %s988 = ssub.s32 2048, 2048
          %989 = vsyncadd %s969, %s988
          %s990 = smul.addr %s986, 64
          %s991 = scalar_lea.hbm %s8, %s990
          %s992 = sshll.u32 %s972, 4
          %s993 = int_to_ptr.vmem [resolvable:$true] %s992
          %998 = dma.vmem_to_hbm [thread:$0]  %s993, 2048, %s991, %s969, 64, 64, 4
        $region44: #{lgn_forward.4} parent=27 // pred_fallthru
          _
      $region28: #{lgn_forward.4} parent=5 // pred_fallthru
        _
      %p999 = scmp.le.s32.totalorder 2, %s40
      // Predicated region
      $region45: #{lgn_forward.4} parent=5 // pred_check
        %p1000 = pneg %p999
      $region46: #{lgn_forward.4} parent=5 // pred_check_branch
        %1002 = sbr.rel (%p1000) target = $region48
      $region47: #{lgn_forward.4} parent=5 // pred_region
        %s1003 = ssub.s32 %s40, 2
        // Predicated region
        $region49: #{lgn_forward.4} parent=47 // pred_check
          %p1004 = pneg %p140
        $region50: #{lgn_forward.4} parent=47 // pred_check_branch
          %1006 = sbr.rel (%p1004) target = $region52
        $region51: #{lgn_forward.4} parent=47 // pred_region
          %s1007 = smul.u32 %s51, 3
          %s1008 = sadd.s32 %s1007, %s52
          %s1009 = sld [smem:[#allocation4 + %s1008]]
          %s1010 = smul.u32 32, %s1009
          %p1011 = scmp.lt.s32.totalorder %s1010, 63
          %s1012 = scalar_select %p1011, %s1010, 63
          %s1013 = smul.addr %s1012, 8
          %s1014 = scalar_lea.vmem %s7, %s1013
        $region52: #{lgn_forward.4} parent=47 // pred_fallthru
          _
        // Predicated region
        $region53: #{lgn_forward.4} parent=47 // pred_check
          %p1015 = pneg %p172
        $region54: #{lgn_forward.4} parent=47 // pred_check_branch
          %1017 = sbr.rel (%p1015) target = $region56
        $region55: #{lgn_forward.4} parent=47 // pred_region
          %s1018 = sand.u32 %s157, 1
          %s1019 = scalar_lea.sflag [#allocation9], %s1018
          %s1020 = sand.u32 %s157, 1
          %s1021 = smul.addr %s1020, 128
          %s1022 = scalar_lea.vmem [#allocation8], %s1021
          %1023 = dma.done %s1019, 2048
        $region56: #{lgn_forward.4} parent=47 // pred_fallthru
          _
      $region48: #{lgn_forward.4} parent=5 // pred_fallthru
        _
    $region6: #{lgn_forward.4} parent=1 // loop_footer
      %s44 = sadd.s32 1, %s40
    $region7: #{lgn_forward.4} parent=1 // loop_footer_branch
      %39 = sbr.rel target = $region3
    $region8: #{lgn_forward.4} parent=1 // loop_exit
      _
    %1024 = vsyncpa [#allocation9], 1
    %s1025 = scalar_lea.sflag [#allocation9], 1
    %1026 = vsyncpa %s1025, 1

// kernel: lgn_forward.3
$region0: #{lgn_forward.3}
  #allocation0 [shape = 'u32[]', space=smem, size = 0x4, offset = 0x4, fixed_abs, tag = 'smem constant byte address 0x4 - core index']
  #allocation1 [shape = 'u32[144,128]{1,0:T(1,128)}', space=vmem, size = 0x12000, scoped, tag = 'internal scratch']
  #allocation2 [shape = 's32[1]{0}', space=sflag, size = 0x4, scoped, tag = 'scoped memory for lgn_forward.3']
  #allocation3 [shape = 'u8[512]{0}', space=smem, size = 0x200, scoped, tag = 'prefetched SMEM operand 0']
  #allocation4 [shape = 'u8[512]{0}', space=smem, size = 0x200, scoped, tag = 'prefetched SMEM operand 1']
  #allocation5 [shape = 'u8[512]{0}', space=smem, size = 0x200, scoped, tag = 'prefetched SMEM operand 2']
  #allocation6 [shape = 'u8[512]{0}', space=smem, size = 0x200, scoped, tag = 'prefetched SMEM operand 3']
  #allocation7 [shape = 'u8[512]{0}', space=smem, size = 0x200, scoped, tag = 'prefetched SMEM operand 4']
  %s0 = inlined_call_operand.vmem [shape: s32[6], index: 0, kind: input, shape index: {}]
  %s1 = inlined_call_operand.vmem [shape: s32[6], index: 1, kind: input, shape index: {}]
  %s2 = inlined_call_operand.vmem [shape: s32[6], index: 2, kind: input, shape index: {}]
  %s3 = inlined_call_operand.vmem [shape: s32[6], index: 3, kind: input, shape index: {}]
  %s4 = inlined_call_operand.vmem [shape: s32[6], index: 4, kind: input, shape index: {}]
  %s5 = inlined_call_operand.vmem [shape: bf16[6,256,128], index: 5, kind: input, shape index: {}]
  %s6 = inlined_call_operand.vmem [shape: bf16[512,128], index: 6, kind: input, shape index: {}]
  %s7 = inlined_call_operand.vmem [shape: f32[512,128], index: 7, kind: output, shape index: {0}]
  %s8 = inlined_call_operand.vmem [shape: bf16[512,128], index: 8, kind: output, shape index: {1}]
  %9 = xla_tuple %s7, %s8
  %s10 = sld [smem:[#allocation0]]
  $region57: #{lgn_forward.3} parent=0
    _
  %s12 = ssub.s32 1, %s10
  %s13 = scalar_select 0, %s12, %s10
  %s14 = sshll.u32 %s0, 4
  %s15 = int_to_ptr.vmem [resolvable:$true] %s14
  %17 = dma.vmem_to_smem %s15, 16, [#allocation3], [#allocation2]
  %s18 = sshll.u32 %s1, 4
  %s19 = int_to_ptr.vmem [resolvable:$true] %s18
  %21 = dma.vmem_to_smem %s19, 16, [#allocation4], [#allocation2]
  %s22 = sshll.u32 %s2, 4
  %s23 = int_to_ptr.vmem [resolvable:$true] %s22
  %25 = dma.vmem_to_smem %s23, 16, [#allocation5], [#allocation2]
  %s26 = sshll.u32 %s3, 4
  %s27 = int_to_ptr.vmem [resolvable:$true] %s26
  %29 = dma.vmem_to_smem %s27, 16, [#allocation6], [#allocation2]
  %s30 = sshll.u32 %s4, 4
  %s31 = int_to_ptr.vmem [resolvable:$true] %s30
  %33 = dma.vmem_to_smem %s31, 16, [#allocation7], [#allocation2]
  %34 = dma.done [#allocation2], 80
  %35 = sfence
  loop: start=0, step=1, limit=8
  $region2: #{lgn_forward.3} parent=0 // loop_pre_header
    _
  $region3: #{lgn_forward.3} parent=0 // loop_header
    %s37 = sphi 0, %s41
    %p38 = scmp.ge.s32.totalorder %s37, 8
    %s44 = sphi 0, %s56
    %s45 = sphi 0, %s52
    %s46 = sphi 0, %s44
    %s47 = sphi 0, %s45
    %s48 = sphi 0, %s46
    %s49 = sphi 0, %s47
    %s65 = sphi 0, %s67
    %s68 = sphi 0, %s65
    %s69 = sphi 0, %s68
    %s85 = sphi 0, %s69
    %s89 = sphi 0, %s89
    %s91 = sphi 0, %s89
    %s92 = sphi 0, %s91
    %s106 = sphi 0, %s92
    %s118 = sphi 0, %s120
    %s121 = sphi 0, %s118
    %s122 = sphi 0, %s121
    %s138 = sphi 0, %s122
    %s150 = sphi 0, %s152
    %s153 = sphi 0, %s150
    %s154 = sphi 0, %s153
    %s170 = sphi 0, %s154
  $region4: #{lgn_forward.3} parent=0 // loop_header_branch
    %40 = sbr.rel (%p38) target = $region8
  $region5: #{lgn_forward.3} parent=0 // loop_body
    %s42 = ssub.s32 %s37, 1
    %s43 = ssub.s32 %s37, 2
    %s50 = sadd.s32 1, %s45
    %p51 = scmp.ge.s32.totalorder %s50, 3
    %s52 = scalar_select %p51, 0, %s50
    %s53 = sadd.s32 1, %s44
    %s54 = scalar_select %p51, %s53, %s44
    %p55 = scmp.ge.s32.totalorder %s54, 2
    %s56 = scalar_select %p55, 0, %s54
    %s57 = smul.u32 %s44, 3
    %s58 = sadd.s32 %s57, %s45
    %s59 = sld [smem:[#allocation3 + %s58]]
    %s60 = smul.u32 %s56, 3
    %s61 = sadd.s32 %s60, %s52
    %s62 = sld [smem:[#allocation3 + %s61]]
    %s63 = ssub.s32 %s59, %s62
    %p64 = scmp.eq.s32.totalorder %s63, 0
    %s66 = sadd.s32 %s65, 1
    %s67 = scalar_select %p64, %s65, %s66
    %p70 = pneg %p64
    %p71 = scmp.eq.s32.totalorder %s37, 5
    %p72 = por %p70, %p71
    %p73 = scmp.ne.s32.totalorder %s65, %s68
    %p74 = scmp.eq.s32.totalorder %s37, 0
    %p75 = por %p73, %p74
    %p76 = scmp.ne.s32.totalorder %s65, %s68
    %p77 = scmp.eq.s32.totalorder %s42, 5
    %p78 = por %p76, %p77
    %p79 = scmp.ne.s32.totalorder %s68, %s69
    %p80 = scmp.eq.s32.totalorder %s42, 0
    %p81 = por %p79, %p80
    %p82 = scmp.ne.s32.totalorder %s68, %s69
    %p83 = scmp.eq.s32.totalorder %s43, 5
    %p84 = por %p82, %p83
    %p86 = scmp.ne.s32.totalorder %s69, %s85
    %p87 = scmp.eq.s32.totalorder %s43, 0
    %p88 = por %p86, %p87
    %s90 = sadd.s32 %s89, 1
    %p93 = scmp.eq.s32.totalorder %s37, 5
    %p94 = scmp.ne.s32.totalorder %s89, %s91
    %p95 = scmp.eq.s32.totalorder %s37, 0
    %p96 = por %p94, %p95
    %p97 = scmp.ne.s32.totalorder %s89, %s91
    %p98 = scmp.eq.s32.totalorder %s42, 5
    %p99 = por %p97, %p98
    %p100 = scmp.ne.s32.totalorder %s91, %s92
    %p101 = scmp.eq.s32.totalorder %s42, 0
    %p102 = por %p100, %p101
    %p103 = scmp.ne.s32.totalorder %s91, %s92
    %p104 = scmp.eq.s32.totalorder %s43, 5
    %p105 = por %p103, %p104
    %p107 = scmp.ne.s32.totalorder %s92, %s106
    %p108 = scmp.eq.s32.totalorder %s43, 0
    %p109 = por %p107, %p108
    %s110 = smul.u32 %s44, 3
    %s111 = sadd.s32 %s110, %s45
    %s112 = sld [smem:[#allocation4 + %s111]]
    %s113 = smul.u32 %s56, 3
    %s114 = sadd.s32 %s113, %s52
    %s115 = sld [smem:[#allocation4 + %s114]]
    %s116 = ssub.s32 %s112, %s115
    %p117 = scmp.eq.s32.totalorder %s116, 0
    %s119 = sadd.s32 %s118, 1
    %s120 = scalar_select %p117, %s118, %s119
    %p123 = pneg %p117
    %p124 = scmp.eq.s32.totalorder %s37, 5
    %p125 = por %p123, %p124
    %p126 = scmp.ne.s32.totalorder %s118, %s121
    %p127 = scmp.eq.s32.totalorder %s37, 0
    %p128 = por %p126, %p127
    %p129 = scmp.ne.s32.totalorder %s118, %s121
    %p130 = scmp.eq.s32.totalorder %s42, 5
    %p131 = por %p129, %p130
    %p132 = scmp.ne.s32.totalorder %s121, %s122
    %p133 = scmp.eq.s32.totalorder %s42, 0
    %p134 = por %p132, %p133
    %p135 = scmp.ne.s32.totalorder %s121, %s122
    %p136 = scmp.eq.s32.totalorder %s43, 5
    %p137 = por %p135, %p136
    %p139 = scmp.ne.s32.totalorder %s122, %s138
    %p140 = scmp.eq.s32.totalorder %s43, 0
    %p141 = por %p139, %p140
    %s142 = smul.u32 %s44, 3
    %s143 = sadd.s32 %s142, %s45
    %s144 = sld [smem:[#allocation4 + %s143]]
    %s145 = smul.u32 %s56, 3
    %s146 = sadd.s32 %s145, %s52
    %s147 = sld [smem:[#allocation4 + %s146]]
    %s148 = ssub.s32 %s144, %s147
    %p149 = scmp.eq.s32.totalorder %s148, 0
    %s151 = sadd.s32 %s150, 1
    %s152 = scalar_select %p149, %s150, %s151
    %p155 = pneg %p149
    %p156 = scmp.eq.s32.totalorder %s37, 5
    %p157 = por %p155, %p156
    %p158 = scmp.ne.s32.totalorder %s150, %s153
    %p159 = scmp.eq.s32.totalorder %s37, 0
    %p160 = por %p158, %p159
    %p161 = scmp.ne.s32.totalorder %s150, %s153
    %p162 = scmp.eq.s32.totalorder %s42, 5
    %p163 = por %p161, %p162
    %p164 = scmp.ne.s32.totalorder %s153, %s154
    %p165 = scmp.eq.s32.totalorder %s42, 0
    %p166 = por %p164, %p165
    %p167 = scmp.ne.s32.totalorder %s153, %s154
    %p168 = scmp.eq.s32.totalorder %s43, 5
    %p169 = por %p167, %p168
    %p171 = scmp.ne.s32.totalorder %s154, %s170
    %p172 = scmp.eq.s32.totalorder %s43, 0
    %p173 = por %p171, %p172
    %p174 = scmp.le.s32.totalorder 1, %s37
    %p175 = scmp.lt.s32.totalorder %s37, 7
    %p176 = pnand %p174, %p175
    %p177 = pneg %p176
    // Predicated region
    $region9: #{lgn_forward.3} parent=5 // pred_check
      _
    $region10: #{lgn_forward.3} parent=5 // pred_check_branch
      %179 = sbr.rel (%p176) target = $region12
    $region11: #{lgn_forward.3} parent=5 // pred_region
      %s180 = ssub.s32 %s37, 1
      // Predicated region
      $region13: #{lgn_forward.3} parent=11 // pred_check
        %p181 = pneg %p102
      $region14: #{lgn_forward.3} parent=11 // pred_check_branch
        %183 = sbr.rel (%p181) target = $region16
      $region15: #{lgn_forward.3} parent=11 // pred_region
        _
      $region16: #{lgn_forward.3} parent=11 // pred_fallthru
        _
    $region12: #{lgn_forward.3} parent=5 // pred_fallthru
      _
    %p184 = scmp.lt.s32.totalorder %s37, 6
    // Predicated region
    $region17: #{lgn_forward.3} parent=5 // pred_check
      %p185 = pneg %p184
    $region18: #{lgn_forward.3} parent=5 // pred_check_branch
      %187 = sbr.rel (%p185) target = $region20
    $region19: #{lgn_forward.3} parent=5 // pred_region
      // Predicated region
      $region21: #{lgn_forward.3} parent=19 // pred_check
        %p188 = pneg %p75
      $region22: #{lgn_forward.3} parent=19 // pred_check_branch
        %190 = sbr.rel (%p188) target = $region24
      $region23: #{lgn_forward.3} parent=19 // pred_region
        %s191 = smul.u32 %s44, 3
        %s192 = sadd.s32 %s191, %s45
        %s193 = sld [smem:[#allocation3 + %s192]]
        %p194 = scmp.lt.s32.totalorder %s193, 5
        %s195 = scalar_select %p194, %s193, 5
        %s196 = smul.addr %s195, 32
        %s197 = smul.addr %s196, 4
        %s198 = scalar_lea.vmem %s5, %s197
        %s199 = smul.u32 %s44, 3
        %s200 = sadd.s32 %s199, %s45
        %s201 = sld [smem:[#allocation3 + %s200]]
      $region24: #{lgn_forward.3} parent=19 // pred_fallthru
        _
    $region20: #{lgn_forward.3} parent=5 // pred_fallthru
      _
    %p202 = scmp.le.s32.totalorder 1, %s37
    %p203 = scmp.lt.s32.totalorder %s37, 7
    %p204 = pnand %p202, %p203
    %p205 = pneg %p204
    // Predicated region
    $region25: #{lgn_forward.3} parent=5 // pred_check
      _
    $region26: #{lgn_forward.3} parent=5 // pred_check_branch
      %207 = sbr.rel (%p204) target = $region28
    $region27: #{lgn_forward.3} parent=5 // pred_region
      %s208 = ssub.s32 %s37, 1
      %s209 = smul.u32 %s46, 3
      %s210 = sadd.s32 %s209, %s47
      %s211 = sld [smem:[#allocation3 + %s210]]
      %p212 = scmp.lt.s32.totalorder %s211, 5
      %s213 = scalar_select %p212, %s211, 5
      %s214 = smul.addr %s213, 32
      %s215 = smul.addr %s214, 4
      %s216 = scalar_lea.vmem %s5, %s215
      %p217 = pneg %p81
      %p218 = pneg %p78
      %p219 = pneg %p102
      %p220 = pneg %p99
      %p221 = pneg %p134
      %p222 = pneg %p131
      %s223 = smul.u32 %s46, 3
      %s224 = sadd.s32 %s223, %s47
      %s225 = sld [smem:[#allocation4 + %s224]]
      %s226 = smul.u32 32, %s225
      %p227 = scmp.lt.s32.totalorder %s226, 63
      %s228 = scalar_select %p227, %s226, 63
      %s229 = smul.addr %s228, 8
      %s230 = scalar_lea.vmem %s7, %s229
      %p231 = pneg %p166
      %p232 = pneg %p163
      %s233 = smul.u32 %s46, 3
      %s234 = sadd.s32 %s233, %s47
      %s235 = sld [smem:[#allocation4 + %s234]]
      %s236 = smul.u32 32, %s235
      %p237 = scmp.lt.s32.totalorder %s236, 63
      %s238 = scalar_select %p237, %s236, 63
      %s239 = smul.addr %s238, 4
      %s240 = scalar_lea.vmem %s8, %s239
      %s241 = smul.u32 %s46, 3
      %s242 = sadd.s32 %s241, %s47
      %s243 = sld [smem:[#allocation3 + %s242]]
      %p244 = scmp.lt.s32.totalorder %s243, 5
      %s245 = scalar_select %p244, %s243, 5
      %s246 = smul.addr %s245, 32
      %s247 = smul.addr %s246, 4
      %s248 = scalar_lea.vmem %s5, %s247
      %s249 = smul.u32 %s46, 3
      %s250 = sadd.s32 %s249, %s47
      %s251 = sld [smem:[#allocation3 + %s250]]
      %s252 = smul.u32 %s46, 3
      %s253 = sadd.s32 %s252, %s47
      %s254 = sld [smem:[#allocation4 + %s253]]
      %s255 = smul.u32 32, %s254
      %p256 = scmp.lt.s32.totalorder %s255, 63
      %s257 = scalar_select %p256, %s255, 63
      %s258 = smul.addr %s257, 8
      %s259 = scalar_lea.vmem %s7, %s258
      %s260 = smul.u32 %s46, 3
      %s261 = sadd.s32 %s260, %s47
      %s262 = sld [smem:[#allocation4 + %s261]]
      %s263 = smul.u32 32, %s262
      %s264 = smul.u32 %s46, 3
      %s265 = sadd.s32 %s264, %s47
      %s266 = sld [smem:[#allocation4 + %s265]]
      %s267 = smul.u32 32, %s266
      %p268 = scmp.lt.s32.totalorder %s267, 63
      %s269 = scalar_select %p268, %s267, 63
      %s270 = smul.addr %s269, 4
      %s271 = scalar_lea.vmem %s8, %s270
      %s272 = smul.u32 %s46, 3
      %s273 = sadd.s32 %s272, %s47
      %s274 = sld [smem:[#allocation4 + %s273]]
      %s275 = smul.u32 32, %s274
      %s277 = smul.u32 %s46, 3
      %s278 = sadd.s32 %s277, %s47
      %s279 = sld [smem:[#allocation6 + %s278]]
      %p280 = scmp.eq.s32.totalorder %s279, 1
      // Predicated region
      $region29: #{lgn_forward.3} parent=27 // pred_check
        %p281 = pneg %p280
      $region30: #{lgn_forward.3} parent=27 // pred_check_branch
        %283 = sbr.rel (%p281) target = $region32
      $region31: #{lgn_forward.3} parent=27 // pred_region
        %284 = vst [vmem:[%s259] sm:$0xff] 0.0
        %285 = vst [vmem:[%s259 + $0x8] sm:$0xff] 0.0
        %286 = vst [vmem:[%s259 + $0x10] sm:$0xff] 0.0
        %287 = vst [vmem:[%s259 + $0x18] sm:$0xff] 0.0
        %288 = vst [vmem:[%s259 + $0x20] sm:$0xff] 0.0
        %289 = vst [vmem:[%s259 + $0x28] sm:$0xff] 0.0
        %290 = vst [vmem:[%s259 + $0x30] sm:$0xff] 0.0
        %291 = vst [vmem:[%s259 + $0x38] sm:$0xff] 0.0
        %292 = vst [vmem:[%s259 + $0x40] sm:$0xff] 0.0
        %293 = vst [vmem:[%s259 + $0x48] sm:$0xff] 0.0
        %294 = vst [vmem:[%s259 + $0x50] sm:$0xff] 0.0
        %295 = vst [vmem:[%s259 + $0x58] sm:$0xff] 0.0
        %296 = vst [vmem:[%s259 + $0x60] sm:$0xff] 0.0
        %297 = vst [vmem:[%s259 + $0x68] sm:$0xff] 0.0
        %298 = vst [vmem:[%s259 + $0x70] sm:$0xff] 0.0
        %299 = vst [vmem:[%s259 + $0x78] sm:$0xff] 0.0
        %300 = vst [vmem:[%s259 + $0x80] sm:$0xff] 0.0
        %301 = vst [vmem:[%s259 + $0x88] sm:$0xff] 0.0
        %302 = vst [vmem:[%s259 + $0x90] sm:$0xff] 0.0
        %303 = vst [vmem:[%s259 + $0x98] sm:$0xff] 0.0
        %304 = vst [vmem:[%s259 + $0xa0] sm:$0xff] 0.0
        %305 = vst [vmem:[%s259 + $0xa8] sm:$0xff] 0.0
        %306 = vst [vmem:[%s259 + $0xb0] sm:$0xff] 0.0
        %307 = vst [vmem:[%s259 + $0xb8] sm:$0xff] 0.0
        %308 = vst [vmem:[%s259 + $0xc0] sm:$0xff] 0.0
        %309 = vst [vmem:[%s259 + $0xc8] sm:$0xff] 0.0
        %310 = vst [vmem:[%s259 + $0xd0] sm:$0xff] 0.0
        %311 = vst [vmem:[%s259 + $0xd8] sm:$0xff] 0.0
        %312 = vst [vmem:[%s259 + $0xe0] sm:$0xff] 0.0
        %313 = vst [vmem:[%s259 + $0xe8] sm:$0xff] 0.0
        %314 = vst [vmem:[%s259 + $0xf0] sm:$0xff] 0.0
        %315 = vst [vmem:[%s259 + $0xf8] sm:$0xff] 0.0
      $region32: #{lgn_forward.3} parent=27 // pred_fallthru
        _
      %v316 = vld [vmem:[%s248] sm:$0xf]
      %v317 = vld [vmem:[%s248 + $0x4] sm:$0xf]
      %v318 = vld [vmem:[%s248 + $0x8] sm:$0xf]
      %v319 = vld [vmem:[%s248 + $0xc] sm:$0xf]
      %v320 = vld [vmem:[%s248 + $0x10] sm:$0xf]
      %v321 = vld [vmem:[%s248 + $0x14] sm:$0xf]
      %v322 = vld [vmem:[%s248 + $0x18] sm:$0xf]
      %v323 = vld [vmem:[%s248 + $0x1c] sm:$0xf]
      %v324 = vld [vmem:[%s248 + $0x20] sm:$0xf]
      %v325 = vld [vmem:[%s248 + $0x24] sm:$0xf]
      %v326 = vld [vmem:[%s248 + $0x28] sm:$0xf]
      %v327 = vld [vmem:[%s248 + $0x2c] sm:$0xf]
      %v328 = vld [vmem:[%s248 + $0x30] sm:$0xf]
      %v329 = vld [vmem:[%s248 + $0x34] sm:$0xf]
      %v330 = vld [vmem:[%s248 + $0x38] sm:$0xf]
      %v331 = vld [vmem:[%s248 + $0x3c] sm:$0xf]
      %v332 = vld [vmem:[%s248 + $0x40] sm:$0xf]
      %v333 = vld [vmem:[%s248 + $0x44] sm:$0xf]
      %v334 = vld [vmem:[%s248 + $0x48] sm:$0xf]
      %v335 = vld [vmem:[%s248 + $0x4c] sm:$0xf]
      %v336 = vld [vmem:[%s248 + $0x50] sm:$0xf]
      %v337 = vld [vmem:[%s248 + $0x54] sm:$0xf]
      %v338 = vld [vmem:[%s248 + $0x58] sm:$0xf]
      %v339 = vld [vmem:[%s248 + $0x5c] sm:$0xf]
      %v340 = vld [vmem:[%s248 + $0x60] sm:$0xf]
      %v341 = vld [vmem:[%s248 + $0x64] sm:$0xf]
      %v342 = vld [vmem:[%s248 + $0x68] sm:$0xf]
      %v343 = vld [vmem:[%s248 + $0x6c] sm:$0xf]
      %v344 = vld [vmem:[%s248 + $0x70] sm:$0xf]
      %v345 = vld [vmem:[%s248 + $0x74] sm:$0xf]
      %v346 = vld [vmem:[%s248 + $0x78] sm:$0xf]
      %v347 = vld [vmem:[%s248 + $0x7c] sm:$0xf]
      %s348 = sld [smem:[#allocation5 + %s278]]
      %s349 = smul.u32 %s348, 128
      %s350 = sshra.s32 %s349, 3
      %s351 = sand.u32 %s349, 7
      %s352 = smul.addr %s350, 4
      %s353 = scalar_lea.vmem %s6, %s352
      %v354 = vld [vmem:[%s353] sm:$0xf]
      %v355 = vld [vmem:[%s353 + $0x4] sm:$0xf]
      %v356 = vld [vmem:[%s353 + $0x8] sm:$0xf]
      %v357 = vld [vmem:[%s353 + $0xc] sm:$0xf]
      %v358 = vld [vmem:[%s353 + $0x10] sm:$0xf]
      %v359 = vld [vmem:[%s353 + $0x14] sm:$0xf]
      %v360 = vld [vmem:[%s353 + $0x18] sm:$0xf]
      %v361 = vld [vmem:[%s353 + $0x1c] sm:$0xf]
      %v362 = vld [vmem:[%s353 + $0x20] sm:$0xf]
      %v363 = vld [vmem:[%s353 + $0x24] sm:$0xf]
      %v364 = vld [vmem:[%s353 + $0x28] sm:$0xf]
      %v365 = vld [vmem:[%s353 + $0x2c] sm:$0xf]
      %v366 = vld [vmem:[%s353 + $0x30] sm:$0xf]
      %v367 = vld [vmem:[%s353 + $0x34] sm:$0xf]
      %v368 = vld [vmem:[%s353 + $0x38] sm:$0xf]
      %v369 = vld [vmem:[%s353 + $0x3c] sm:$0xf]
      %v370 = vld [vmem:[%s259] sm:$0xff]
      %v371 = vld [vmem:[%s259 + $0x8] sm:$0xff]
      %v372 = vld [vmem:[%s259 + $0x10] sm:$0xff]
      %v373 = vld [vmem:[%s259 + $0x18] sm:$0xff]
      %v374 = vld [vmem:[%s259 + $0x20] sm:$0xff]
      %v375 = vld [vmem:[%s259 + $0x28] sm:$0xff]
      %v376 = vld [vmem:[%s259 + $0x30] sm:$0xff]
      %v377 = vld [vmem:[%s259 + $0x38] sm:$0xff]
      %v378 = vld [vmem:[%s259 + $0x40] sm:$0xff]
      %v379 = vld [vmem:[%s259 + $0x48] sm:$0xff]
      %v380 = vld [vmem:[%s259 + $0x50] sm:$0xff]
      %v381 = vld [vmem:[%s259 + $0x58] sm:$0xff]
      %v382 = vld [vmem:[%s259 + $0x60] sm:$0xff]
      %v383 = vld [vmem:[%s259 + $0x68] sm:$0xff]
      %v384 = vld [vmem:[%s259 + $0x70] sm:$0xff]
      %v385 = vld [vmem:[%s259 + $0x78] sm:$0xff]
      %v386 = vld [vmem:[%s259 + $0x80] sm:$0xff]
      %v387 = vld [vmem:[%s259 + $0x88] sm:$0xff]
      %v388 = vld [vmem:[%s259 + $0x90] sm:$0xff]
      %v389 = vld [vmem:[%s259 + $0x98] sm:$0xff]
      %v390 = vld [vmem:[%s259 + $0xa0] sm:$0xff]
      %v391 = vld [vmem:[%s259 + $0xa8] sm:$0xff]
      %v392 = vld [vmem:[%s259 + $0xb0] sm:$0xff]
      %v393 = vld [vmem:[%s259 + $0xb8] sm:$0xff]
      %v394 = vld [vmem:[%s259 + $0xc0] sm:$0xff]
      %v395 = vld [vmem:[%s259 + $0xc8] sm:$0xff]
      %v396 = vld [vmem:[%s259 + $0xd0] sm:$0xff]
      %v397 = vld [vmem:[%s259 + $0xd8] sm:$0xff]
      %v398 = vld [vmem:[%s259 + $0xe0] sm:$0xff]
      %v399 = vld [vmem:[%s259 + $0xe8] sm:$0xff]
      %v400 = vld [vmem:[%s259 + $0xf0] sm:$0xff]
      %v401 = vld [vmem:[%s259 + $0xf8] sm:$0xff]
      %v434 = vunpack.c.l.b16 %v316
      %v435 = vunpack.c.l.b16 %v317
      %v436 = vunpack.c.l.b16 %v318
      %v437 = vunpack.c.l.b16 %v319
      %v438 = vunpack.c.l.b16 %v320
      %v439 = vunpack.c.l.b16 %v321
      %v440 = vunpack.c.l.b16 %v322
      %v441 = vunpack.c.l.b16 %v323
      %v442 = vunpack.c.l.b16 %v324
      %v443 = vunpack.c.l.b16 %v325
      %v444 = vunpack.c.l.b16 %v326
      %v445 = vunpack.c.l.b16 %v327
      %v446 = vunpack.c.l.b16 %v328
      %v447 = vunpack.c.l.b16 %v329
      %v448 = vunpack.c.l.b16 %v330
      %v449 = vunpack.c.l.b16 %v331
      %v450 = vunpack.c.l.b16 %v332
      %v451 = vunpack.c.l.b16 %v333
      %v452 = vunpack.c.l.b16 %v334
      %v453 = vunpack.c.l.b16 %v335
      %v454 = vunpack.c.l.b16 %v336
      %v455 = vunpack.c.l.b16 %v337
      %v456 = vunpack.c.l.b16 %v338
      %v457 = vunpack.c.l.b16 %v339
      %v458 = vunpack.c.l.b16 %v340
      %v459 = vunpack.c.l.b16 %v341
      %v460 = vunpack.c.l.b16 %v342
      %v461 = vunpack.c.l.b16 %v343
      %v462 = vunpack.c.l.b16 %v344
      %v463 = vunpack.c.l.b16 %v345
      %v464 = vunpack.c.l.b16 %v346
      %v465 = vunpack.c.l.b16 %v347
      %v466 = vpack.c.b16 %v435, %v434
      %v467 = vpack.c.b16 %v437, %v436
      %v468 = vpack.c.b16 %v439, %v438
      %v469 = vpack.c.b16 %v441, %v440
      %v470 = vpack.c.b16 %v443, %v442
      %v471 = vpack.c.b16 %v445, %v444
      %v472 = vpack.c.b16 %v447, %v446
      %v473 = vpack.c.b16 %v449, %v448
      %v474 = vpack.c.b16 %v451, %v450
      %v475 = vpack.c.b16 %v453, %v452
      %v476 = vpack.c.b16 %v455, %v454
      %v477 = vpack.c.b16 %v457, %v456
      %v478 = vpack.c.b16 %v459, %v458
      %v479 = vpack.c.b16 %v461, %v460
      %v480 = vpack.c.b16 %v463, %v462
      %v481 = vpack.c.b16 %v465, %v464
      %v514 = vunpack.c.l.b16 %v354
      %v515 = vunpack.c.l.b16 %v355
      %v516 = vunpack.c.l.b16 %v356
      %v517 = vunpack.c.l.b16 %v357
      %v518 = vunpack.c.l.b16 %v358
      %v519 = vunpack.c.l.b16 %v359
      %v520 = vunpack.c.l.b16 %v360
      %v521 = vunpack.c.l.b16 %v361
      %v522 = vunpack.c.l.b16 %v362
      %v523 = vunpack.c.l.b16 %v363
      %v524 = vunpack.c.l.b16 %v364
      %v525 = vunpack.c.l.b16 %v365
      %v526 = vunpack.c.l.b16 %v366
      %v527 = vunpack.c.l.b16 %v367
      %v528 = vunpack.c.l.b16 %v368
      %v529 = vunpack.c.l.b16 %v369
      %v530 = vpack.c.b16 %v515, %v514
      %v531 = vpack.c.b16 %v517, %v516
      %v532 = vpack.c.b16 %v519, %v518
      %v533 = vpack.c.b16 %v521, %v520
      %v534 = vpack.c.b16 %v523, %v522
      %v535 = vpack.c.b16 %v525, %v524
      %v536 = vpack.c.b16 %v527, %v526
      %v537 = vpack.c.b16 %v529, %v528
      %546 = vmatprep.subr.bf16.mxu0 0
      %547 = vmatpush1.bf16.msra.mxu0 %v530
      %548 = vmatprep.subr.bf16.mxu0 0
      %549 = vmatpush1.bf16.msra.mxu0 %v531
      %550 = vmatprep.subr.bf16.mxu0 0
      %551 = vmatpush1.bf16.msra.mxu0 %v532
      %552 = vmatprep.subr.bf16.mxu0 0
      %553 = vmatpush1.bf16.msra.mxu0 %v533
      %554 = vmatprep.subr.bf16.mxu0 0
      %555 = vmatpush1.bf16.msra.mxu0 %v534
      %556 = vmatprep.subr.bf16.mxu0 0
      %557 = vmatpush1.bf16.msra.mxu0 %v535
      %558 = vmatprep.subr.bf16.mxu0 0
      %559 = vmatpush1.bf16.msra.mxu0 %v536
      %560 = vmatprep.subr.bf16.mxu0 0
      %561 = vmatpush1.bf16.msra.mxu0 %v537
      %562 = vmatprep.subr.bf16.mxu0 0
      %563 = vmatpush1.bf16.msra.mxu0 0
      %564 = vmatprep.subr.bf16.mxu0 0
      %565 = vmatpush1.bf16.msra.mxu0 0
      %566 = vmatprep.subr.bf16.mxu0 0
      %567 = vmatpush1.bf16.msra.mxu0 0
      %568 = vmatprep.subr.bf16.mxu0 0
      %569 = vmatpush1.bf16.msra.mxu0 0
      %570 = vmatprep.subr.bf16.mxu0 0
      %571 = vmatpush1.bf16.msra.mxu0 0
      %572 = vmatprep.subr.bf16.mxu0 0
      %573 = vmatpush1.bf16.msra.mxu0 0
      %574 = vmatprep.subr.bf16.mxu0 0
      %575 = vmatpush1.bf16.msra.mxu0 0
      %576 = vmatprep.subr.bf16.mxu0 0
      %577 = vmatpush1.bf16.msra.mxu0 0
      %578 = vmatprep.mubr.bf16.mxu0 0
      %579 = vmatmul.mubr.bf16.gmra.mrb[0].mxu0 %v466
      %v580 = vpop.f32.mrb[0].mxu0
      %v581 = vadd.f32 0.0, %v580
      %v582 = vpop.f32.mrb[0].mxu0
      %v583 = vpop.f32.mrb[0].mxu0
      %v584 = vadd.f32 0.0, %v583
      %v585 = vpop.f32.mrb[0].mxu0
      %586 = vmatprep.mubr.bf16.mxu0 0
      %587 = vmatmul.mubr.bf16.gmra.mrb[0].mxu0 %v467
      %v588 = vpop.f32.mrb[0].mxu0
      %v589 = vadd.f32 0.0, %v588
      %v590 = vpop.f32.mrb[0].mxu0
      %v591 = vpop.f32.mrb[0].mxu0
      %v592 = vadd.f32 0.0, %v591
      %v593 = vpop.f32.mrb[0].mxu0
      %594 = vmatprep.mubr.bf16.mxu0 0
      %595 = vmatmul.mubr.bf16.gmra.mrb[0].mxu0 %v468
      %v596 = vpop.f32.mrb[0].mxu0
      %v597 = vadd.f32 0.0, %v596
      %v598 = vpop.f32.mrb[0].mxu0
      %v599 = vpop.f32.mrb[0].mxu0
      %v600 = vadd.f32 0.0, %v599
      %v601 = vpop.f32.mrb[0].mxu0
      %602 = vmatprep.mubr.bf16.mxu0 0
      %603 = vmatmul.mubr.bf16.gmra.mrb[0].mxu0 %v469
      %v604 = vpop.f32.mrb[0].mxu0
      %v605 = vadd.f32 0.0, %v604
      %v606 = vpop.f32.mrb[0].mxu0
      %v607 = vpop.f32.mrb[0].mxu0
      %v608 = vadd.f32 0.0, %v607
      %v609 = vpop.f32.mrb[0].mxu0
      %610 = vmatprep.mubr.bf16.mxu0 0
      %611 = vmatmul.mubr.bf16.gmra.mrb[0].mxu0 %v470
      %v612 = vpop.f32.mrb[0].mxu0
      %v613 = vadd.f32 0.0, %v612
      %v614 = vpop.f32.mrb[0].mxu0
      %v615 = vpop.f32.mrb[0].mxu0
      %v616 = vadd.f32 0.0, %v615
      %v617 = vpop.f32.mrb[0].mxu0
      %618 = vmatprep.mubr.bf16.mxu0 0
      %619 = vmatmul.mubr.bf16.gmra.mrb[0].mxu0 %v471
      %v620 = vpop.f32.mrb[0].mxu0
      %v621 = vadd.f32 0.0, %v620
      %v622 = vpop.f32.mrb[0].mxu0
      %v623 = vpop.f32.mrb[0].mxu0
      %v624 = vadd.f32 0.0, %v623
      %v625 = vpop.f32.mrb[0].mxu0
      %626 = vmatprep.mubr.bf16.mxu0 0
      %627 = vmatmul.mubr.bf16.gmra.mrb[0].mxu0 %v472
      %v628 = vpop.f32.mrb[0].mxu0
      %v629 = vadd.f32 0.0, %v628
      %v630 = vpop.f32.mrb[0].mxu0
      %v631 = vpop.f32.mrb[0].mxu0
      %v632 = vadd.f32 0.0, %v631
      %v633 = vpop.f32.mrb[0].mxu0
      %634 = vmatprep.mubr.bf16.mxu0 0
      %635 = vmatmul.mubr.bf16.gmra.mrb[0].mxu0 %v473
      %v636 = vpop.f32.mrb[0].mxu0
      %v637 = vadd.f32 0.0, %v636
      %v638 = vpop.f32.mrb[0].mxu0
      %v639 = vpop.f32.mrb[0].mxu0
      %v640 = vadd.f32 0.0, %v639
      %v641 = vpop.f32.mrb[0].mxu0
      %642 = vmatprep.mubr.bf16.mxu0 0
      %643 = vmatmul.mubr.bf16.gmra.mrb[0].mxu0 %v474
      %v644 = vpop.f32.mrb[0].mxu0
      %v645 = vadd.f32 0.0, %v644
      %v646 = vpop.f32.mrb[0].mxu0
      %v647 = vpop.f32.mrb[0].mxu0
      %v648 = vadd.f32 0.0, %v647
      %v649 = vpop.f32.mrb[0].mxu0
      %650 = vmatprep.mubr.bf16.mxu0 0
      %651 = vmatmul.mubr.bf16.gmra.mrb[0].mxu0 %v475
      %v652 = vpop.f32.mrb[0].mxu0
      %v653 = vadd.f32 0.0, %v652
      %v654 = vpop.f32.mrb[0].mxu0
      %v655 = vpop.f32.mrb[0].mxu0
      %v656 = vadd.f32 0.0, %v655
      %v657 = vpop.f32.mrb[0].mxu0
      %658 = vmatprep.mubr.bf16.mxu0 0
      %659 = vmatmul.mubr.bf16.gmra.mrb[0].mxu0 %v476
      %v660 = vpop.f32.mrb[0].mxu0
      %v661 = vadd.f32 0.0, %v660
      %v662 = vpop.f32.mrb[0].mxu0
      %v663 = vpop.f32.mrb[0].mxu0
      %v664 = vadd.f32 0.0, %v663
      %v665 = vpop.f32.mrb[0].mxu0
      %666 = vmatprep.mubr.bf16.mxu0 0
      %667 = vmatmul.mubr.bf16.gmra.mrb[0].mxu0 %v477
      %v668 = vpop.f32.mrb[0].mxu0
      %v669 = vadd.f32 0.0, %v668
      %v670 = vpop.f32.mrb[0].mxu0
      %v671 = vpop.f32.mrb[0].mxu0
      %v672 = vadd.f32 0.0, %v671
      %v673 = vpop.f32.mrb[0].mxu0
      %674 = vmatprep.mubr.bf16.mxu0 0
      %675 = vmatmul.mubr.bf16.gmra.mrb[0].mxu0 %v478
      %v676 = vpop.f32.mrb[0].mxu0
      %v677 = vadd.f32 0.0, %v676
      %v678 = vpop.f32.mrb[0].mxu0
      %v679 = vpop.f32.mrb[0].mxu0
      %v680 = vadd.f32 0.0, %v679
      %v681 = vpop.f32.mrb[0].mxu0
      %682 = vmatprep.mubr.bf16.mxu0 0
      %683 = vmatmul.mubr.bf16.gmra.mrb[0].mxu0 %v479
      %v684 = vpop.f32.mrb[0].mxu0
      %v685 = vadd.f32 0.0, %v684
      %v686 = vpop.f32.mrb[0].mxu0
      %v687 = vpop.f32.mrb[0].mxu0
      %v688 = vadd.f32 0.0, %v687
      %v689 = vpop.f32.mrb[0].mxu0
      %690 = vmatprep.mubr.bf16.mxu0 0
      %691 = vmatmul.mubr.bf16.gmra.mrb[0].mxu0 %v480
      %v692 = vpop.f32.mrb[0].mxu0
      %v693 = vadd.f32 0.0, %v692
      %v694 = vpop.f32.mrb[0].mxu0
      %v695 = vpop.f32.mrb[0].mxu0
      %v696 = vadd.f32 0.0, %v695
      %v697 = vpop.f32.mrb[0].mxu0
      %698 = vmatprep.mubr.bf16.mxu0 0
      %699 = vmatmul.mubr.bf16.gmra.mrb[0].mxu0 %v481
      %v700 = vpop.f32.mrb[0].mxu0
      %v701 = vadd.f32 0.0, %v700
      %v702 = vpop.f32.mrb[0].mxu0
      %v703 = vpop.f32.mrb[0].mxu0
      %v704 = vadd.f32 0.0, %v703
      %v705 = vpop.f32.mrb[0].mxu0
      %706 = vdwg.mxu0
      %v707 = vadd.f32 %v370, %v581
      %v708 = vadd.f32 %v371, %v584
      %v709 = vadd.f32 %v372, %v589
      %v710 = vadd.f32 %v373, %v592
      %v711 = vadd.f32 %v374, %v597
      %v712 = vadd.f32 %v375, %v600
      %v713 = vadd.f32 %v376, %v605
      %v714 = vadd.f32 %v377, %v608
      %v715 = vadd.f32 %v378, %v613
      %v716 = vadd.f32 %v379, %v616
      %v717 = vadd.f32 %v380, %v621
      %v718 = vadd.f32 %v381, %v624
      %v719 = vadd.f32 %v382, %v629
      %v720 = vadd.f32 %v383, %v632
      %v721 = vadd.f32 %v384, %v637
      %v722 = vadd.f32 %v385, %v640
      %v723 = vadd.f32 %v386, %v645
      %v724 = vadd.f32 %v387, %v648
      %v725 = vadd.f32 %v388, %v653
      %v726 = vadd.f32 %v389, %v656
      %v727 = vadd.f32 %v390, %v661
      %v728 = vadd.f32 %v391, %v664
      %v729 = vadd.f32 %v392, %v669
      %v730 = vadd.f32 %v393, %v672
      %v731 = vadd.f32 %v394, %v677
      %v732 = vadd.f32 %v395, %v680
      %v733 = vadd.f32 %v396, %v685
      %v734 = vadd.f32 %v397, %v688
      %v735 = vadd.f32 %v398, %v693
      %v736 = vadd.f32 %v399, %v696
      %v737 = vadd.f32 %v400, %v701
      %v738 = vadd.f32 %v401, %v704
      %739 = vst [vmem:[%s259] sm:$0xff] %v707
      %740 = vst [vmem:[%s259 + $0x8] sm:$0xff] %v708
      %741 = vst [vmem:[%s259 + $0x10] sm:$0xff] %v709
      %742 = vst [vmem:[%s259 + $0x18] sm:$0xff] %v710
      %743 = vst [vmem:[%s259 + $0x20] sm:$0xff] %v711
      %744 = vst [vmem:[%s259 + $0x28] sm:$0xff] %v712
      %745 = vst [vmem:[%s259 + $0x30] sm:$0xff] %v713
      %746 = vst [vmem:[%s259 + $0x38] sm:$0xff] %v714
      %747 = vst [vmem:[%s259 + $0x40] sm:$0xff] %v715
      %748 = vst [vmem:[%s259 + $0x48] sm:$0xff] %v716
      %749 = vst [vmem:[%s259 + $0x50] sm:$0xff] %v717
      %750 = vst [vmem:[%s259 + $0x58] sm:$0xff] %v718
      %751 = vst [vmem:[%s259 + $0x60] sm:$0xff] %v719
      %752 = vst [vmem:[%s259 + $0x68] sm:$0xff] %v720
      %753 = vst [vmem:[%s259 + $0x70] sm:$0xff] %v721
      %754 = vst [vmem:[%s259 + $0x78] sm:$0xff] %v722
      %755 = vst [vmem:[%s259 + $0x80] sm:$0xff] %v723
      %756 = vst [vmem:[%s259 + $0x88] sm:$0xff] %v724
      %757 = vst [vmem:[%s259 + $0x90] sm:$0xff] %v725
      %758 = vst [vmem:[%s259 + $0x98] sm:$0xff] %v726
      %759 = vst [vmem:[%s259 + $0xa0] sm:$0xff] %v727
      %760 = vst [vmem:[%s259 + $0xa8] sm:$0xff] %v728
      %761 = vst [vmem:[%s259 + $0xb0] sm:$0xff] %v729
      %762 = vst [vmem:[%s259 + $0xb8] sm:$0xff] %v730
      %763 = vst [vmem:[%s259 + $0xc0] sm:$0xff] %v731
      %764 = vst [vmem:[%s259 + $0xc8] sm:$0xff] %v732
      %765 = vst [vmem:[%s259 + $0xd0] sm:$0xff] %v733
      %766 = vst [vmem:[%s259 + $0xd8] sm:$0xff] %v734
      %767 = vst [vmem:[%s259 + $0xe0] sm:$0xff] %v735
      %768 = vst [vmem:[%s259 + $0xe8] sm:$0xff] %v736
      %769 = vst [vmem:[%s259 + $0xf0] sm:$0xff] %v737
      %770 = vst [vmem:[%s259 + $0xf8] sm:$0xff] %v738
      %s771 = sld [smem:[#allocation7 + %s278]]
      %p772 = scmp.eq.s32.totalorder %s771, 1
      // Predicated region
      $region33: #{lgn_forward.3} parent=27 // pred_check
        %p773 = pneg %p772
      $region34: #{lgn_forward.3} parent=27 // pred_check_branch
        %775 = sbr.rel (%p773) target = $region36
      $region35: #{lgn_forward.3} parent=27 // pred_region
        %v776 = vld [vmem:[%s259] sm:$0xff]
        %v777 = vld [vmem:[%s259 + $0x8] sm:$0xff]
        %v778 = vld [vmem:[%s259 + $0x10] sm:$0xff]
        %v779 = vld [vmem:[%s259 + $0x18] sm:$0xff]
        %v780 = vld [vmem:[%s259 + $0x20] sm:$0xff]
        %v781 = vld [vmem:[%s259 + $0x28] sm:$0xff]
        %v782 = vld [vmem:[%s259 + $0x30] sm:$0xff]
        %v783 = vld [vmem:[%s259 + $0x38] sm:$0xff]
        %v784 = vld [vmem:[%s259 + $0x40] sm:$0xff]
        %v785 = vld [vmem:[%s259 + $0x48] sm:$0xff]
        %v786 = vld [vmem:[%s259 + $0x50] sm:$0xff]
        %v787 = vld [vmem:[%s259 + $0x58] sm:$0xff]
        %v788 = vld [vmem:[%s259 + $0x60] sm:$0xff]
        %v789 = vld [vmem:[%s259 + $0x68] sm:$0xff]
        %v790 = vld [vmem:[%s259 + $0x70] sm:$0xff]
        %v791 = vld [vmem:[%s259 + $0x78] sm:$0xff]
        %v792 = vld [vmem:[%s259 + $0x80] sm:$0xff]
        %v793 = vld [vmem:[%s259 + $0x88] sm:$0xff]
        %v794 = vld [vmem:[%s259 + $0x90] sm:$0xff]
        %v795 = vld [vmem:[%s259 + $0x98] sm:$0xff]
        %v796 = vld [vmem:[%s259 + $0xa0] sm:$0xff]
        %v797 = vld [vmem:[%s259 + $0xa8] sm:$0xff]
        %v798 = vld [vmem:[%s259 + $0xb0] sm:$0xff]
        %v799 = vld [vmem:[%s259 + $0xb8] sm:$0xff]
        %v800 = vld [vmem:[%s259 + $0xc0] sm:$0xff]
        %v801 = vld [vmem:[%s259 + $0xc8] sm:$0xff]
        %v802 = vld [vmem:[%s259 + $0xd0] sm:$0xff]
        %v803 = vld [vmem:[%s259 + $0xd8] sm:$0xff]
        %v804 = vld [vmem:[%s259 + $0xe0] sm:$0xff]
        %v805 = vld [vmem:[%s259 + $0xe8] sm:$0xff]
        %v806 = vld [vmem:[%s259 + $0xf0] sm:$0xff]
        %v807 = vld [vmem:[%s259 + $0xf8] sm:$0xff]
        %v808 = vpack.c.bf16 %v777, %v776
        %v809 = vpack.c.bf16 %v779, %v778
        %v810 = vpack.c.bf16 %v781, %v780
        %v811 = vpack.c.bf16 %v783, %v782
        %v812 = vpack.c.bf16 %v785, %v784
        %v813 = vpack.c.bf16 %v787, %v786
        %v814 = vpack.c.bf16 %v789, %v788
        %v815 = vpack.c.bf16 %v791, %v790
        %v816 = vpack.c.bf16 %v793, %v792
        %v817 = vpack.c.bf16 %v795, %v794
        %v818 = vpack.c.bf16 %v797, %v796
        %v819 = vpack.c.bf16 %v799, %v798
        %v820 = vpack.c.bf16 %v801, %v800
        %v821 = vpack.c.bf16 %v803, %v802
        %v822 = vpack.c.bf16 %v805, %v804
        %v823 = vpack.c.bf16 %v807, %v806
        %v840 = vunpack.c.l.b16 %v808
        %v841 = vunpack.c.h.b16 %v808
        %v842 = vunpack.c.l.b16 %v809
        %v843 = vunpack.c.h.b16 %v809
        %v844 = vunpack.c.l.b16 %v810
        %v845 = vunpack.c.h.b16 %v810
        %v846 = vunpack.c.l.b16 %v811
        %v847 = vunpack.c.h.b16 %v811
        %v848 = vunpack.c.l.b16 %v812
        %v849 = vunpack.c.h.b16 %v812
        %v850 = vunpack.c.l.b16 %v813
        %v851 = vunpack.c.h.b16 %v813
        %v852 = vunpack.c.l.b16 %v814
        %v853 = vunpack.c.h.b16 %v814
        %v854 = vunpack.c.l.b16 %v815
        %v855 = vunpack.c.h.b16 %v815
        %v856 = vunpack.c.l.b16 %v816
        %v857 = vunpack.c.h.b16 %v816
        %v858 = vunpack.c.l.b16 %v817
        %v859 = vunpack.c.h.b16 %v817
        %v860 = vunpack.c.l.b16 %v818
        %v861 = vunpack.c.h.b16 %v818
        %v862 = vunpack.c.l.b16 %v819
        %v863 = vunpack.c.h.b16 %v819
        %v864 = vunpack.c.l.b16 %v820
        %v865 = vunpack.c.h.b16 %v820
        %v866 = vunpack.c.l.b16 %v821
        %v867 = vunpack.c.h.b16 %v821
        %v868 = vunpack.c.l.b16 %v822
        %v869 = vunpack.c.h.b16 %v822
        %v870 = vunpack.c.l.b16 %v823
        %v871 = vunpack.c.h.b16 %v823
        %v872 = vpack.c.b16 %v840, %v840
        %v873 = vpack.c.b16 %v841, %v841
        %v874 = vpack.c.b16 %v842, %v842
        %v875 = vpack.c.b16 %v843, %v843
        %v876 = vpack.c.b16 %v844, %v844
        %v877 = vpack.c.b16 %v845, %v845
        %v878 = vpack.c.b16 %v846, %v846
        %v879 = vpack.c.b16 %v847, %v847
        %v880 = vpack.c.b16 %v848, %v848
        %v881 = vpack.c.b16 %v849, %v849
        %v882 = vpack.c.b16 %v850, %v850
        %v883 = vpack.c.b16 %v851, %v851
        %v884 = vpack.c.b16 %v852, %v852
        %v885 = vpack.c.b16 %v853, %v853
        %v886 = vpack.c.b16 %v854, %v854
        %v887 = vpack.c.b16 %v855, %v855
        %v888 = vpack.c.b16 %v856, %v856
        %v889 = vpack.c.b16 %v857, %v857
        %v890 = vpack.c.b16 %v858, %v858
        %v891 = vpack.c.b16 %v859, %v859
        %v892 = vpack.c.b16 %v860, %v860
        %v893 = vpack.c.b16 %v861, %v861
        %v894 = vpack.c.b16 %v862, %v862
        %v895 = vpack.c.b16 %v863, %v863
        %v896 = vpack.c.b16 %v864, %v864
        %v897 = vpack.c.b16 %v865, %v865
        %v898 = vpack.c.b16 %v866, %v866
        %v899 = vpack.c.b16 %v867, %v867
        %v900 = vpack.c.b16 %v868, %v868
        %v901 = vpack.c.b16 %v869, %v869
        %v902 = vpack.c.b16 %v870, %v870
        %v903 = vpack.c.b16 %v871, %v871
        %936 = vst [vmem:[%s271] sm:$0xf] %v872
        %937 = vst [vmem:[%s271 + $0x4] sm:$0xf] %v873
        %938 = vst [vmem:[%s271 + $0x8] sm:$0xf] %v874
        %939 = vst [vmem:[%s271 + $0xc] sm:$0xf] %v875
        %940 = vst [vmem:[%s271 + $0x10] sm:$0xf] %v876
        %941 = vst [vmem:[%s271 + $0x14] sm:$0xf] %v877
        %942 = vst [vmem:[%s271 + $0x18] sm:$0xf] %v878
        %943 = vst [vmem:[%s271 + $0x1c] sm:$0xf] %v879
        %944 = vst [vmem:[%s271 + $0x20] sm:$0xf] %v880
        %945 = vst [vmem:[%s271 + $0x24] sm:$0xf] %v881
        %946 = vst [vmem:[%s271 + $0x28] sm:$0xf] %v882
        %947 = vst [vmem:[%s271 + $0x2c] sm:$0xf] %v883
        %948 = vst [vmem:[%s271 + $0x30] sm:$0xf] %v884
        %949 = vst [vmem:[%s271 + $0x34] sm:$0xf] %v885
        %950 = vst [vmem:[%s271 + $0x38] sm:$0xf] %v886
        %951 = vst [vmem:[%s271 + $0x3c] sm:$0xf] %v887
        %952 = vst [vmem:[%s271 + $0x40] sm:$0xf] %v888
        %953 = vst [vmem:[%s271 + $0x44] sm:$0xf] %v889
        %954 = vst [vmem:[%s271 + $0x48] sm:$0xf] %v890
        %955 = vst [vmem:[%s271 + $0x4c] sm:$0xf] %v891
        %956 = vst [vmem:[%s271 + $0x50] sm:$0xf] %v892
        %957 = vst [vmem:[%s271 + $0x54] sm:$0xf] %v893
        %958 = vst [vmem:[%s271 + $0x58] sm:$0xf] %v894
        %959 = vst [vmem:[%s271 + $0x5c] sm:$0xf] %v895
        %960 = vst [vmem:[%s271 + $0x60] sm:$0xf] %v896
        %961 = vst [vmem:[%s271 + $0x64] sm:$0xf] %v897
        %962 = vst [vmem:[%s271 + $0x68] sm:$0xf] %v898
        %963 = vst [vmem:[%s271 + $0x6c] sm:$0xf] %v899
        %964 = vst [vmem:[%s271 + $0x70] sm:$0xf] %v900
        %965 = vst [vmem:[%s271 + $0x74] sm:$0xf] %v901
        %966 = vst [vmem:[%s271 + $0x78] sm:$0xf] %v902
        %967 = vst [vmem:[%s271 + $0x7c] sm:$0xf] %v903
      $region36: #{lgn_forward.3} parent=27 // pred_fallthru
        _
      %s968 = smul.u32 %s46, 3
      %s969 = sadd.s32 %s968, %s47
      %s970 = sld [smem:[#allocation4 + %s969]]
      %s971 = smul.u32 32, %s970
      %p972 = scmp.lt.s32.totalorder %s971, 63
      %s973 = scalar_select %p972, %s971, 63
      %s974 = smul.addr %s973, 8
      %s975 = scalar_lea.vmem %s7, %s974
      %s976 = smul.u32 %s46, 3
      %s977 = sadd.s32 %s976, %s47
      %s978 = sld [smem:[#allocation4 + %s977]]
      %s979 = smul.u32 32, %s978
      %p980 = scmp.lt.s32.totalorder %s979, 63
      %s981 = scalar_select %p980, %s979, 63
      %s982 = smul.addr %s981, 4
      %s983 = scalar_lea.vmem %s8, %s982
      // Predicated region
      $region37: #{lgn_forward.3} parent=27 // pred_check
        %p984 = pneg %p131
      $region38: #{lgn_forward.3} parent=27 // pred_check_branch
        %986 = sbr.rel (%p984) target = $region40
      $region39: #{lgn_forward.3} parent=27 // pred_region
        %s987 = smul.u32 %s46, 3
        %s988 = sadd.s32 %s987, %s47
        %s989 = sld [smem:[#allocation4 + %s988]]
        %s990 = smul.u32 32, %s989
      $region40: #{lgn_forward.3} parent=27 // pred_fallthru
        _
      // Predicated region
      $region41: #{lgn_forward.3} parent=27 // pred_check
        %p991 = pneg %p163
      $region42: #{lgn_forward.3} parent=27 // pred_check_branch
        %993 = sbr.rel (%p991) target = $region44
      $region43: #{lgn_forward.3} parent=27 // pred_region
        %s994 = smul.u32 %s46, 3
        %s995 = sadd.s32 %s994, %s47
        %s996 = sld [smem:[#allocation4 + %s995]]
        %s997 = smul.u32 32, %s996
      $region44: #{lgn_forward.3} parent=27 // pred_fallthru
        _
    $region28: #{lgn_forward.3} parent=5 // pred_fallthru
      _
    %p998 = scmp.le.s32.totalorder 2, %s37
    // Predicated region
    $region45: #{lgn_forward.3} parent=5 // pred_check
      %p999 = pneg %p998
    $region46: #{lgn_forward.3} parent=5 // pred_check_branch
      %1001 = sbr.rel (%p999) target = $region48
    $region47: #{lgn_forward.3} parent=5 // pred_region
      %s1002 = ssub.s32 %s37, 2
      // Predicated region
      $region49: #{lgn_forward.3} parent=47 // pred_check
        %p1003 = pneg %p137
      $region50: #{lgn_forward.3} parent=47 // pred_check_branch
        %1005 = sbr.rel (%p1003) target = $region52
      $region51: #{lgn_forward.3} parent=47 // pred_region
        %s1006 = smul.u32 %s48, 3
        %s1007 = sadd.s32 %s1006, %s49
        %s1008 = sld [smem:[#allocation4 + %s1007]]
        %s1009 = smul.u32 32, %s1008
        %p1010 = scmp.lt.s32.totalorder %s1009, 63
        %s1011 = scalar_select %p1010, %s1009, 63
        %s1012 = smul.addr %s1011, 8
        %s1013 = scalar_lea.vmem %s7, %s1012
      $region52: #{lgn_forward.3} parent=47 // pred_fallthru
        _
      // Predicated region
      $region53: #{lgn_forward.3} parent=47 // pred_check
        %p1014 = pneg %p169
      $region54: #{lgn_forward.3} parent=47 // pred_check_branch
        %1016 = sbr.rel (%p1014) target = $region56
      $region55: #{lgn_forward.3} parent=47 // pred_region
        %s1017 = smul.u32 %s48, 3
        %s1018 = sadd.s32 %s1017, %s49
        %s1019 = sld [smem:[#allocation4 + %s1018]]
        %s1020 = smul.u32 32, %s1019
        %p1021 = scmp.lt.s32.totalorder %s1020, 63
        %s1022 = scalar_select %p1021, %s1020, 63
        %s1023 = smul.addr %s1022, 4
        %s1024 = scalar_lea.vmem %s8, %s1023
      $region56: #{lgn_forward.3} parent=47 // pred_fallthru
        _
    $region48: #{lgn_forward.3} parent=5 // pred_fallthru
      _
  $region6: #{lgn_forward.3} parent=0 // loop_footer
    %s41 = sadd.s32 1, %s37
  $region7: #{lgn_forward.3} parent=0 // loop_footer_branch
    %36 = sbr.rel target = $region3
  $region8: #{lgn_forward.3} parent=0 // loop_exit
    _

// kernel: lgn_forward.5
$region0: #{lgn_forward.5}
  #allocation0 [shape = 'u32[]', space=smem, size = 0x4, offset = 0x4, fixed_abs, tag = 'smem constant byte address 0x4 - core index']
  #allocation1 [shape = 'u32[144,128]{1,0:T(1,128)}', space=vmem, size = 0x12000, scoped, tag = 'internal scratch']
  %s0 = inlined_call_operand.vmem [shape: f32[128,128], index: 0, kind: input, shape index: {}]
  %s1 = inlined_call_operand.vmem [shape: f32[128,128], index: 1, kind: input, shape index: {}]
  %s2 = inlined_call_operand.vmem [shape: f32[4,128,128], index: 2, kind: input, shape index: {}]
  %s3 = inlined_call_operand.vmem [shape: f32[5,128], index: 3, kind: output, shape index: {}]
  %s4 = sld [smem:[#allocation0]]
  $region22: #{lgn_forward.5} parent=0
    _
  %s6 = ssub.s32 1, %s4
  %s7 = scalar_select 0, %s6, %s4
  // Predicated region
  $region2: #{lgn_forward.5} parent=0 // pred_check
    _
  $region3: #{lgn_forward.5} parent=0 // pred_check_branch
    %9 = sbr.rel (0) target = $region5
  $region4: #{lgn_forward.5} parent=0 // pred_region
    _
  $region5: #{lgn_forward.5} parent=0 // pred_fallthru
    _
  // Predicated region
  $region6: #{lgn_forward.5} parent=0 // pred_check
    _
  $region7: #{lgn_forward.5} parent=0 // pred_check_branch
    %11 = sbr.rel (0) target = $region9
  $region8: #{lgn_forward.5} parent=0 // pred_region
    _
  $region9: #{lgn_forward.5} parent=0 // pred_fallthru
    _
  // Predicated region
  $region10: #{lgn_forward.5} parent=0 // pred_check
    _
  $region11: #{lgn_forward.5} parent=0 // pred_check_branch
    %13 = sbr.rel (0) target = $region13
  $region12: #{lgn_forward.5} parent=0 // pred_region
    _
  $region13: #{lgn_forward.5} parent=0 // pred_fallthru
    _
  %v14 = vld [vmem:[%s0] sm:$0xff]
  %v15 = vld [vmem:[%s0 + $0x8] sm:$0xff]
  %v16 = vld [vmem:[%s0 + $0x10] sm:$0xff]
  %v17 = vld [vmem:[%s0 + $0x18] sm:$0xff]
  %v18 = vld [vmem:[%s0 + $0x20] sm:$0xff]
  %v19 = vld [vmem:[%s0 + $0x28] sm:$0xff]
  %v20 = vld [vmem:[%s0 + $0x30] sm:$0xff]
  %v21 = vld [vmem:[%s0 + $0x38] sm:$0xff]
  %v22 = vld [vmem:[%s0 + $0x40] sm:$0xff]
  %v23 = vld [vmem:[%s0 + $0x48] sm:$0xff]
  %v24 = vld [vmem:[%s0 + $0x50] sm:$0xff]
  %v25 = vld [vmem:[%s0 + $0x58] sm:$0xff]
  %v26 = vld [vmem:[%s0 + $0x60] sm:$0xff]
  %v27 = vld [vmem:[%s0 + $0x68] sm:$0xff]
  %v28 = vld [vmem:[%s0 + $0x70] sm:$0xff]
  %v29 = vld [vmem:[%s0 + $0x78] sm:$0xff]
  %v30 = vld [vmem:[%s1] sm:$0xff]
  %v31 = vld [vmem:[%s1 + $0x8] sm:$0xff]
  %v32 = vld [vmem:[%s1 + $0x10] sm:$0xff]
  %v33 = vld [vmem:[%s1 + $0x18] sm:$0xff]
  %v34 = vld [vmem:[%s1 + $0x20] sm:$0xff]
  %v35 = vld [vmem:[%s1 + $0x28] sm:$0xff]
  %v36 = vld [vmem:[%s1 + $0x30] sm:$0xff]
  %v37 = vld [vmem:[%s1 + $0x38] sm:$0xff]
  %v38 = vld [vmem:[%s1 + $0x40] sm:$0xff]
  %v39 = vld [vmem:[%s1 + $0x48] sm:$0xff]
  %v40 = vld [vmem:[%s1 + $0x50] sm:$0xff]
  %v41 = vld [vmem:[%s1 + $0x58] sm:$0xff]
  %v42 = vld [vmem:[%s1 + $0x60] sm:$0xff]
  %v43 = vld [vmem:[%s1 + $0x68] sm:$0xff]
  %v44 = vld [vmem:[%s1 + $0x70] sm:$0xff]
  %v45 = vld [vmem:[%s1 + $0x78] sm:$0xff]
  %v46 = vld [vmem:[%s2] sm:$0xff]
  %v47 = vld [vmem:[%s2 + $0x8] sm:$0xff]
  %v48 = vld [vmem:[%s2 + $0x10] sm:$0xff]
  %v49 = vld [vmem:[%s2 + $0x18] sm:$0xff]
  %v50 = vld [vmem:[%s2 + $0x20] sm:$0xff]
  %v51 = vld [vmem:[%s2 + $0x28] sm:$0xff]
  %v52 = vld [vmem:[%s2 + $0x30] sm:$0xff]
  %v53 = vld [vmem:[%s2 + $0x38] sm:$0xff]
  %v54 = vld [vmem:[%s2 + $0x40] sm:$0xff]
  %v55 = vld [vmem:[%s2 + $0x48] sm:$0xff]
  %v56 = vld [vmem:[%s2 + $0x50] sm:$0xff]
  %v57 = vld [vmem:[%s2 + $0x58] sm:$0xff]
  %v58 = vld [vmem:[%s2 + $0x60] sm:$0xff]
  %v59 = vld [vmem:[%s2 + $0x68] sm:$0xff]
  %v60 = vld [vmem:[%s2 + $0x70] sm:$0xff]
  %v61 = vld [vmem:[%s2 + $0x78] sm:$0xff]
  %v62 = vld [vmem:[%s2 + $0x80] sm:$0xff]
  %v63 = vld [vmem:[%s2 + $0x88] sm:$0xff]
  %v64 = vld [vmem:[%s2 + $0x90] sm:$0xff]
  %v65 = vld [vmem:[%s2 + $0x98] sm:$0xff]
  %v66 = vld [vmem:[%s2 + $0xa0] sm:$0xff]
  %v67 = vld [vmem:[%s2 + $0xa8] sm:$0xff]
  %v68 = vld [vmem:[%s2 + $0xb0] sm:$0xff]
  %v69 = vld [vmem:[%s2 + $0xb8] sm:$0xff]
  %v70 = vld [vmem:[%s2 + $0xc0] sm:$0xff]
  %v71 = vld [vmem:[%s2 + $0xc8] sm:$0xff]
  %v72 = vld [vmem:[%s2 + $0xd0] sm:$0xff]
  %v73 = vld [vmem:[%s2 + $0xd8] sm:$0xff]
  %v74 = vld [vmem:[%s2 + $0xe0] sm:$0xff]
  %v75 = vld [vmem:[%s2 + $0xe8] sm:$0xff]
  %v76 = vld [vmem:[%s2 + $0xf0] sm:$0xff]
  %v77 = vld [vmem:[%s2 + $0xf8] sm:$0xff]
  %v78 = vld [vmem:[%s2 + $0x100] sm:$0xff]
  %v79 = vld [vmem:[%s2 + $0x108] sm:$0xff]
  %v80 = vld [vmem:[%s2 + $0x110] sm:$0xff]
  %v81 = vld [vmem:[%s2 + $0x118] sm:$0xff]
  %v82 = vld [vmem:[%s2 + $0x120] sm:$0xff]
  %v83 = vld [vmem:[%s2 + $0x128] sm:$0xff]
  %v84 = vld [vmem:[%s2 + $0x130] sm:$0xff]
  %v85 = vld [vmem:[%s2 + $0x138] sm:$0xff]
  %v86 = vld [vmem:[%s2 + $0x140] sm:$0xff]
  %v87 = vld [vmem:[%s2 + $0x148] sm:$0xff]
  %v88 = vld [vmem:[%s2 + $0x150] sm:$0xff]
  %v89 = vld [vmem:[%s2 + $0x158] sm:$0xff]
  %v90 = vld [vmem:[%s2 + $0x160] sm:$0xff]
  %v91 = vld [vmem:[%s2 + $0x168] sm:$0xff]
  %v92 = vld [vmem:[%s2 + $0x170] sm:$0xff]
  %v93 = vld [vmem:[%s2 + $0x178] sm:$0xff]
  %v94 = vld [vmem:[%s2 + $0x180] sm:$0xff]
  %v95 = vld [vmem:[%s2 + $0x188] sm:$0xff]
  %v96 = vld [vmem:[%s2 + $0x190] sm:$0xff]
  %v97 = vld [vmem:[%s2 + $0x198] sm:$0xff]
  %v98 = vld [vmem:[%s2 + $0x1a0] sm:$0xff]
  %v99 = vld [vmem:[%s2 + $0x1a8] sm:$0xff]
  %v100 = vld [vmem:[%s2 + $0x1b0] sm:$0xff]
  %v101 = vld [vmem:[%s2 + $0x1b8] sm:$0xff]
  %v102 = vld [vmem:[%s2 + $0x1c0] sm:$0xff]
  %v103 = vld [vmem:[%s2 + $0x1c8] sm:$0xff]
  %v104 = vld [vmem:[%s2 + $0x1d0] sm:$0xff]
  %v105 = vld [vmem:[%s2 + $0x1d8] sm:$0xff]
  %v106 = vld [vmem:[%s2 + $0x1e0] sm:$0xff]
  %v107 = vld [vmem:[%s2 + $0x1e8] sm:$0xff]
  %v108 = vld [vmem:[%s2 + $0x1f0] sm:$0xff]
  %v109 = vld [vmem:[%s2 + $0x1f8] sm:$0xff]
  %v110 = vmul.f32 %v14, %v14
  %v111 = vmul.f32 %v15, %v15
  %v112 = vmul.f32 %v16, %v16
  %v113 = vmul.f32 %v17, %v17
  %v114 = vmul.f32 %v18, %v18
  %v115 = vmul.f32 %v19, %v19
  %v116 = vmul.f32 %v20, %v20
  %v117 = vmul.f32 %v21, %v21
  %v118 = vmul.f32 %v22, %v22
  %v119 = vmul.f32 %v23, %v23
  %v120 = vmul.f32 %v24, %v24
  %v121 = vmul.f32 %v25, %v25
  %v122 = vmul.f32 %v26, %v26
  %v123 = vmul.f32 %v27, %v27
  %v124 = vmul.f32 %v28, %v28
  %v125 = vmul.f32 %v29, %v29
  %126 = vadd.xlane.f32.xlu0 %v110
  %v127 = vpop.xlane.xlu0 %126
  %128 = vadd.xlane.f32.xlu0 %v111
  %v129 = vpop.xlane.xlu0 %128
  %130 = vadd.xlane.f32.xlu0 %v112
  %v131 = vpop.xlane.xlu0 %130
  %132 = vadd.xlane.f32.xlu0 %v113
  %v133 = vpop.xlane.xlu0 %132
  %134 = vadd.xlane.f32.xlu0 %v114
  %v135 = vpop.xlane.xlu0 %134
  %136 = vadd.xlane.f32.xlu0 %v115
  %v137 = vpop.xlane.xlu0 %136
  %138 = vadd.xlane.f32.xlu0 %v116
  %v139 = vpop.xlane.xlu0 %138
  %140 = vadd.xlane.f32.xlu0 %v117
  %v141 = vpop.xlane.xlu0 %140
  %142 = vadd.xlane.f32.xlu0 %v118
  %v143 = vpop.xlane.xlu0 %142
  %144 = vadd.xlane.f32.xlu0 %v119
  %v145 = vpop.xlane.xlu0 %144
  %146 = vadd.xlane.f32.xlu0 %v120
  %v147 = vpop.xlane.xlu0 %146
  %148 = vadd.xlane.f32.xlu0 %v121
  %v149 = vpop.xlane.xlu0 %148
  %150 = vadd.xlane.f32.xlu0 %v122
  %v151 = vpop.xlane.xlu0 %150
  %152 = vadd.xlane.f32.xlu0 %v123
  %v153 = vpop.xlane.xlu0 %152
  %154 = vadd.xlane.f32.xlu0 %v124
  %v155 = vpop.xlane.xlu0 %154
  %156 = vadd.xlane.f32.xlu0 %v125
  %v157 = vpop.xlane.xlu0 %156
  %v158 = vmax.f32 %v127, 1e-24
  %v159 = vmax.f32 %v129, 1e-24
  %v160 = vmax.f32 %v131, 1e-24
  %v161 = vmax.f32 %v133, 1e-24
  %v162 = vmax.f32 %v135, 1e-24
  %v163 = vmax.f32 %v137, 1e-24
  %v164 = vmax.f32 %v139, 1e-24
  %v165 = vmax.f32 %v141, 1e-24
  %v166 = vmax.f32 %v143, 1e-24
  %v167 = vmax.f32 %v145, 1e-24
  %v168 = vmax.f32 %v147, 1e-24
  %v169 = vmax.f32 %v149, 1e-24
  %v170 = vmax.f32 %v151, 1e-24
  %v171 = vmax.f32 %v153, 1e-24
  %v172 = vmax.f32 %v155, 1e-24
  %v173 = vmax.f32 %v157, 1e-24
  %v174 = vrsqrt.pop %v158
  %v175 = vrsqrt.pop %v159
  %v176 = vrsqrt.pop %v160
  %v177 = vrsqrt.pop %v161
  %v178 = vrsqrt.pop %v162
  %v179 = vrsqrt.pop %v163
  %v180 = vrsqrt.pop %v164
  %v181 = vrsqrt.pop %v165
  %v182 = vrsqrt.pop %v166
  %v183 = vrsqrt.pop %v167
  %v184 = vrsqrt.pop %v168
  %v185 = vrsqrt.pop %v169
  %v186 = vrsqrt.pop %v170
  %v187 = vrsqrt.pop %v171
  %v188 = vrsqrt.pop %v172
  %v189 = vrsqrt.pop %v173
  %v190 = vmul.f32 %v14, %v174
  %v191 = vmul.f32 %v15, %v175
  %v192 = vmul.f32 %v16, %v176
  %v193 = vmul.f32 %v17, %v177
  %v194 = vmul.f32 %v18, %v178
  %v195 = vmul.f32 %v19, %v179
  %v196 = vmul.f32 %v20, %v180
  %v197 = vmul.f32 %v21, %v181
  %v198 = vmul.f32 %v22, %v182
  %v199 = vmul.f32 %v23, %v183
  %v200 = vmul.f32 %v24, %v184
  %v201 = vmul.f32 %v25, %v185
  %v202 = vmul.f32 %v26, %v186
  %v203 = vmul.f32 %v27, %v187
  %v204 = vmul.f32 %v28, %v188
  %v205 = vmul.f32 %v29, %v189
  %v206 = vmul.f32 %v30, %v30
  %v207 = vmul.f32 %v31, %v31
  %v208 = vmul.f32 %v32, %v32
  %v209 = vmul.f32 %v33, %v33
  %v210 = vmul.f32 %v34, %v34
  %v211 = vmul.f32 %v35, %v35
  %v212 = vmul.f32 %v36, %v36
  %v213 = vmul.f32 %v37, %v37
  %v214 = vmul.f32 %v38, %v38
  %v215 = vmul.f32 %v39, %v39
  %v216 = vmul.f32 %v40, %v40
  %v217 = vmul.f32 %v41, %v41
  %v218 = vmul.f32 %v42, %v42
  %v219 = vmul.f32 %v43, %v43
  %v220 = vmul.f32 %v44, %v44
  %v221 = vmul.f32 %v45, %v45
  %v222 = vmul.f32 %v46, %v46
  %v223 = vmul.f32 %v47, %v47
  %v224 = vmul.f32 %v48, %v48
  %v225 = vmul.f32 %v49, %v49
  %v226 = vmul.f32 %v50, %v50
  %v227 = vmul.f32 %v51, %v51
  %v228 = vmul.f32 %v52, %v52
  %v229 = vmul.f32 %v53, %v53
  %v230 = vmul.f32 %v54, %v54
  %v231 = vmul.f32 %v55, %v55
  %v232 = vmul.f32 %v56, %v56
  %v233 = vmul.f32 %v57, %v57
  %v234 = vmul.f32 %v58, %v58
  %v235 = vmul.f32 %v59, %v59
  %v236 = vmul.f32 %v60, %v60
  %v237 = vmul.f32 %v61, %v61
  %v238 = vmul.f32 %v62, %v62
  %v239 = vmul.f32 %v63, %v63
  %v240 = vmul.f32 %v64, %v64
  %v241 = vmul.f32 %v65, %v65
  %v242 = vmul.f32 %v66, %v66
  %v243 = vmul.f32 %v67, %v67
  %v244 = vmul.f32 %v68, %v68
  %v245 = vmul.f32 %v69, %v69
  %v246 = vmul.f32 %v70, %v70
  %v247 = vmul.f32 %v71, %v71
  %v248 = vmul.f32 %v72, %v72
  %v249 = vmul.f32 %v73, %v73
  %v250 = vmul.f32 %v74, %v74
  %v251 = vmul.f32 %v75, %v75
  %v252 = vmul.f32 %v76, %v76
  %v253 = vmul.f32 %v77, %v77
  %v254 = vmul.f32 %v78, %v78
  %v255 = vmul.f32 %v79, %v79
  %v256 = vmul.f32 %v80, %v80
  %v257 = vmul.f32 %v81, %v81
  %v258 = vmul.f32 %v82, %v82
  %v259 = vmul.f32 %v83, %v83
  %v260 = vmul.f32 %v84, %v84
  %v261 = vmul.f32 %v85, %v85
  %v262 = vmul.f32 %v86, %v86
  %v263 = vmul.f32 %v87, %v87
  %v264 = vmul.f32 %v88, %v88
  %v265 = vmul.f32 %v89, %v89
  %v266 = vmul.f32 %v90, %v90
  %v267 = vmul.f32 %v91, %v91
  %v268 = vmul.f32 %v92, %v92
  %v269 = vmul.f32 %v93, %v93
  %v270 = vmul.f32 %v94, %v94
  %v271 = vmul.f32 %v95, %v95
  %v272 = vmul.f32 %v96, %v96
  %v273 = vmul.f32 %v97, %v97
  %v274 = vmul.f32 %v98, %v98
  %v275 = vmul.f32 %v99, %v99
  %v276 = vmul.f32 %v100, %v100
  %v277 = vmul.f32 %v101, %v101
  %v278 = vmul.f32 %v102, %v102
  %v279 = vmul.f32 %v103, %v103
  %v280 = vmul.f32 %v104, %v104
  %v281 = vmul.f32 %v105, %v105
  %v282 = vmul.f32 %v106, %v106
  %v283 = vmul.f32 %v107, %v107
  %v284 = vmul.f32 %v108, %v108
  %v285 = vmul.f32 %v109, %v109
  %286 = vadd.xlane.f32.xlu0 %v206
  %v287 = vpop.xlane.xlu0 %286
  %288 = vadd.xlane.f32.xlu0 %v207
  %v289 = vpop.xlane.xlu0 %288
  %290 = vadd.xlane.f32.xlu0 %v208
  %v291 = vpop.xlane.xlu0 %290
  %292 = vadd.xlane.f32.xlu0 %v209
  %v293 = vpop.xlane.xlu0 %292
  %294 = vadd.xlane.f32.xlu0 %v210
  %v295 = vpop.xlane.xlu0 %294
  %296 = vadd.xlane.f32.xlu0 %v211
  %v297 = vpop.xlane.xlu0 %296
  %298 = vadd.xlane.f32.xlu0 %v212
  %v299 = vpop.xlane.xlu0 %298
  %300 = vadd.xlane.f32.xlu0 %v213
  %v301 = vpop.xlane.xlu0 %300
  %302 = vadd.xlane.f32.xlu0 %v214
  %v303 = vpop.xlane.xlu0 %302
  %304 = vadd.xlane.f32.xlu0 %v215
  %v305 = vpop.xlane.xlu0 %304
  %306 = vadd.xlane.f32.xlu0 %v216
  %v307 = vpop.xlane.xlu0 %306
  %308 = vadd.xlane.f32.xlu0 %v217
  %v309 = vpop.xlane.xlu0 %308
  %310 = vadd.xlane.f32.xlu0 %v218
  %v311 = vpop.xlane.xlu0 %310
  %312 = vadd.xlane.f32.xlu0 %v219
  %v313 = vpop.xlane.xlu0 %312
  %314 = vadd.xlane.f32.xlu0 %v220
  %v315 = vpop.xlane.xlu0 %314
  %316 = vadd.xlane.f32.xlu0 %v221
  %v317 = vpop.xlane.xlu0 %316
  %318 = vadd.xlane.f32.xlu0 %v222
  %v319 = vpop.xlane.xlu0 %318
  %320 = vadd.xlane.f32.xlu0 %v223
  %v321 = vpop.xlane.xlu0 %320
  %322 = vadd.xlane.f32.xlu0 %v224
  %v323 = vpop.xlane.xlu0 %322
  %324 = vadd.xlane.f32.xlu0 %v225
  %v325 = vpop.xlane.xlu0 %324
  %326 = vadd.xlane.f32.xlu0 %v226
  %v327 = vpop.xlane.xlu0 %326
  %328 = vadd.xlane.f32.xlu0 %v227
  %v329 = vpop.xlane.xlu0 %328
  %330 = vadd.xlane.f32.xlu0 %v228
  %v331 = vpop.xlane.xlu0 %330
  %332 = vadd.xlane.f32.xlu0 %v229
  %v333 = vpop.xlane.xlu0 %332
  %334 = vadd.xlane.f32.xlu0 %v230
  %v335 = vpop.xlane.xlu0 %334
  %336 = vadd.xlane.f32.xlu0 %v231
  %v337 = vpop.xlane.xlu0 %336
  %338 = vadd.xlane.f32.xlu0 %v232
  %v339 = vpop.xlane.xlu0 %338
  %340 = vadd.xlane.f32.xlu0 %v233
  %v341 = vpop.xlane.xlu0 %340
  %342 = vadd.xlane.f32.xlu0 %v234
  %v343 = vpop.xlane.xlu0 %342
  %344 = vadd.xlane.f32.xlu0 %v235
  %v345 = vpop.xlane.xlu0 %344
  %346 = vadd.xlane.f32.xlu0 %v236
  %v347 = vpop.xlane.xlu0 %346
  %348 = vadd.xlane.f32.xlu0 %v237
  %v349 = vpop.xlane.xlu0 %348
  %350 = vadd.xlane.f32.xlu0 %v238
  %v351 = vpop.xlane.xlu0 %350
  %352 = vadd.xlane.f32.xlu0 %v239
  %v353 = vpop.xlane.xlu0 %352
  %354 = vadd.xlane.f32.xlu0 %v240
  %v355 = vpop.xlane.xlu0 %354
  %356 = vadd.xlane.f32.xlu0 %v241
  %v357 = vpop.xlane.xlu0 %356
  %358 = vadd.xlane.f32.xlu0 %v242
  %v359 = vpop.xlane.xlu0 %358
  %360 = vadd.xlane.f32.xlu0 %v243
  %v361 = vpop.xlane.xlu0 %360
  %362 = vadd.xlane.f32.xlu0 %v244
  %v363 = vpop.xlane.xlu0 %362
  %364 = vadd.xlane.f32.xlu0 %v245
  %v365 = vpop.xlane.xlu0 %364
  %366 = vadd.xlane.f32.xlu0 %v246
  %v367 = vpop.xlane.xlu0 %366
  %368 = vadd.xlane.f32.xlu0 %v247
  %v369 = vpop.xlane.xlu0 %368
  %370 = vadd.xlane.f32.xlu0 %v248
  %v371 = vpop.xlane.xlu0 %370
  %372 = vadd.xlane.f32.xlu0 %v249
  %v373 = vpop.xlane.xlu0 %372
  %374 = vadd.xlane.f32.xlu0 %v250
  %v375 = vpop.xlane.xlu0 %374
  %376 = vadd.xlane.f32.xlu0 %v251
  %v377 = vpop.xlane.xlu0 %376
  %378 = vadd.xlane.f32.xlu0 %v252
  %v379 = vpop.xlane.xlu0 %378
  %380 = vadd.xlane.f32.xlu0 %v253
  %v381 = vpop.xlane.xlu0 %380
  %382 = vadd.xlane.f32.xlu0 %v254
  %v383 = vpop.xlane.xlu0 %382
  %384 = vadd.xlane.f32.xlu0 %v255
  %v385 = vpop.xlane.xlu0 %384
  %386 = vadd.xlane.f32.xlu0 %v256
  %v387 = vpop.xlane.xlu0 %386
  %388 = vadd.xlane.f32.xlu0 %v257
  %v389 = vpop.xlane.xlu0 %388
  %390 = vadd.xlane.f32.xlu0 %v258
  %v391 = vpop.xlane.xlu0 %390
  %392 = vadd.xlane.f32.xlu0 %v259
  %v393 = vpop.xlane.xlu0 %392
  %394 = vadd.xlane.f32.xlu0 %v260
  %v395 = vpop.xlane.xlu0 %394
  %396 = vadd.xlane.f32.xlu0 %v261
  %v397 = vpop.xlane.xlu0 %396
  %398 = vadd.xlane.f32.xlu0 %v262
  %v399 = vpop.xlane.xlu0 %398
  %400 = vadd.xlane.f32.xlu0 %v263
  %v401 = vpop.xlane.xlu0 %400
  %402 = vadd.xlane.f32.xlu0 %v264
  %v403 = vpop.xlane.xlu0 %402
  %404 = vadd.xlane.f32.xlu0 %v265
  %v405 = vpop.xlane.xlu0 %404
  %406 = vadd.xlane.f32.xlu0 %v266
  %v407 = vpop.xlane.xlu0 %406
  %408 = vadd.xlane.f32.xlu0 %v267
  %v409 = vpop.xlane.xlu0 %408
  %410 = vadd.xlane.f32.xlu0 %v268
  %v411 = vpop.xlane.xlu0 %410
  %412 = vadd.xlane.f32.xlu0 %v269
  %v413 = vpop.xlane.xlu0 %412
  %414 = vadd.xlane.f32.xlu0 %v270
  %v415 = vpop.xlane.xlu0 %414
  %416 = vadd.xlane.f32.xlu0 %v271
  %v417 = vpop.xlane.xlu0 %416
  %418 = vadd.xlane.f32.xlu0 %v272
  %v419 = vpop.xlane.xlu0 %418
  %420 = vadd.xlane.f32.xlu0 %v273
  %v421 = vpop.xlane.xlu0 %420
  %422 = vadd.xlane.f32.xlu0 %v274
  %v423 = vpop.xlane.xlu0 %422
  %424 = vadd.xlane.f32.xlu0 %v275
  %v425 = vpop.xlane.xlu0 %424
  %426 = vadd.xlane.f32.xlu0 %v276
  %v427 = vpop.xlane.xlu0 %426
  %428 = vadd.xlane.f32.xlu0 %v277
  %v429 = vpop.xlane.xlu0 %428
  %430 = vadd.xlane.f32.xlu0 %v278
  %v431 = vpop.xlane.xlu0 %430
  %432 = vadd.xlane.f32.xlu0 %v279
  %v433 = vpop.xlane.xlu0 %432
  %434 = vadd.xlane.f32.xlu0 %v280
  %v435 = vpop.xlane.xlu0 %434
  %436 = vadd.xlane.f32.xlu0 %v281
  %v437 = vpop.xlane.xlu0 %436
  %438 = vadd.xlane.f32.xlu0 %v282
  %v439 = vpop.xlane.xlu0 %438
  %440 = vadd.xlane.f32.xlu0 %v283
  %v441 = vpop.xlane.xlu0 %440
  %442 = vadd.xlane.f32.xlu0 %v284
  %v443 = vpop.xlane.xlu0 %442
  %444 = vadd.xlane.f32.xlu0 %v285
  %v445 = vpop.xlane.xlu0 %444
  %v446 = vmax.f32 %v287, 1e-24
  %v447 = vmax.f32 %v289, 1e-24
  %v448 = vmax.f32 %v291, 1e-24
  %v449 = vmax.f32 %v293, 1e-24
  %v450 = vmax.f32 %v295, 1e-24
  %v451 = vmax.f32 %v297, 1e-24
  %v452 = vmax.f32 %v299, 1e-24
  %v453 = vmax.f32 %v301, 1e-24
  %v454 = vmax.f32 %v303, 1e-24
  %v455 = vmax.f32 %v305, 1e-24
  %v456 = vmax.f32 %v307, 1e-24
  %v457 = vmax.f32 %v309, 1e-24
  %v458 = vmax.f32 %v311, 1e-24
  %v459 = vmax.f32 %v313, 1e-24
  %v460 = vmax.f32 %v315, 1e-24
  %v461 = vmax.f32 %v317, 1e-24
  %v462 = vmax.f32 %v319, 1e-24
  %v463 = vmax.f32 %v321, 1e-24
  %v464 = vmax.f32 %v323, 1e-24
  %v465 = vmax.f32 %v325, 1e-24
  %v466 = vmax.f32 %v327, 1e-24
  %v467 = vmax.f32 %v329, 1e-24
  %v468 = vmax.f32 %v331, 1e-24
  %v469 = vmax.f32 %v333, 1e-24
  %v470 = vmax.f32 %v335, 1e-24
  %v471 = vmax.f32 %v337, 1e-24
  %v472 = vmax.f32 %v339, 1e-24
  %v473 = vmax.f32 %v341, 1e-24
  %v474 = vmax.f32 %v343, 1e-24
  %v475 = vmax.f32 %v345, 1e-24
  %v476 = vmax.f32 %v347, 1e-24
  %v477 = vmax.f32 %v349, 1e-24
  %v478 = vmax.f32 %v351, 1e-24
  %v479 = vmax.f32 %v353, 1e-24
  %v480 = vmax.f32 %v355, 1e-24
  %v481 = vmax.f32 %v357, 1e-24
  %v482 = vmax.f32 %v359, 1e-24
  %v483 = vmax.f32 %v361, 1e-24
  %v484 = vmax.f32 %v363, 1e-24
  %v485 = vmax.f32 %v365, 1e-24
  %v486 = vmax.f32 %v367, 1e-24
  %v487 = vmax.f32 %v369, 1e-24
  %v488 = vmax.f32 %v371, 1e-24
  %v489 = vmax.f32 %v373, 1e-24
  %v490 = vmax.f32 %v375, 1e-24
  %v491 = vmax.f32 %v377, 1e-24
  %v492 = vmax.f32 %v379, 1e-24
  %v493 = vmax.f32 %v381, 1e-24
  %v494 = vmax.f32 %v383, 1e-24
  %v495 = vmax.f32 %v385, 1e-24
  %v496 = vmax.f32 %v387, 1e-24
  %v497 = vmax.f32 %v389, 1e-24
  %v498 = vmax.f32 %v391, 1e-24
  %v499 = vmax.f32 %v393, 1e-24
  %v500 = vmax.f32 %v395, 1e-24
  %v501 = vmax.f32 %v397, 1e-24
  %v502 = vmax.f32 %v399, 1e-24
  %v503 = vmax.f32 %v401, 1e-24
  %v504 = vmax.f32 %v403, 1e-24
  %v505 = vmax.f32 %v405, 1e-24
  %v506 = vmax.f32 %v407, 1e-24
  %v507 = vmax.f32 %v409, 1e-24
  %v508 = vmax.f32 %v411, 1e-24
  %v509 = vmax.f32 %v413, 1e-24
  %v510 = vmax.f32 %v415, 1e-24
  %v511 = vmax.f32 %v417, 1e-24
  %v512 = vmax.f32 %v419, 1e-24
  %v513 = vmax.f32 %v421, 1e-24
  %v514 = vmax.f32 %v423, 1e-24
  %v515 = vmax.f32 %v425, 1e-24
  %v516 = vmax.f32 %v427, 1e-24
  %v517 = vmax.f32 %v429, 1e-24
  %v518 = vmax.f32 %v431, 1e-24
  %v519 = vmax.f32 %v433, 1e-24
  %v520 = vmax.f32 %v435, 1e-24
  %v521 = vmax.f32 %v437, 1e-24
  %v522 = vmax.f32 %v439, 1e-24
  %v523 = vmax.f32 %v441, 1e-24
  %v524 = vmax.f32 %v443, 1e-24
  %v525 = vmax.f32 %v445, 1e-24
  %v526 = vrsqrt.pop %v446
  %v527 = vrsqrt.pop %v447
  %v528 = vrsqrt.pop %v448
  %v529 = vrsqrt.pop %v449
  %v530 = vrsqrt.pop %v450
  %v531 = vrsqrt.pop %v451
  %v532 = vrsqrt.pop %v452
  %v533 = vrsqrt.pop %v453
  %v534 = vrsqrt.pop %v454
  %v535 = vrsqrt.pop %v455
  %v536 = vrsqrt.pop %v456
  %v537 = vrsqrt.pop %v457
  %v538 = vrsqrt.pop %v458
  %v539 = vrsqrt.pop %v459
  %v540 = vrsqrt.pop %v460
  %v541 = vrsqrt.pop %v461
  %v542 = vrsqrt.pop %v462
  %v543 = vrsqrt.pop %v463
  %v544 = vrsqrt.pop %v464
  %v545 = vrsqrt.pop %v465
  %v546 = vrsqrt.pop %v466
  %v547 = vrsqrt.pop %v467
  %v548 = vrsqrt.pop %v468
  %v549 = vrsqrt.pop %v469
  %v550 = vrsqrt.pop %v470
  %v551 = vrsqrt.pop %v471
  %v552 = vrsqrt.pop %v472
  %v553 = vrsqrt.pop %v473
  %v554 = vrsqrt.pop %v474
  %v555 = vrsqrt.pop %v475
  %v556 = vrsqrt.pop %v476
  %v557 = vrsqrt.pop %v477
  %v558 = vrsqrt.pop %v478
  %v559 = vrsqrt.pop %v479
  %v560 = vrsqrt.pop %v480
  %v561 = vrsqrt.pop %v481
  %v562 = vrsqrt.pop %v482
  %v563 = vrsqrt.pop %v483
  %v564 = vrsqrt.pop %v484
  %v565 = vrsqrt.pop %v485
  %v566 = vrsqrt.pop %v486
  %v567 = vrsqrt.pop %v487
  %v568 = vrsqrt.pop %v488
  %v569 = vrsqrt.pop %v489
  %v570 = vrsqrt.pop %v490
  %v571 = vrsqrt.pop %v491
  %v572 = vrsqrt.pop %v492
  %v573 = vrsqrt.pop %v493
  %v574 = vrsqrt.pop %v494
  %v575 = vrsqrt.pop %v495
  %v576 = vrsqrt.pop %v496
  %v577 = vrsqrt.pop %v497
  %v578 = vrsqrt.pop %v498
  %v579 = vrsqrt.pop %v499
  %v580 = vrsqrt.pop %v500
  %v581 = vrsqrt.pop %v501
  %v582 = vrsqrt.pop %v502
  %v583 = vrsqrt.pop %v503
  %v584 = vrsqrt.pop %v504
  %v585 = vrsqrt.pop %v505
  %v586 = vrsqrt.pop %v506
  %v587 = vrsqrt.pop %v507
  %v588 = vrsqrt.pop %v508
  %v589 = vrsqrt.pop %v509
  %v590 = vrsqrt.pop %v510
  %v591 = vrsqrt.pop %v511
  %v592 = vrsqrt.pop %v512
  %v593 = vrsqrt.pop %v513
  %v594 = vrsqrt.pop %v514
  %v595 = vrsqrt.pop %v515
  %v596 = vrsqrt.pop %v516
  %v597 = vrsqrt.pop %v517
  %v598 = vrsqrt.pop %v518
  %v599 = vrsqrt.pop %v519
  %v600 = vrsqrt.pop %v520
  %v601 = vrsqrt.pop %v521
  %v602 = vrsqrt.pop %v522
  %v603 = vrsqrt.pop %v523
  %v604 = vrsqrt.pop %v524
  %v605 = vrsqrt.pop %v525
  %v606 = vmul.f32 %v30, %v526
  %v607 = vmul.f32 %v31, %v527
  %v608 = vmul.f32 %v32, %v528
  %v609 = vmul.f32 %v33, %v529
  %v610 = vmul.f32 %v34, %v530
  %v611 = vmul.f32 %v35, %v531
  %v612 = vmul.f32 %v36, %v532
  %v613 = vmul.f32 %v37, %v533
  %v614 = vmul.f32 %v38, %v534
  %v615 = vmul.f32 %v39, %v535
  %v616 = vmul.f32 %v40, %v536
  %v617 = vmul.f32 %v41, %v537
  %v618 = vmul.f32 %v42, %v538
  %v619 = vmul.f32 %v43, %v539
  %v620 = vmul.f32 %v44, %v540
  %v621 = vmul.f32 %v45, %v541
  %v622 = vmul.f32 %v46, %v542
  %v623 = vmul.f32 %v47, %v543
  %v624 = vmul.f32 %v48, %v544
  %v625 = vmul.f32 %v49, %v545
  %v626 = vmul.f32 %v50, %v546
  %v627 = vmul.f32 %v51, %v547
  %v628 = vmul.f32 %v52, %v548
  %v629 = vmul.f32 %v53, %v549
  %v630 = vmul.f32 %v54, %v550
  %v631 = vmul.f32 %v55, %v551
  %v632 = vmul.f32 %v56, %v552
  %v633 = vmul.f32 %v57, %v553
  %v634 = vmul.f32 %v58, %v554
  %v635 = vmul.f32 %v59, %v555
  %v636 = vmul.f32 %v60, %v556
  %v637 = vmul.f32 %v61, %v557
  %v638 = vmul.f32 %v62, %v558
  %v639 = vmul.f32 %v63, %v559
  %v640 = vmul.f32 %v64, %v560
  %v641 = vmul.f32 %v65, %v561
  %v642 = vmul.f32 %v66, %v562
  %v643 = vmul.f32 %v67, %v563
  %v644 = vmul.f32 %v68, %v564
  %v645 = vmul.f32 %v69, %v565
  %v646 = vmul.f32 %v70, %v566
  %v647 = vmul.f32 %v71, %v567
  %v648 = vmul.f32 %v72, %v568
  %v649 = vmul.f32 %v73, %v569
  %v650 = vmul.f32 %v74, %v570
  %v651 = vmul.f32 %v75, %v571
  %v652 = vmul.f32 %v76, %v572
  %v653 = vmul.f32 %v77, %v573
  %v654 = vmul.f32 %v78, %v574
  %v655 = vmul.f32 %v79, %v575
  %v656 = vmul.f32 %v80, %v576
  %v657 = vmul.f32 %v81, %v577
  %v658 = vmul.f32 %v82, %v578
  %v659 = vmul.f32 %v83, %v579
  %v660 = vmul.f32 %v84, %v580
  %v661 = vmul.f32 %v85, %v581
  %v662 = vmul.f32 %v86, %v582
  %v663 = vmul.f32 %v87, %v583
  %v664 = vmul.f32 %v88, %v584
  %v665 = vmul.f32 %v89, %v585
  %v666 = vmul.f32 %v90, %v586
  %v667 = vmul.f32 %v91, %v587
  %v668 = vmul.f32 %v92, %v588
  %v669 = vmul.f32 %v93, %v589
  %v670 = vmul.f32 %v94, %v590
  %v671 = vmul.f32 %v95, %v591
  %v672 = vmul.f32 %v96, %v592
  %v673 = vmul.f32 %v97, %v593
  %v674 = vmul.f32 %v98, %v594
  %v675 = vmul.f32 %v99, %v595
  %v676 = vmul.f32 %v100, %v596
  %v677 = vmul.f32 %v101, %v597
  %v678 = vmul.f32 %v102, %v598
  %v679 = vmul.f32 %v103, %v599
  %v680 = vmul.f32 %v104, %v600
  %v681 = vmul.f32 %v105, %v601
  %v682 = vmul.f32 %v106, %v602
  %v683 = vmul.f32 %v107, %v603
  %v684 = vmul.f32 %v108, %v604
  %v685 = vmul.f32 %v109, %v605
  %v686 = vmul.f32 %v606, %v190
  %v687 = vmul.f32 %v607, %v191
  %v688 = vmul.f32 %v608, %v192
  %v689 = vmul.f32 %v609, %v193
  %v690 = vmul.f32 %v610, %v194
  %v691 = vmul.f32 %v611, %v195
  %v692 = vmul.f32 %v612, %v196
  %v693 = vmul.f32 %v613, %v197
  %v694 = vmul.f32 %v614, %v198
  %v695 = vmul.f32 %v615, %v199
  %v696 = vmul.f32 %v616, %v200
  %v697 = vmul.f32 %v617, %v201
  %v698 = vmul.f32 %v618, %v202
  %v699 = vmul.f32 %v619, %v203
  %v700 = vmul.f32 %v620, %v204
  %v701 = vmul.f32 %v621, %v205
  %v702 = vmul.f32 %v622, %v190
  %v703 = vmul.f32 %v623, %v191
  %v704 = vmul.f32 %v624, %v192
  %v705 = vmul.f32 %v625, %v193
  %v706 = vmul.f32 %v626, %v194
  %v707 = vmul.f32 %v627, %v195
  %v708 = vmul.f32 %v628, %v196
  %v709 = vmul.f32 %v629, %v197
  %v710 = vmul.f32 %v630, %v198
  %v711 = vmul.f32 %v631, %v199
  %v712 = vmul.f32 %v632, %v200
  %v713 = vmul.f32 %v633, %v201
  %v714 = vmul.f32 %v634, %v202
  %v715 = vmul.f32 %v635, %v203
  %v716 = vmul.f32 %v636, %v204
  %v717 = vmul.f32 %v637, %v205
  %v718 = vmul.f32 %v638, %v190
  %v719 = vmul.f32 %v639, %v191
  %v720 = vmul.f32 %v640, %v192
  %v721 = vmul.f32 %v641, %v193
  %v722 = vmul.f32 %v642, %v194
  %v723 = vmul.f32 %v643, %v195
  %v724 = vmul.f32 %v644, %v196
  %v725 = vmul.f32 %v645, %v197
  %v726 = vmul.f32 %v646, %v198
  %v727 = vmul.f32 %v647, %v199
  %v728 = vmul.f32 %v648, %v200
  %v729 = vmul.f32 %v649, %v201
  %v730 = vmul.f32 %v650, %v202
  %v731 = vmul.f32 %v651, %v203
  %v732 = vmul.f32 %v652, %v204
  %v733 = vmul.f32 %v653, %v205
  %v734 = vmul.f32 %v654, %v190
  %v735 = vmul.f32 %v655, %v191
  %v736 = vmul.f32 %v656, %v192
  %v737 = vmul.f32 %v657, %v193
  %v738 = vmul.f32 %v658, %v194
  %v739 = vmul.f32 %v659, %v195
  %v740 = vmul.f32 %v660, %v196
  %v741 = vmul.f32 %v661, %v197
  %v742 = vmul.f32 %v662, %v198
  %v743 = vmul.f32 %v663, %v199
  %v744 = vmul.f32 %v664, %v200
  %v745 = vmul.f32 %v665, %v201
  %v746 = vmul.f32 %v666, %v202
  %v747 = vmul.f32 %v667, %v203
  %v748 = vmul.f32 %v668, %v204
  %v749 = vmul.f32 %v669, %v205
  %v750 = vmul.f32 %v670, %v190
  %v751 = vmul.f32 %v671, %v191
  %v752 = vmul.f32 %v672, %v192
  %v753 = vmul.f32 %v673, %v193
  %v754 = vmul.f32 %v674, %v194
  %v755 = vmul.f32 %v675, %v195
  %v756 = vmul.f32 %v676, %v196
  %v757 = vmul.f32 %v677, %v197
  %v758 = vmul.f32 %v678, %v198
  %v759 = vmul.f32 %v679, %v199
  %v760 = vmul.f32 %v680, %v200
  %v761 = vmul.f32 %v681, %v201
  %v762 = vmul.f32 %v682, %v202
  %v763 = vmul.f32 %v683, %v203
  %v764 = vmul.f32 %v684, %v204
  %v765 = vmul.f32 %v685, %v205
  %766 = vadd.xlane.f32.xlu0 %v686
  %v767 = vpop.xlane.xlu0 %766
  %768 = vadd.xlane.f32.xlu0 %v687
  %v769 = vpop.xlane.xlu0 %768
  %770 = vadd.xlane.f32.xlu0 %v688
  %v771 = vpop.xlane.xlu0 %770
  %772 = vadd.xlane.f32.xlu0 %v689
  %v773 = vpop.xlane.xlu0 %772
  %774 = vadd.xlane.f32.xlu0 %v690
  %v775 = vpop.xlane.xlu0 %774
  %776 = vadd.xlane.f32.xlu0 %v691
  %v777 = vpop.xlane.xlu0 %776
  %778 = vadd.xlane.f32.xlu0 %v692
  %v779 = vpop.xlane.xlu0 %778
  %780 = vadd.xlane.f32.xlu0 %v693
  %v781 = vpop.xlane.xlu0 %780
  %782 = vadd.xlane.f32.xlu0 %v694
  %v783 = vpop.xlane.xlu0 %782
  %784 = vadd.xlane.f32.xlu0 %v695
  %v785 = vpop.xlane.xlu0 %784
  %786 = vadd.xlane.f32.xlu0 %v696
  %v787 = vpop.xlane.xlu0 %786
  %788 = vadd.xlane.f32.xlu0 %v697
  %v789 = vpop.xlane.xlu0 %788
  %790 = vadd.xlane.f32.xlu0 %v698
  %v791 = vpop.xlane.xlu0 %790
  %792 = vadd.xlane.f32.xlu0 %v699
  %v793 = vpop.xlane.xlu0 %792
  %794 = vadd.xlane.f32.xlu0 %v700
  %v795 = vpop.xlane.xlu0 %794
  %796 = vadd.xlane.f32.xlu0 %v701
  %v797 = vpop.xlane.xlu0 %796
  %798 = vadd.xlane.f32.xlu0 %v702
  %v799 = vpop.xlane.xlu0 %798
  %800 = vadd.xlane.f32.xlu0 %v703
  %v801 = vpop.xlane.xlu0 %800
  %802 = vadd.xlane.f32.xlu0 %v704
  %v803 = vpop.xlane.xlu0 %802
  %804 = vadd.xlane.f32.xlu0 %v705
  %v805 = vpop.xlane.xlu0 %804
  %806 = vadd.xlane.f32.xlu0 %v706
  %v807 = vpop.xlane.xlu0 %806
  %808 = vadd.xlane.f32.xlu0 %v707
  %v809 = vpop.xlane.xlu0 %808
  %810 = vadd.xlane.f32.xlu0 %v708
  %v811 = vpop.xlane.xlu0 %810
  %812 = vadd.xlane.f32.xlu0 %v709
  %v813 = vpop.xlane.xlu0 %812
  %814 = vadd.xlane.f32.xlu0 %v710
  %v815 = vpop.xlane.xlu0 %814
  %816 = vadd.xlane.f32.xlu0 %v711
  %v817 = vpop.xlane.xlu0 %816
  %818 = vadd.xlane.f32.xlu0 %v712
  %v819 = vpop.xlane.xlu0 %818
  %820 = vadd.xlane.f32.xlu0 %v713
  %v821 = vpop.xlane.xlu0 %820
  %822 = vadd.xlane.f32.xlu0 %v714
  %v823 = vpop.xlane.xlu0 %822
  %824 = vadd.xlane.f32.xlu0 %v715
  %v825 = vpop.xlane.xlu0 %824
  %826 = vadd.xlane.f32.xlu0 %v716
  %v827 = vpop.xlane.xlu0 %826
  %828 = vadd.xlane.f32.xlu0 %v717
  %v829 = vpop.xlane.xlu0 %828
  %830 = vadd.xlane.f32.xlu0 %v718
  %v831 = vpop.xlane.xlu0 %830
  %832 = vadd.xlane.f32.xlu0 %v719
  %v833 = vpop.xlane.xlu0 %832
  %834 = vadd.xlane.f32.xlu0 %v720
  %v835 = vpop.xlane.xlu0 %834
  %836 = vadd.xlane.f32.xlu0 %v721
  %v837 = vpop.xlane.xlu0 %836
  %838 = vadd.xlane.f32.xlu0 %v722
  %v839 = vpop.xlane.xlu0 %838
  %840 = vadd.xlane.f32.xlu0 %v723
  %v841 = vpop.xlane.xlu0 %840
  %842 = vadd.xlane.f32.xlu0 %v724
  %v843 = vpop.xlane.xlu0 %842
  %844 = vadd.xlane.f32.xlu0 %v725
  %v845 = vpop.xlane.xlu0 %844
  %846 = vadd.xlane.f32.xlu0 %v726
  %v847 = vpop.xlane.xlu0 %846
  %848 = vadd.xlane.f32.xlu0 %v727
  %v849 = vpop.xlane.xlu0 %848
  %850 = vadd.xlane.f32.xlu0 %v728
  %v851 = vpop.xlane.xlu0 %850
  %852 = vadd.xlane.f32.xlu0 %v729
  %v853 = vpop.xlane.xlu0 %852
  %854 = vadd.xlane.f32.xlu0 %v730
  %v855 = vpop.xlane.xlu0 %854
  %856 = vadd.xlane.f32.xlu0 %v731
  %v857 = vpop.xlane.xlu0 %856
  %858 = vadd.xlane.f32.xlu0 %v732
  %v859 = vpop.xlane.xlu0 %858
  %860 = vadd.xlane.f32.xlu0 %v733
  %v861 = vpop.xlane.xlu0 %860
  %862 = vadd.xlane.f32.xlu0 %v734
  %v863 = vpop.xlane.xlu0 %862
  %864 = vadd.xlane.f32.xlu0 %v735
  %v865 = vpop.xlane.xlu0 %864
  %866 = vadd.xlane.f32.xlu0 %v736
  %v867 = vpop.xlane.xlu0 %866
  %868 = vadd.xlane.f32.xlu0 %v737
  %v869 = vpop.xlane.xlu0 %868
  %870 = vadd.xlane.f32.xlu0 %v738
  %v871 = vpop.xlane.xlu0 %870
  %872 = vadd.xlane.f32.xlu0 %v739
  %v873 = vpop.xlane.xlu0 %872
  %874 = vadd.xlane.f32.xlu0 %v740
  %v875 = vpop.xlane.xlu0 %874
  %876 = vadd.xlane.f32.xlu0 %v741
  %v877 = vpop.xlane.xlu0 %876
  %878 = vadd.xlane.f32.xlu0 %v742
  %v879 = vpop.xlane.xlu0 %878
  %880 = vadd.xlane.f32.xlu0 %v743
  %v881 = vpop.xlane.xlu0 %880
  %882 = vadd.xlane.f32.xlu0 %v744
  %v883 = vpop.xlane.xlu0 %882
  %884 = vadd.xlane.f32.xlu0 %v745
  %v885 = vpop.xlane.xlu0 %884
  %886 = vadd.xlane.f32.xlu0 %v746
  %v887 = vpop.xlane.xlu0 %886
  %888 = vadd.xlane.f32.xlu0 %v747
  %v889 = vpop.xlane.xlu0 %888
  %890 = vadd.xlane.f32.xlu0 %v748
  %v891 = vpop.xlane.xlu0 %890
  %892 = vadd.xlane.f32.xlu0 %v749
  %v893 = vpop.xlane.xlu0 %892
  %894 = vadd.xlane.f32.xlu0 %v750
  %v895 = vpop.xlane.xlu0 %894
  %896 = vadd.xlane.f32.xlu0 %v751
  %v897 = vpop.xlane.xlu0 %896
  %898 = vadd.xlane.f32.xlu0 %v752
  %v899 = vpop.xlane.xlu0 %898
  %900 = vadd.xlane.f32.xlu0 %v753
  %v901 = vpop.xlane.xlu0 %900
  %902 = vadd.xlane.f32.xlu0 %v754
  %v903 = vpop.xlane.xlu0 %902
  %904 = vadd.xlane.f32.xlu0 %v755
  %v905 = vpop.xlane.xlu0 %904
  %906 = vadd.xlane.f32.xlu0 %v756
  %v907 = vpop.xlane.xlu0 %906
  %908 = vadd.xlane.f32.xlu0 %v757
  %v909 = vpop.xlane.xlu0 %908
  %910 = vadd.xlane.f32.xlu0 %v758
  %v911 = vpop.xlane.xlu0 %910
  %912 = vadd.xlane.f32.xlu0 %v759
  %v913 = vpop.xlane.xlu0 %912
  %914 = vadd.xlane.f32.xlu0 %v760
  %v915 = vpop.xlane.xlu0 %914
  %916 = vadd.xlane.f32.xlu0 %v761
  %v917 = vpop.xlane.xlu0 %916
  %918 = vadd.xlane.f32.xlu0 %v762
  %v919 = vpop.xlane.xlu0 %918
  %920 = vadd.xlane.f32.xlu0 %v763
  %v921 = vpop.xlane.xlu0 %920
  %922 = vadd.xlane.f32.xlu0 %v764
  %v923 = vpop.xlane.xlu0 %922
  %924 = vadd.xlane.f32.xlu0 %v765
  %v925 = vpop.xlane.xlu0 %924
  %v1006 = vlaneseq
  %v1007 = vand.u32 %v1006, 127
  %v1008 = vlaneseq
  %v1009 = vshrl.u32 %v1008, 7
  %v1010 = vsub.s32 %v1007, %v1009
  %v1011 = vrot.slane %v767, %v1010
  %v1012 = vadd.s32 %v1007, 4294967288
  %v1013 = vlaneseq
  %v1014 = vshrl.u32 %v1013, 7
  %v1015 = vsub.s32 %v1012, %v1014
  %v1016 = vrot.slane %v769, %v1015
  %vm1017 = vcmask 130112
  %v1018 = vsel %vm1017, %v1016, %v1011
  %v1019 = vadd.s32 %v1007, 4294967280
  %v1020 = vlaneseq
  %v1021 = vshrl.u32 %v1020, 7
  %v1022 = vsub.s32 %v1019, %v1021
  %v1023 = vrot.slane %v771, %v1022
  %vm1024 = vcmask 195712
  %v1025 = vsel %vm1024, %v1023, %v1018
  %v1026 = vadd.s32 %v1007, 4294967272
  %v1027 = vlaneseq
  %v1028 = vshrl.u32 %v1027, 7
  %v1029 = vsub.s32 %v1026, %v1028
  %v1030 = vrot.slane %v773, %v1029
  %vm1031 = vcmask 261312
  %v1032 = vsel %vm1031, %v1030, %v1025
  %v1033 = vadd.s32 %v1007, 4294967264
  %v1034 = vlaneseq
  %v1035 = vshrl.u32 %v1034, 7
  %v1036 = vsub.s32 %v1033, %v1035
  %v1037 = vrot.slane %v775, %v1036
  %vm1038 = vcmask 326912
  %v1039 = vsel %vm1038, %v1037, %v1032
  %v1040 = vadd.s32 %v1007, 4294967256
  %v1041 = vlaneseq
  %v1042 = vshrl.u32 %v1041, 7
  %v1043 = vsub.s32 %v1040, %v1042
  %v1044 = vrot.slane %v777, %v1043
  %vm1045 = vcmask 392512
  %v1046 = vsel %vm1045, %v1044, %v1039
  %v1047 = vadd.s32 %v1007, 4294967248
  %v1048 = vlaneseq
  %v1049 = vshrl.u32 %v1048, 7
  %v1050 = vsub.s32 %v1047, %v1049
  %v1051 = vrot.slane %v779, %v1050
  %vm1052 = vcmask 458112
  %v1053 = vsel %vm1052, %v1051, %v1046
  %v1054 = vadd.s32 %v1007, 4294967240
  %v1055 = vlaneseq
  %v1056 = vshrl.u32 %v1055, 7
  %v1057 = vsub.s32 %v1054, %v1056
  %v1058 = vrot.slane %v781, %v1057
  %vm1059 = vcmask 523712
  %v1060 = vsel %vm1059, %v1058, %v1053
  %v1061 = vadd.s32 %v1007, 4294967232
  %v1062 = vlaneseq
  %v1063 = vshrl.u32 %v1062, 7
  %v1064 = vsub.s32 %v1061, %v1063
  %v1065 = vrot.slane %v783, %v1064
  %vm1066 = vcmask 589312
  %v1067 = vsel %vm1066, %v1065, %v1060
  %v1068 = vadd.s32 %v1007, 4294967224
  %v1069 = vlaneseq
  %v1070 = vshrl.u32 %v1069, 7
  %v1071 = vsub.s32 %v1068, %v1070
  %v1072 = vrot.slane %v785, %v1071
  %vm1073 = vcmask 654912
  %v1074 = vsel %vm1073, %v1072, %v1067
  %v1075 = vadd.s32 %v1007, 4294967216
  %v1076 = vlaneseq
  %v1077 = vshrl.u32 %v1076, 7
  %v1078 = vsub.s32 %v1075, %v1077
  %v1079 = vrot.slane %v787, %v1078
  %vm1080 = vcmask 720512
  %v1081 = vsel %vm1080, %v1079, %v1074
  %v1082 = vadd.s32 %v1007, 4294967208
  %v1083 = vlaneseq
  %v1084 = vshrl.u32 %v1083, 7
  %v1085 = vsub.s32 %v1082, %v1084
  %v1086 = vrot.slane %v789, %v1085
  %vm1087 = vcmask 786112
  %v1088 = vsel %vm1087, %v1086, %v1081
  %v1089 = vadd.s32 %v1007, 4294967200
  %v1090 = vlaneseq
  %v1091 = vshrl.u32 %v1090, 7
  %v1092 = vsub.s32 %v1089, %v1091
  %v1093 = vrot.slane %v791, %v1092
  %vm1094 = vcmask 851712
  %v1095 = vsel %vm1094, %v1093, %v1088
  %v1096 = vadd.s32 %v1007, 4294967192
  %v1097 = vlaneseq
  %v1098 = vshrl.u32 %v1097, 7
  %v1099 = vsub.s32 %v1096, %v1098
  %v1100 = vrot.slane %v793, %v1099
  %vm1101 = vcmask 917312
  %v1102 = vsel %vm1101, %v1100, %v1095
  %v1103 = vadd.s32 %v1007, 4294967184
  %v1104 = vlaneseq
  %v1105 = vshrl.u32 %v1104, 7
  %v1106 = vsub.s32 %v1103, %v1105
  %v1107 = vrot.slane %v795, %v1106
  %vm1108 = vcmask 982912
  %v1109 = vsel %vm1108, %v1107, %v1102
  %v1110 = vadd.s32 %v1007, 4294967176
  %v1111 = vlaneseq
  %v1112 = vshrl.u32 %v1111, 7
  %v1113 = vsub.s32 %v1110, %v1112
  %v1114 = vrot.slane %v797, %v1113
  %vm1115 = vcmask 1048512
  %v1116 = vsel %vm1115, %v1114, %v1109
  %v1117 = vlaneseq
  %v1118 = vshrl.u32 %v1117, 7
  %v1119 = vsub.s32 %v1007, %v1118
  %v1120 = vrot.slane %v799, %v1119
  %v1121 = vlaneseq
  %v1122 = vshrl.u32 %v1121, 7
  %v1123 = vsub.s32 %v1012, %v1122
  %v1124 = vrot.slane %v801, %v1123
  %v1125 = vsel %vm1017, %v1124, %v1120
  %v1126 = vlaneseq
  %v1127 = vshrl.u32 %v1126, 7
  %v1128 = vsub.s32 %v1019, %v1127
  %v1129 = vrot.slane %v803, %v1128
  %v1130 = vsel %vm1024, %v1129, %v1125
  %v1131 = vlaneseq
  %v1132 = vshrl.u32 %v1131, 7
  %v1133 = vsub.s32 %v1026, %v1132
  %v1134 = vrot.slane %v805, %v1133
  %v1135 = vsel %vm1031, %v1134, %v1130
  %v1136 = vlaneseq
  %v1137 = vshrl.u32 %v1136, 7
  %v1138 = vsub.s32 %v1033, %v1137
  %v1139 = vrot.slane %v807, %v1138
  %v1140 = vsel %vm1038, %v1139, %v1135
  %v1141 = vlaneseq
  %v1142 = vshrl.u32 %v1141, 7
  %v1143 = vsub.s32 %v1040, %v1142
  %v1144 = vrot.slane %v809, %v1143
  %v1145 = vsel %vm1045, %v1144, %v1140
  %v1146 = vlaneseq
  %v1147 = vshrl.u32 %v1146, 7
  %v1148 = vsub.s32 %v1047, %v1147
  %v1149 = vrot.slane %v811, %v1148
  %v1150 = vsel %vm1052, %v1149, %v1145
  %v1151 = vlaneseq
  %v1152 = vshrl.u32 %v1151, 7
  %v1153 = vsub.s32 %v1054, %v1152
  %v1154 = vrot.slane %v813, %v1153
  %v1155 = vsel %vm1059, %v1154, %v1150
  %v1156 = vlaneseq
  %v1157 = vshrl.u32 %v1156, 7
  %v1158 = vsub.s32 %v1061, %v1157
  %v1159 = vrot.slane %v815, %v1158
  %v1160 = vsel %vm1066, %v1159, %v1155
  %v1161 = vlaneseq
  %v1162 = vshrl.u32 %v1161, 7
  %v1163 = vsub.s32 %v1068, %v1162
  %v1164 = vrot.slane %v817, %v1163
  %v1165 = vsel %vm1073, %v1164, %v1160
  %v1166 = vlaneseq
  %v1167 = vshrl.u32 %v1166, 7
  %v1168 = vsub.s32 %v1075, %v1167
  %v1169 = vrot.slane %v819, %v1168
  %v1170 = vsel %vm1080, %v1169, %v1165
  %v1171 = vlaneseq
  %v1172 = vshrl.u32 %v1171, 7
  %v1173 = vsub.s32 %v1082, %v1172
  %v1174 = vrot.slane %v821, %v1173
  %v1175 = vsel %vm1087, %v1174, %v1170
  %v1176 = vlaneseq
  %v1177 = vshrl.u32 %v1176, 7
  %v1178 = vsub.s32 %v1089, %v1177
  %v1179 = vrot.slane %v823, %v1178
  %v1180 = vsel %vm1094, %v1179, %v1175
  %v1181 = vlaneseq
  %v1182 = vshrl.u32 %v1181, 7
  %v1183 = vsub.s32 %v1096, %v1182
  %v1184 = vrot.slane %v825, %v1183
  %v1185 = vsel %vm1101, %v1184, %v1180
  %v1186 = vlaneseq
  %v1187 = vshrl.u32 %v1186, 7
  %v1188 = vsub.s32 %v1103, %v1187
  %v1189 = vrot.slane %v827, %v1188
  %v1190 = vsel %vm1108, %v1189, %v1185
  %v1191 = vlaneseq
  %v1192 = vshrl.u32 %v1191, 7
  %v1193 = vsub.s32 %v1110, %v1192
  %v1194 = vrot.slane %v829, %v1193
  %v1195 = vsel %vm1115, %v1194, %v1190
  %v1196 = vlaneseq
  %v1197 = vshrl.u32 %v1196, 7
  %v1198 = vsub.s32 %v1007, %v1197
  %v1199 = vrot.slane %v831, %v1198
  %v1200 = vlaneseq
  %v1201 = vshrl.u32 %v1200, 7
  %v1202 = vsub.s32 %v1012, %v1201
  %v1203 = vrot.slane %v833, %v1202
  %v1204 = vsel %vm1017, %v1203, %v1199
  %v1205 = vlaneseq
  %v1206 = vshrl.u32 %v1205, 7
  %v1207 = vsub.s32 %v1019, %v1206
  %v1208 = vrot.slane %v835, %v1207
  %v1209 = vsel %vm1024, %v1208, %v1204
  %v1210 = vlaneseq
  %v1211 = vshrl.u32 %v1210, 7
  %v1212 = vsub.s32 %v1026, %v1211
  %v1213 = vrot.slane %v837, %v1212
  %v1214 = vsel %vm1031, %v1213, %v1209
  %v1215 = vlaneseq
  %v1216 = vshrl.u32 %v1215, 7
  %v1217 = vsub.s32 %v1033, %v1216
  %v1218 = vrot.slane %v839, %v1217
  %v1219 = vsel %vm1038, %v1218, %v1214
  %v1220 = vlaneseq
  %v1221 = vshrl.u32 %v1220, 7
  %v1222 = vsub.s32 %v1040, %v1221
  %v1223 = vrot.slane %v841, %v1222
  %v1224 = vsel %vm1045, %v1223, %v1219
  %v1225 = vlaneseq
  %v1226 = vshrl.u32 %v1225, 7
  %v1227 = vsub.s32 %v1047, %v1226
  %v1228 = vrot.slane %v843, %v1227
  %v1229 = vsel %vm1052, %v1228, %v1224
  %v1230 = vlaneseq
  %v1231 = vshrl.u32 %v1230, 7
  %v1232 = vsub.s32 %v1054, %v1231
  %v1233 = vrot.slane %v845, %v1232
  %v1234 = vsel %vm1059, %v1233, %v1229
  %v1235 = vlaneseq
  %v1236 = vshrl.u32 %v1235, 7
  %v1237 = vsub.s32 %v1061, %v1236
  %v1238 = vrot.slane %v847, %v1237
  %v1239 = vsel %vm1066, %v1238, %v1234
  %v1240 = vlaneseq
  %v1241 = vshrl.u32 %v1240, 7
  %v1242 = vsub.s32 %v1068, %v1241
  %v1243 = vrot.slane %v849, %v1242
  %v1244 = vsel %vm1073, %v1243, %v1239
  %v1245 = vlaneseq
  %v1246 = vshrl.u32 %v1245, 7
  %v1247 = vsub.s32 %v1075, %v1246
  %v1248 = vrot.slane %v851, %v1247
  %v1249 = vsel %vm1080, %v1248, %v1244
  %v1250 = vlaneseq
  %v1251 = vshrl.u32 %v1250, 7
  %v1252 = vsub.s32 %v1082, %v1251
  %v1253 = vrot.slane %v853, %v1252
  %v1254 = vsel %vm1087, %v1253, %v1249
  %v1255 = vlaneseq
  %v1256 = vshrl.u32 %v1255, 7
  %v1257 = vsub.s32 %v1089, %v1256
  %v1258 = vrot.slane %v855, %v1257
  %v1259 = vsel %vm1094, %v1258, %v1254
  %v1260 = vlaneseq
  %v1261 = vshrl.u32 %v1260, 7
  %v1262 = vsub.s32 %v1096, %v1261
  %v1263 = vrot.slane %v857, %v1262
  %v1264 = vsel %vm1101, %v1263, %v1259
  %v1265 = vlaneseq
  %v1266 = vshrl.u32 %v1265, 7
  %v1267 = vsub.s32 %v1103, %v1266
  %v1268 = vrot.slane %v859, %v1267
  %v1269 = vsel %vm1108, %v1268, %v1264
  %v1270 = vlaneseq
  %v1271 = vshrl.u32 %v1270, 7
  %v1272 = vsub.s32 %v1110, %v1271
  %v1273 = vrot.slane %v861, %v1272
  %v1274 = vsel %vm1115, %v1273, %v1269
  %v1275 = vlaneseq
  %v1276 = vshrl.u32 %v1275, 7
  %v1277 = vsub.s32 %v1007, %v1276
  %v1278 = vrot.slane %v863, %v1277
  %v1279 = vlaneseq
  %v1280 = vshrl.u32 %v1279, 7
  %v1281 = vsub.s32 %v1012, %v1280
  %v1282 = vrot.slane %v865, %v1281
  %v1283 = vsel %vm1017, %v1282, %v1278
  %v1284 = vlaneseq
  %v1285 = vshrl.u32 %v1284, 7
  %v1286 = vsub.s32 %v1019, %v1285
  %v1287 = vrot.slane %v867, %v1286
  %v1288 = vsel %vm1024, %v1287, %v1283
  %v1289 = vlaneseq
  %v1290 = vshrl.u32 %v1289, 7
  %v1291 = vsub.s32 %v1026, %v1290
  %v1292 = vrot.slane %v869, %v1291
  %v1293 = vsel %vm1031, %v1292, %v1288
  %v1294 = vlaneseq
  %v1295 = vshrl.u32 %v1294, 7
  %v1296 = vsub.s32 %v1033, %v1295
  %v1297 = vrot.slane %v871, %v1296
  %v1298 = vsel %vm1038, %v1297, %v1293
  %v1299 = vlaneseq
  %v1300 = vshrl.u32 %v1299, 7
  %v1301 = vsub.s32 %v1040, %v1300
  %v1302 = vrot.slane %v873, %v1301
  %v1303 = vsel %vm1045, %v1302, %v1298
  %v1304 = vlaneseq
  %v1305 = vshrl.u32 %v1304, 7
  %v1306 = vsub.s32 %v1047, %v1305
  %v1307 = vrot.slane %v875, %v1306
  %v1308 = vsel %vm1052, %v1307, %v1303
  %v1309 = vlaneseq
  %v1310 = vshrl.u32 %v1309, 7
  %v1311 = vsub.s32 %v1054, %v1310
  %v1312 = vrot.slane %v877, %v1311
  %v1313 = vsel %vm1059, %v1312, %v1308
  %v1314 = vlaneseq
  %v1315 = vshrl.u32 %v1314, 7
  %v1316 = vsub.s32 %v1061, %v1315
  %v1317 = vrot.slane %v879, %v1316
  %v1318 = vsel %vm1066, %v1317, %v1313
  %v1319 = vlaneseq
  %v1320 = vshrl.u32 %v1319, 7
  %v1321 = vsub.s32 %v1068, %v1320
  %v1322 = vrot.slane %v881, %v1321
  %v1323 = vsel %vm1073, %v1322, %v1318
  %v1324 = vlaneseq
  %v1325 = vshrl.u32 %v1324, 7
  %v1326 = vsub.s32 %v1075, %v1325
  %v1327 = vrot.slane %v883, %v1326
  %v1328 = vsel %vm1080, %v1327, %v1323
  %v1329 = vlaneseq
  %v1330 = vshrl.u32 %v1329, 7
  %v1331 = vsub.s32 %v1082, %v1330
  %v1332 = vrot.slane %v885, %v1331
  %v1333 = vsel %vm1087, %v1332, %v1328
  %v1334 = vlaneseq
  %v1335 = vshrl.u32 %v1334, 7
  %v1336 = vsub.s32 %v1089, %v1335
  %v1337 = vrot.slane %v887, %v1336
  %v1338 = vsel %vm1094, %v1337, %v1333
  %v1339 = vlaneseq
  %v1340 = vshrl.u32 %v1339, 7
  %v1341 = vsub.s32 %v1096, %v1340
  %v1342 = vrot.slane %v889, %v1341
  %v1343 = vsel %vm1101, %v1342, %v1338
  %v1344 = vlaneseq
  %v1345 = vshrl.u32 %v1344, 7
  %v1346 = vsub.s32 %v1103, %v1345
  %v1347 = vrot.slane %v891, %v1346
  %v1348 = vsel %vm1108, %v1347, %v1343
  %v1349 = vlaneseq
  %v1350 = vshrl.u32 %v1349, 7
  %v1351 = vsub.s32 %v1110, %v1350
  %v1352 = vrot.slane %v893, %v1351
  %v1353 = vsel %vm1115, %v1352, %v1348
  %v1354 = vlaneseq
  %v1355 = vshrl.u32 %v1354, 7
  %v1356 = vsub.s32 %v1007, %v1355
  %v1357 = vrot.slane %v895, %v1356
  %v1358 = vlaneseq
  %v1359 = vshrl.u32 %v1358, 7
  %v1360 = vsub.s32 %v1012, %v1359
  %v1361 = vrot.slane %v897, %v1360
  %v1362 = vsel %vm1017, %v1361, %v1357
  %v1363 = vlaneseq
  %v1364 = vshrl.u32 %v1363, 7
  %v1365 = vsub.s32 %v1019, %v1364
  %v1366 = vrot.slane %v899, %v1365
  %v1367 = vsel %vm1024, %v1366, %v1362
  %v1368 = vlaneseq
  %v1369 = vshrl.u32 %v1368, 7
  %v1370 = vsub.s32 %v1026, %v1369
  %v1371 = vrot.slane %v901, %v1370
  %v1372 = vsel %vm1031, %v1371, %v1367
  %v1373 = vlaneseq
  %v1374 = vshrl.u32 %v1373, 7
  %v1375 = vsub.s32 %v1033, %v1374
  %v1376 = vrot.slane %v903, %v1375
  %v1377 = vsel %vm1038, %v1376, %v1372
  %v1378 = vlaneseq
  %v1379 = vshrl.u32 %v1378, 7
  %v1380 = vsub.s32 %v1040, %v1379
  %v1381 = vrot.slane %v905, %v1380
  %v1382 = vsel %vm1045, %v1381, %v1377
  %v1383 = vlaneseq
  %v1384 = vshrl.u32 %v1383, 7
  %v1385 = vsub.s32 %v1047, %v1384
  %v1386 = vrot.slane %v907, %v1385
  %v1387 = vsel %vm1052, %v1386, %v1382
  %v1388 = vlaneseq
  %v1389 = vshrl.u32 %v1388, 7
  %v1390 = vsub.s32 %v1054, %v1389
  %v1391 = vrot.slane %v909, %v1390
  %v1392 = vsel %vm1059, %v1391, %v1387
  %v1393 = vlaneseq
  %v1394 = vshrl.u32 %v1393, 7
  %v1395 = vsub.s32 %v1061, %v1394
  %v1396 = vrot.slane %v911, %v1395
  %v1397 = vsel %vm1066, %v1396, %v1392
  %v1398 = vlaneseq
  %v1399 = vshrl.u32 %v1398, 7
  %v1400 = vsub.s32 %v1068, %v1399
  %v1401 = vrot.slane %v913, %v1400
  %v1402 = vsel %vm1073, %v1401, %v1397
  %v1403 = vlaneseq
  %v1404 = vshrl.u32 %v1403, 7
  %v1405 = vsub.s32 %v1075, %v1404
  %v1406 = vrot.slane %v915, %v1405
  %v1407 = vsel %vm1080, %v1406, %v1402
  %v1408 = vlaneseq
  %v1409 = vshrl.u32 %v1408, 7
  %v1410 = vsub.s32 %v1082, %v1409
  %v1411 = vrot.slane %v917, %v1410
  %v1412 = vsel %vm1087, %v1411, %v1407
  %v1413 = vlaneseq
  %v1414 = vshrl.u32 %v1413, 7
  %v1415 = vsub.s32 %v1089, %v1414
  %v1416 = vrot.slane %v919, %v1415
  %v1417 = vsel %vm1094, %v1416, %v1412
  %v1418 = vlaneseq
  %v1419 = vshrl.u32 %v1418, 7
  %v1420 = vsub.s32 %v1096, %v1419
  %v1421 = vrot.slane %v921, %v1420
  %v1422 = vsel %vm1101, %v1421, %v1417
  %v1423 = vlaneseq
  %v1424 = vshrl.u32 %v1423, 7
  %v1425 = vsub.s32 %v1103, %v1424
  %v1426 = vrot.slane %v923, %v1425
  %v1427 = vsel %vm1108, %v1426, %v1422
  %v1428 = vlaneseq
  %v1429 = vshrl.u32 %v1428, 7
  %v1430 = vsub.s32 %v1110, %v1429
  %v1431 = vrot.slane %v925, %v1430
  %v1432 = vsel %vm1115, %v1431, %v1427
  %vm1433 = vcmask 1041409
  %v1434 = vsel %vm1433, %v1195, %v1116
  %vm1435 = vcmask 1042434
  %v1436 = vsel %vm1435, %v1274, %v1434
  %vm1437 = vcmask 1043459
  %v1438 = vsel %vm1437, %v1353, %v1436
  %vm1439 = vcmask 1044484
  %v1440 = vsel %vm1439, %v1432, %v1438
  %1442 = vst [vmem:[%s3] sm:$0x1f] %v1440
  // Predicated region
  $region14: #{lgn_forward.5} parent=0 // pred_check
    _
  $region15: #{lgn_forward.5} parent=0 // pred_check_branch
    %1444 = sbr.rel (0) target = $region17
  $region16: #{lgn_forward.5} parent=0 // pred_region
    _
  $region17: #{lgn_forward.5} parent=0 // pred_fallthru
    _
  // Predicated region
  $region18: #{lgn_forward.5} parent=0 // pred_check
    _
  $region19: #{lgn_forward.5} parent=0 // pred_check_branch
    %1446 = sbr.rel (0) target = $region21
  $region20: #{lgn_forward.5} parent=0 // pred_region
    _
  $region21: #{lgn_forward.5} parent=0 // pred_fallthru
    _

</llo_original>
